<compile_context>
chip_gen: v6e
topology: v6e:2x2x1
jax: 0.10.0
libtpu: 0.0.40
codegen_flags: <defaults>
</compile_context>

<pallas_src>
import math

import jax
import jax.numpy as jnp
from jax.experimental import pallas as pl
from jax.experimental.pallas import tpu as pltpu


def _layer_norm(x, gamma, beta, eps=1e-5):
    mu = jnp.mean(x, axis=-1, keepdims=True)
    xc = x - mu
    var = jnp.mean(xc * xc, axis=-1, keepdims=True)
    inv = jax.lax.rsqrt(var + eps)
    return xc * inv * gamma + beta


def _gelu_exact(x):
    # nn.GELU() default = exact erf formulation.
    return 0.5 * x * (1.0 + jax.lax.erf(x * (1.0 / math.sqrt(2.0))))


def semantic_module_kernel(adapt_ref,                      # SMEM [B, A]
                           x_ref,                          # [1, S, H]
                           w_adapt_ref, b_adapt_ref,       # [1, A, H, H], [1, H, H]
                           base_w_ref, base_b_ref,         # [1, H, H], [1, 1, H]
                           wq_ref, bq_ref,                 # [1, nh, H, hd], [1, nh, 1, hd]
                           wk_ref, bk_ref,
                           wv_ref, bv_ref,
                           wo_ref, bo_ref,                 # [1, nh, hd, H], [1, 1, H]
                           ln1_g_ref, ln1_b_ref,           # [1, 1, H]
                           w1_ref, b1_ref,                 # [1, H, 4H], [1, 1, 4H]
                           w2_ref, b2_ref,                 # [1, 4H, H], [1, 1, H]
                           ln2_g_ref, ln2_b_ref,           # [1, 1, H]
                           out_ref,                        # [1, S, H]
                           carry_ref):                     # VMEM scratch [S, H]
    b = pl.program_id(0)
    layer = pl.program_id(1)

    # Layer 0 of each sample starts from the module input; deeper layers read
    # the activation carried in VMEM from the previous grid step.
    @pl.when(layer == 0)
    def _():
        carry_ref[...] = x_ref[0]

    x = carry_ref[...]                                     # [S, H] f32

    # ---- LiquidLinear: residual = x @ (W_base + W_adapt(adapt))^T + b_base --
    # Weights are stored pre-transposed as [in, out]; the per-sample adaptive
    # weight is accumulated with unrolled scalar-splat FMAs from SMEM scalars.
    adapt_dim = w_adapt_ref.shape[1]
    w_liquid = base_w_ref[0] + b_adapt_ref[0]              # [H, H]
    for a in range(adapt_dim):
        w_liquid = w_liquid + adapt_ref[b, a] * w_adapt_ref[0, a]
    residual = (jnp.dot(x, w_liquid, preferred_element_type=jnp.float32)
                + base_b_ref[0])                           # [S, H]

    # ---- Multi-head self-attention over `residual` (eval: dropout = id) -----
    num_heads = wq_ref.shape[1]
    head_dim = wq_ref.shape[3]
    scale = 1.0 / math.sqrt(head_dim)
    attn_acc = jnp.zeros_like(residual)
    for h in range(num_heads):
        q = jnp.dot(residual, wq_ref[0, h], preferred_element_type=jnp.float32) + bq_ref[0, h]
        k = jnp.dot(residual, wk_ref[0, h], preferred_element_type=jnp.float32) + bk_ref[0, h]
        v = jnp.dot(residual, wv_ref[0, h], preferred_element_type=jnp.float32) + bv_ref[0, h]
        s = jax.lax.dot_general(q, k, (((1,), (1,)), ((), ())),
                                preferred_element_type=jnp.float32) * scale
        s = s - jnp.max(s, axis=-1, keepdims=True)
        e = jnp.exp(s)
        probs = e * pl.reciprocal(jnp.sum(e, axis=-1, keepdims=True), approx=False)
        ctx = jnp.dot(probs, v, preferred_element_type=jnp.float32)   # [S, hd]
        attn_acc = attn_acc + jnp.dot(ctx, wo_ref[0, h],
                                      preferred_element_type=jnp.float32)
    attn_out = attn_acc + bo_ref[0]
    # TODO(synk): training-mode dropout (attention / ffn / residual paths) is
    # not implemented; inference semantics (identity) are used.

    # ---- x1 = LayerNorm1(x + attn_out) --------------------------------------
    x1 = _layer_norm(x + attn_out, ln1_g_ref[0], ln1_b_ref[0])

    # ---- FFN: Linear -> GELU -> Linear --------------------------------------
    h1 = jnp.dot(x1, w1_ref[0], preferred_element_type=jnp.float32) + b1_ref[0]
    h1 = _gelu_exact(h1)
    ffn = jnp.dot(h1, w2_ref[0], preferred_element_type=jnp.float32) + b2_ref[0]

    # ---- y = LayerNorm2(x1 + ffn) -------------------------------------------
    y = _layer_norm(x1 + ffn, ln2_g_ref[0], ln2_b_ref[0])

    carry_ref[...] = y        # feeds the next layer for this sample
    out_ref[0] = y            # last layer's value is what lands in HBM


_LAYER_KEYS = ("w_adapt", "b_adapt", "base_w", "base_b",
               "wq", "bq", "wk", "bk", "wv", "bv", "wo", "bo",
               "ln1_g", "ln1_b", "w1", "b1", "w2", "b2", "ln2_g", "ln2_b")


def _layer_spec(arr):
    zeros = (0,) * (arr.ndim - 1)
    return pl.BlockSpec((1,) + arr.shape[1:], lambda b, l, _z=zeros: (l,) + _z)


def semantic_module_forward(x, adapt_input, layer_params):
    """Runs the full stacked SemanticModule in a single fused pallas_call."""
    B, S, in_dim = x.shape
    H = layer_params[0]["base_w"].shape[1]
    assert in_dim == H, "residual additions require input_dim == hidden_dim"
    num_layers = len(layer_params)

    # Stack every per-layer weight along a leading layer axis.
    stacked = [jnp.stack([p[k] for p in layer_params]) for k in _LAYER_KEYS]

    in_specs = [pl.BlockSpec(memory_space=pltpu.MemorySpace.SMEM),    # adapt_input
                pl.BlockSpec((1, S, H), lambda b, l: (b, 0, 0))]      # x
    in_specs += [_layer_spec(w) for w in stacked]

    return pl.pallas_call(
        semantic_module_kernel,
        out_shape=jax.ShapeDtypeStruct((B, S, H), jnp.float32),
        grid_spec=pltpu.PrefetchScalarGridSpec(
            num_scalar_prefetch=0,
            grid=(B, num_layers),
            in_specs=in_specs,
            out_specs=pl.BlockSpec((1, S, H), lambda b, l: (b, 0, 0)),
            scratch_shapes=[pltpu.VMEM((S, H), jnp.float32)],
        ),
        compiler_params=pltpu.CompilerParams(
            dimension_semantics=("parallel", "arbitrary")),
    )(adapt_input, x, *stacked)


# ----------------------------- pure-JAX reference ----------------------------
def _ref_layer(x, adapt, p):
    # LiquidLinear
    w_liquid = (p["base_w"][None] + p["b_adapt"][None]
                + jnp.einsum("ba,aio->bio", adapt, p["w_adapt"]))
    residual = jnp.einsum("bsi,bio->bso", x, w_liquid) + p["base_b"]
    # Multi-head self-attention
    nh, _, hd = p["wq"].shape
    q = jnp.einsum("bsh,nhd->bnsd", residual, p["wq"]) + p["bq"][None]
    k = jnp.einsum("bsh,nhd->bnsd", residual, p["wk"]) + p["bk"][None]
    v = jnp.einsum("bsh,nhd->bnsd", residual, p["wv"]) + p["bv"][None]
    s = jnp.einsum("bnqd,bnkd->bnqk", q, k) / math.sqrt(hd)
    a = jax.nn.softmax(s, axis=-1)
    ctx = jnp.einsum("bnqk,bnkd->bnqd", a, v)
    attn_out = jnp.einsum("bnsd,ndh->bsh", ctx, p["wo"]) + p["bo"]
    x1 = _layer_norm(x + attn_out, p["ln1_g"], p["ln1_b"])
    h1 = _gelu_exact(x1 @ p["w1"] + p["b1"])
    ffn = h1 @ p["w2"] + p["b2"]
    return _layer_norm(x1 + ffn, p["ln2_g"], p["ln2_b"])


def ref_forward(x, adapt, layer_params):
    for p in layer_params:
        x = _ref_layer(x, adapt, p)
    return x


# ------------------------------- parameters ----------------------------------
def _xavier(key, shape, fan_in, fan_out):
    bound = math.sqrt(6.0 / (fan_in + fan_out))
    return jax.random.uniform(key, shape, jnp.float32, -bound, bound)


def make_layer_params(key, in_dim, hidden_dim, num_heads, adapt_dim):
    # Weight values use xavier-like scales; biases / LN params get small random
    # values (the module inits them to 0/1, but non-trivial values exercise all
    # code paths of the kernel without changing forward semantics).
    assert hidden_dim % num_heads == 0
    hd = hidden_dim // num_heads
    ffn_dim = 4 * hidden_dim
    ks = jax.random.split(key, 20)
    n = lambda k, shape, s=0.1: s * jax.random.normal(k, shape, jnp.float32)
    return {
        # LiquidLinear (stored pre-transposed as [in, out]).
        "base_w": _xavier(ks[0], (in_dim, hidden_dim), in_dim, hidden_dim),
        "base_b": n(ks[1], (1, hidden_dim)),
        "w_adapt": _xavier(ks[2], (adapt_dim, in_dim, hidden_dim),
                           adapt_dim, hidden_dim * in_dim),
        "b_adapt": n(ks[3], (in_dim, hidden_dim), 0.02),
        # Multi-head attention, per-head layout: wq/wk/wv [nh, H, hd], wo [nh, hd, H].
        "wq": _xavier(ks[4], (num_heads, hidden_dim, hd), hidden_dim, hidden_dim),
        "bq": n(ks[5], (num_heads, 1, hd)),
        "wk": _xavier(ks[6], (num_heads, hidden_dim, hd), hidden_dim, hidden_dim),
        "bk": n(ks[7], (num_heads, 1, hd)),
        "wv": _xavier(ks[8], (num_heads, hidden_dim, hd), hidden_dim, hidden_dim),
        "bv": n(ks[9], (num_heads, 1, hd)),
        "wo": _xavier(ks[10], (num_heads, hd, hidden_dim), hidden_dim, hidden_dim),
        "bo": n(ks[11], (1, hidden_dim)),
        "ln1_g": 1.0 + n(ks[12], (1, hidden_dim)),
        "ln1_b": n(ks[13], (1, hidden_dim)),
        "w1": _xavier(ks[14], (hidden_dim, ffn_dim), hidden_dim, ffn_dim),
        "b1": n(ks[15], (1, ffn_dim)),
        "w2": _xavier(ks[16], (ffn_dim, hidden_dim), ffn_dim, hidden_dim),
        "b2": n(ks[17], (1, hidden_dim)),
        "ln2_g": 1.0 + n(ks[18], (1, hidden_dim)),
        "ln2_b": n(ks[19], (1, hidden_dim)),
    }


if __name__ == "__main__":
    B, S = 2, 8
    input_dim = hidden_dim = 32        # residual adds require input_dim == hidden_dim
    num_heads = 4
    num_layers = 2
    adapt_dim = 16

    key = jax.random.PRNGKey(0)
    k_x, k_a, k_p = jax.random.split(key, 3)
    x = jax.random.normal(k_x, (B, S, input_dim), jnp.float32)
    adapt_input = jax.random.normal(k_a, (B, adapt_dim), jnp.float32)
    params = [make_layer_params(k, input_dim, hidden_dim, num_heads, adapt_dim)
              for k in jax.random.split(k_p, num_layers)]

    @jax.jit
    def fwd(x_in, adapt_in):
        return semantic_module_forward(x_in, adapt_in, params)

    out = jax.block_until_ready(fwd(x, adapt_input))

    with jax.default_matmul_precision("highest"):
        expected = jax.block_until_ready(ref_forward(x, adapt_input, params))

    assert out.shape == (B, S, hidden_dim)
    max_err = float(jnp.max(jnp.abs(out - expected)))
    assert max_err < 1e-4, f"max abs error {max_err}"
    print("KERNEL_OK")
</pallas_src>

<mosaic_0001>
module attributes {stable_mosaic.version = 11 : i64} {
  func.func @semantic_module_kernel(%arg0: i32, %arg1: i32, %arg2: memref<2x16xf32, #tpu.memory_space<smem>>, %arg3: memref<1x8x32xf32, #tpu.memory_space<vmem>>, %arg4: memref<1x16x32x32xf32, #tpu.memory_space<vmem>>, %arg5: memref<1x32x32xf32, #tpu.memory_space<vmem>>, %arg6: memref<1x32x32xf32, #tpu.memory_space<vmem>>, %arg7: memref<1x1x32xf32, #tpu.memory_space<vmem>>, %arg8: memref<1x4x32x8xf32, #tpu.memory_space<vmem>>, %arg9: memref<1x4x1x8xf32, #tpu.memory_space<vmem>>, %arg10: memref<1x4x32x8xf32, #tpu.memory_space<vmem>>, %arg11: memref<1x4x1x8xf32, #tpu.memory_space<vmem>>, %arg12: memref<1x4x32x8xf32, #tpu.memory_space<vmem>>, %arg13: memref<1x4x1x8xf32, #tpu.memory_space<vmem>>, %arg14: memref<1x4x8x32xf32, #tpu.memory_space<vmem>>, %arg15: memref<1x1x32xf32, #tpu.memory_space<vmem>>, %arg16: memref<1x1x32xf32, #tpu.memory_space<vmem>>, %arg17: memref<1x1x32xf32, #tpu.memory_space<vmem>>, %arg18: memref<1x32x128xf32, #tpu.memory_space<vmem>>, %arg19: memref<1x1x128xf32, #tpu.memory_space<vmem>>, %arg20: memref<1x128x32xf32, #tpu.memory_space<vmem>>, %arg21: memref<1x1x32xf32, #tpu.memory_space<vmem>>, %arg22: memref<1x1x32xf32, #tpu.memory_space<vmem>>, %arg23: memref<1x1x32xf32, #tpu.memory_space<vmem>>, %arg24: memref<1x8x32xf32, #tpu.memory_space<vmem>>, %arg25: memref<8x32xf32, #tpu.memory_space<vmem>>) attributes {dimension_semantics = [#tpu.dimension_semantics<parallel>, #tpu.dimension_semantics<arbitrary>], iteration_bounds = array<i64: 2, 2>, scalar_prefetch = 0 : i64, scratch_operands = 1 : i64, tpu.core_type = #tpu.core_type<tc>, window_params = [{transform_indices = @transform_0, window_bounds = array<i64: 2, 16>}, {transform_indices = @transform_1, window_bounds = array<i64: 1, 8, 32>}, {transform_indices = @transform_2, window_bounds = array<i64: 1, 16, 32, 32>}, {transform_indices = @transform_3, window_bounds = array<i64: 1, 32, 32>}, {transform_indices = @transform_4, window_bounds = array<i64: 1, 32, 32>}, {transform_indices = @transform_5, window_bounds = array<i64: 1, 1, 32>}, {transform_indices = @transform_6, window_bounds = array<i64: 1, 4, 32, 8>}, {transform_indices = @transform_7, window_bounds = array<i64: 1, 4, 1, 8>}, {transform_indices = @transform_8, window_bounds = array<i64: 1, 4, 32, 8>}, {transform_indices = @transform_9, window_bounds = array<i64: 1, 4, 1, 8>}, {transform_indices = @transform_10, window_bounds = array<i64: 1, 4, 32, 8>}, {transform_indices = @transform_11, window_bounds = array<i64: 1, 4, 1, 8>}, {transform_indices = @transform_12, window_bounds = array<i64: 1, 4, 8, 32>}, {transform_indices = @transform_13, window_bounds = array<i64: 1, 1, 32>}, {transform_indices = @transform_14, window_bounds = array<i64: 1, 1, 32>}, {transform_indices = @transform_15, window_bounds = array<i64: 1, 1, 32>}, {transform_indices = @transform_16, window_bounds = array<i64: 1, 32, 128>}, {transform_indices = @transform_17, window_bounds = array<i64: 1, 1, 128>}, {transform_indices = @transform_18, window_bounds = array<i64: 1, 128, 32>}, {transform_indices = @transform_19, window_bounds = array<i64: 1, 1, 32>}, {transform_indices = @transform_20, window_bounds = array<i64: 1, 1, 32>}, {transform_indices = @transform_21, window_bounds = array<i64: 1, 1, 32>}, {transform_indices = @transform_22, window_bounds = array<i64: 1, 8, 32>}]} {
    %c0_i32 = arith.constant 0 : i32
    %0 = arith.cmpi eq, %arg1, %c0_i32 : i32
    %1 = arith.extui %0 : i1 to i32
    %c0_i32_0 = arith.constant 0 : i32
    %2 = arith.cmpi ne, %1, %c0_i32_0 : i32
    scf.if %2 {
      %c0_272 = arith.constant 0 : index
      %c0_273 = arith.constant 0 : index
      %c0_274 = arith.constant 0 : index
      %363 = vector.load %arg3[%c0_272, %c0_273, %c0_274] : memref<1x8x32xf32, #tpu.memory_space<vmem>>, vector<1x8x32xf32>
      %364 = vector.shape_cast %363 : vector<1x8x32xf32> to vector<8x32xf32>
      %c0_275 = arith.constant 0 : index
      %c0_276 = arith.constant 0 : index
      %365 = vector.load %arg25[%c0_275, %c0_276] : memref<8x32xf32, #tpu.memory_space<vmem>>, vector<8x32xf32>
      tpu.vector_store %arg25[%c0_275, %c0_276], %364 {strides = array<i32>} : memref<8x32xf32, #tpu.memory_space<vmem>>, vector<8x32xf32>,
    } else {
    }
    %c0 = arith.constant 0 : index
    %c0_1 = arith.constant 0 : index
    %3 = vector.load %arg25[%c0, %c0_1] : memref<8x32xf32, #tpu.memory_space<vmem>>, vector<8x32xf32>
    %c0_2 = arith.constant 0 : index
    %c0_3 = arith.constant 0 : index
    %c0_4 = arith.constant 0 : index
    %4 = vector.load %arg6[%c0_2, %c0_3, %c0_4] : memref<1x32x32xf32, #tpu.memory_space<vmem>>, vector<1x32x32xf32>
    %5 = vector.shape_cast %4 : vector<1x32x32xf32> to vector<32x32xf32>
    %c0_5 = arith.constant 0 : index
    %c0_6 = arith.constant 0 : index
    %c0_7 = arith.constant 0 : index
    %6 = vector.load %arg5[%c0_5, %c0_6, %c0_7] : memref<1x32x32xf32, #tpu.memory_space<vmem>>, vector<1x32x32xf32>
    %7 = vector.shape_cast %6 : vector<1x32x32xf32> to vector<32x32xf32>
    %8 = arith.addf %5, %7 : vector<32x32xf32>
    %9 = arith.index_cast %arg0 : i32 to index
    %c0_8 = arith.constant 0 : index
    %10 = memref.load %arg2[%9, %c0_8] : memref<2x16xf32, #tpu.memory_space<smem>>
    %c0_9 = arith.constant 0 : index
    %c0_10 = arith.constant 0 : index
    %c0_11 = arith.constant 0 : index
    %c0_12 = arith.constant 0 : index
    %11 = vector.load %arg4[%c0_9, %c0_10, %c0_11, %c0_12] : memref<1x16x32x32xf32, #tpu.memory_space<vmem>>, vector<1x1x32x32xf32>
    %12 = vector.shape_cast %11 : vector<1x1x32x32xf32> to vector<32x32xf32>
    %13 = vector.broadcast %10 : f32 to vector<32x32xf32>
    %14 = arith.mulf %13, %12 : vector<32x32xf32>
    %15 = arith.addf %8, %14 : vector<32x32xf32>
    %16 = arith.index_cast %arg0 : i32 to index
    %c1 = arith.constant 1 : index
    %17 = memref.load %arg2[%16, %c1] : memref<2x16xf32, #tpu.memory_space<smem>>
    %c0_13 = arith.constant 0 : index
    %c1_14 = arith.constant 1 : index
    %c0_15 = arith.constant 0 : index
    %c0_16 = arith.constant 0 : index
    %18 = vector.load %arg4[%c0_13, %c1_14, %c0_15, %c0_16] : memref<1x16x32x32xf32, #tpu.memory_space<vmem>>, vector<1x1x32x32xf32>
    %19 = vector.shape_cast %18 : vector<1x1x32x32xf32> to vector<32x32xf32>
    %20 = vector.broadcast %17 : f32 to vector<32x32xf32>
    %21 = arith.mulf %20, %19 : vector<32x32xf32>
    %22 = arith.addf %15, %21 : vector<32x32xf32>
    %23 = arith.index_cast %arg0 : i32 to index
    %c2 = arith.constant 2 : index
    %24 = memref.load %arg2[%23, %c2] : memref<2x16xf32, #tpu.memory_space<smem>>
    %c0_17 = arith.constant 0 : index
    %c2_18 = arith.constant 2 : index
    %c0_19 = arith.constant 0 : index
    %c0_20 = arith.constant 0 : index
    %25 = vector.load %arg4[%c0_17, %c2_18, %c0_19, %c0_20] : memref<1x16x32x32xf32, #tpu.memory_space<vmem>>, vector<1x1x32x32xf32>
    %26 = vector.shape_cast %25 : vector<1x1x32x32xf32> to vector<32x32xf32>
    %27 = vector.broadcast %24 : f32 to vector<32x32xf32>
    %28 = arith.mulf %27, %26 : vector<32x32xf32>
    %29 = arith.addf %22, %28 : vector<32x32xf32>
    %30 = arith.index_cast %arg0 : i32 to index
    %c3 = arith.constant 3 : index
    %31 = memref.load %arg2[%30, %c3] : memref<2x16xf32, #tpu.memory_space<smem>>
    %c0_21 = arith.constant 0 : index
    %c3_22 = arith.constant 3 : index
    %c0_23 = arith.constant 0 : index
    %c0_24 = arith.constant 0 : index
    %32 = vector.load %arg4[%c0_21, %c3_22, %c0_23, %c0_24] : memref<1x16x32x32xf32, #tpu.memory_space<vmem>>, vector<1x1x32x32xf32>
    %33 = vector.shape_cast %32 : vector<1x1x32x32xf32> to vector<32x32xf32>
    %34 = vector.broadcast %31 : f32 to vector<32x32xf32>
    %35 = arith.mulf %34, %33 : vector<32x32xf32>
    %36 = arith.addf %29, %35 : vector<32x32xf32>
    %37 = arith.index_cast %arg0 : i32 to index
    %c4 = arith.constant 4 : index
    %38 = memref.load %arg2[%37, %c4] : memref<2x16xf32, #tpu.memory_space<smem>>
    %c0_25 = arith.constant 0 : index
    %c4_26 = arith.constant 4 : index
    %c0_27 = arith.constant 0 : index
    %c0_28 = arith.constant 0 : index
    %39 = vector.load %arg4[%c0_25, %c4_26, %c0_27, %c0_28] : memref<1x16x32x32xf32, #tpu.memory_space<vmem>>, vector<1x1x32x32xf32>
    %40 = vector.shape_cast %39 : vector<1x1x32x32xf32> to vector<32x32xf32>
    %41 = vector.broadcast %38 : f32 to vector<32x32xf32>
    %42 = arith.mulf %41, %40 : vector<32x32xf32>
    %43 = arith.addf %36, %42 : vector<32x32xf32>
    %44 = arith.index_cast %arg0 : i32 to index
    %c5 = arith.constant 5 : index
    %45 = memref.load %arg2[%44, %c5] : memref<2x16xf32, #tpu.memory_space<smem>>
    %c0_29 = arith.constant 0 : index
    %c5_30 = arith.constant 5 : index
    %c0_31 = arith.constant 0 : index
    %c0_32 = arith.constant 0 : index
    %46 = vector.load %arg4[%c0_29, %c5_30, %c0_31, %c0_32] : memref<1x16x32x32xf32, #tpu.memory_space<vmem>>, vector<1x1x32x32xf32>
    %47 = vector.shape_cast %46 : vector<1x1x32x32xf32> to vector<32x32xf32>
    %48 = vector.broadcast %45 : f32 to vector<32x32xf32>
    %49 = arith.mulf %48, %47 : vector<32x32xf32>
    %50 = arith.addf %43, %49 : vector<32x32xf32>
    %51 = arith.index_cast %arg0 : i32 to index
    %c6 = arith.constant 6 : index
    %52 = memref.load %arg2[%51, %c6] : memref<2x16xf32, #tpu.memory_space<smem>>
    %c0_33 = arith.constant 0 : index
    %c6_34 = arith.constant 6 : index
    %c0_35 = arith.constant 0 : index
    %c0_36 = arith.constant 0 : index
    %53 = vector.load %arg4[%c0_33, %c6_34, %c0_35, %c0_36] : memref<1x16x32x32xf32, #tpu.memory_space<vmem>>, vector<1x1x32x32xf32>
    %54 = vector.shape_cast %53 : vector<1x1x32x32xf32> to vector<32x32xf32>
    %55 = vector.broadcast %52 : f32 to vector<32x32xf32>
    %56 = arith.mulf %55, %54 : vector<32x32xf32>
    %57 = arith.addf %50, %56 : vector<32x32xf32>
    %58 = arith.index_cast %arg0 : i32 to index
    %c7 = arith.constant 7 : index
    %59 = memref.load %arg2[%58, %c7] : memref<2x16xf32, #tpu.memory_space<smem>>
    %c0_37 = arith.constant 0 : index
    %c7_38 = arith.constant 7 : index
    %c0_39 = arith.constant 0 : index
    %c0_40 = arith.constant 0 : index
    %60 = vector.load %arg4[%c0_37, %c7_38, %c0_39, %c0_40] : memref<1x16x32x32xf32, #tpu.memory_space<vmem>>, vector<1x1x32x32xf32>
    %61 = vector.shape_cast %60 : vector<1x1x32x32xf32> to vector<32x32xf32>
    %62 = vector.broadcast %59 : f32 to vector<32x32xf32>
    %63 = arith.mulf %62, %61 : vector<32x32xf32>
    %64 = arith.addf %57, %63 : vector<32x32xf32>
    %65 = arith.index_cast %arg0 : i32 to index
    %c8 = arith.constant 8 : index
    %66 = memref.load %arg2[%65, %c8] : memref<2x16xf32, #tpu.memory_space<smem>>
    %c0_41 = arith.constant 0 : index
    %c8_42 = arith.constant 8 : index
    %c0_43 = arith.constant 0 : index
    %c0_44 = arith.constant 0 : index
    %67 = vector.load %arg4[%c0_41, %c8_42, %c0_43, %c0_44] : memref<1x16x32x32xf32, #tpu.memory_space<vmem>>, vector<1x1x32x32xf32>
    %68 = vector.shape_cast %67 : vector<1x1x32x32xf32> to vector<32x32xf32>
    %69 = vector.broadcast %66 : f32 to vector<32x32xf32>
    %70 = arith.mulf %69, %68 : vector<32x32xf32>
    %71 = arith.addf %64, %70 : vector<32x32xf32>
    %72 = arith.index_cast %arg0 : i32 to index
    %c9 = arith.constant 9 : index
    %73 = memref.load %arg2[%72, %c9] : memref<2x16xf32, #tpu.memory_space<smem>>
    %c0_45 = arith.constant 0 : index
    %c9_46 = arith.constant 9 : index
    %c0_47 = arith.constant 0 : index
    %c0_48 = arith.constant 0 : index
    %74 = vector.load %arg4[%c0_45, %c9_46, %c0_47, %c0_48] : memref<1x16x32x32xf32, #tpu.memory_space<vmem>>, vector<1x1x32x32xf32>
    %75 = vector.shape_cast %74 : vector<1x1x32x32xf32> to vector<32x32xf32>
    %76 = vector.broadcast %73 : f32 to vector<32x32xf32>
    %77 = arith.mulf %76, %75 : vector<32x32xf32>
    %78 = arith.addf %71, %77 : vector<32x32xf32>
    %79 = arith.index_cast %arg0 : i32 to index
    %c10 = arith.constant 10 : index
    %80 = memref.load %arg2[%79, %c10] : memref<2x16xf32, #tpu.memory_space<smem>>
    %c0_49 = arith.constant 0 : index
    %c10_50 = arith.constant 10 : index
    %c0_51 = arith.constant 0 : index
    %c0_52 = arith.constant 0 : index
    %81 = vector.load %arg4[%c0_49, %c10_50, %c0_51, %c0_52] : memref<1x16x32x32xf32, #tpu.memory_space<vmem>>, vector<1x1x32x32xf32>
    %82 = vector.shape_cast %81 : vector<1x1x32x32xf32> to vector<32x32xf32>
    %83 = vector.broadcast %80 : f32 to vector<32x32xf32>
    %84 = arith.mulf %83, %82 : vector<32x32xf32>
    %85 = arith.addf %78, %84 : vector<32x32xf32>
    %86 = arith.index_cast %arg0 : i32 to index
    %c11 = arith.constant 11 : index
    %87 = memref.load %arg2[%86, %c11] : memref<2x16xf32, #tpu.memory_space<smem>>
    %c0_53 = arith.constant 0 : index
    %c11_54 = arith.constant 11 : index
    %c0_55 = arith.constant 0 : index
    %c0_56 = arith.constant 0 : index
    %88 = vector.load %arg4[%c0_53, %c11_54, %c0_55, %c0_56] : memref<1x16x32x32xf32, #tpu.memory_space<vmem>>, vector<1x1x32x32xf32>
    %89 = vector.shape_cast %88 : vector<1x1x32x32xf32> to vector<32x32xf32>
    %90 = vector.broadcast %87 : f32 to vector<32x32xf32>
    %91 = arith.mulf %90, %89 : vector<32x32xf32>
    %92 = arith.addf %85, %91 : vector<32x32xf32>
    %93 = arith.index_cast %arg0 : i32 to index
    %c12 = arith.constant 12 : index
    %94 = memref.load %arg2[%93, %c12] : memref<2x16xf32, #tpu.memory_space<smem>>
    %c0_57 = arith.constant 0 : index
    %c12_58 = arith.constant 12 : index
    %c0_59 = arith.constant 0 : index
    %c0_60 = arith.constant 0 : index
    %95 = vector.load %arg4[%c0_57, %c12_58, %c0_59, %c0_60] : memref<1x16x32x32xf32, #tpu.memory_space<vmem>>, vector<1x1x32x32xf32>
    %96 = vector.shape_cast %95 : vector<1x1x32x32xf32> to vector<32x32xf32>
    %97 = vector.broadcast %94 : f32 to vector<32x32xf32>
    %98 = arith.mulf %97, %96 : vector<32x32xf32>
    %99 = arith.addf %92, %98 : vector<32x32xf32>
    %100 = arith.index_cast %arg0 : i32 to index
    %c13 = arith.constant 13 : index
    %101 = memref.load %arg2[%100, %c13] : memref<2x16xf32, #tpu.memory_space<smem>>
    %c0_61 = arith.constant 0 : index
    %c13_62 = arith.constant 13 : index
    %c0_63 = arith.constant 0 : index
    %c0_64 = arith.constant 0 : index
    %102 = vector.load %arg4[%c0_61, %c13_62, %c0_63, %c0_64] : memref<1x16x32x32xf32, #tpu.memory_space<vmem>>, vector<1x1x32x32xf32>
    %103 = vector.shape_cast %102 : vector<1x1x32x32xf32> to vector<32x32xf32>
    %104 = vector.broadcast %101 : f32 to vector<32x32xf32>
    %105 = arith.mulf %104, %103 : vector<32x32xf32>
    %106 = arith.addf %99, %105 : vector<32x32xf32>
    %107 = arith.index_cast %arg0 : i32 to index
    %c14 = arith.constant 14 : index
    %108 = memref.load %arg2[%107, %c14] : memref<2x16xf32, #tpu.memory_space<smem>>
    %c0_65 = arith.constant 0 : index
    %c14_66 = arith.constant 14 : index
    %c0_67 = arith.constant 0 : index
    %c0_68 = arith.constant 0 : index
    %109 = vector.load %arg4[%c0_65, %c14_66, %c0_67, %c0_68] : memref<1x16x32x32xf32, #tpu.memory_space<vmem>>, vector<1x1x32x32xf32>
    %110 = vector.shape_cast %109 : vector<1x1x32x32xf32> to vector<32x32xf32>
    %111 = vector.broadcast %108 : f32 to vector<32x32xf32>
    %112 = arith.mulf %111, %110 : vector<32x32xf32>
    %113 = arith.addf %106, %112 : vector<32x32xf32>
    %114 = arith.index_cast %arg0 : i32 to index
    %c15 = arith.constant 15 : index
    %115 = memref.load %arg2[%114, %c15] : memref<2x16xf32, #tpu.memory_space<smem>>
    %c0_69 = arith.constant 0 : index
    %c15_70 = arith.constant 15 : index
    %c0_71 = arith.constant 0 : index
    %c0_72 = arith.constant 0 : index
    %116 = vector.load %arg4[%c0_69, %c15_70, %c0_71, %c0_72] : memref<1x16x32x32xf32, #tpu.memory_space<vmem>>, vector<1x1x32x32xf32>
    %117 = vector.shape_cast %116 : vector<1x1x32x32xf32> to vector<32x32xf32>
    %118 = vector.broadcast %115 : f32 to vector<32x32xf32>
    %119 = arith.mulf %118, %117 : vector<32x32xf32>
    %120 = arith.addf %113, %119 : vector<32x32xf32>
    %cst = arith.constant dense<0.000000e+00> : vector<8x32xf32>
    %121 = tpu.matmul %3, %120, %cst {dimension_numbers = #tpu.dot_dimension_numbers<[1], [0], [0], [1], [0, 0, 1, 1], [], []>} : vector<8x32xf32>, vector<32x32xf32>, vector<8x32xf32> -> vector<8x32xf32>
    %c0_73 = arith.constant 0 : index
    %c0_74 = arith.constant 0 : index
    %c0_75 = arith.constant 0 : index
    %122 = vector.load %arg7[%c0_73, %c0_74, %c0_75] : memref<1x1x32xf32, #tpu.memory_space<vmem>>, vector<1x1x32xf32>
    %123 = vector.shape_cast %122 : vector<1x1x32xf32> to vector<1x32xf32>
    %124 = vector.broadcast %123 : vector<1x32xf32> to vector<8x32xf32>
    %125 = arith.addf %121, %124 : vector<8x32xf32>
    %cst_76 = arith.constant 0.000000e+00 : f32
    %126 = vector.broadcast %cst_76 : f32 to vector<8x32xf32>
    %c0_77 = arith.constant 0 : index
    %c0_78 = arith.constant 0 : index
    %c0_79 = arith.constant 0 : index
    %c0_80 = arith.constant 0 : index
    %127 = vector.load %arg8[%c0_77, %c0_78, %c0_79, %c0_80] : memref<1x4x32x8xf32, #tpu.memory_space<vmem>>, vector<1x1x32x8xf32>
    %128 = vector.shape_cast %127 : vector<1x1x32x8xf32> to vector<32x8xf32>
    %cst_81 = arith.constant dense<0.000000e+00> : vector<8x8xf32>
    %129 = tpu.matmul %125, %128, %cst_81 {dimension_numbers = #tpu.dot_dimension_numbers<[1], [0], [0], [1], [0, 0, 1, 1], [], []>} : vector<8x32xf32>, vector<32x8xf32>, vector<8x8xf32> -> vector<8x8xf32>
    %c0_82 = arith.constant 0 : index
    %c0_83 = arith.constant 0 : index
    %c0_84 = arith.constant 0 : index
    %c0_85 = arith.constant 0 : index
    %130 = vector.load %arg9[%c0_82, %c0_83, %c0_84, %c0_85] : memref<1x4x1x8xf32, #tpu.memory_space<vmem>>, vector<1x1x1x8xf32>
    %131 = vector.shape_cast %130 : vector<1x1x1x8xf32> to vector<1x8xf32>
    %132 = vector.broadcast %131 : vector<1x8xf32> to vector<8x8xf32>
    %133 = arith.addf %129, %132 : vector<8x8xf32>
    %c0_86 = arith.constant 0 : index
    %c0_87 = arith.constant 0 : index
    %c0_88 = arith.constant 0 : index
    %c0_89 = arith.constant 0 : index
    %134 = vector.load %arg10[%c0_86, %c0_87, %c0_88, %c0_89] : memref<1x4x32x8xf32, #tpu.memory_space<vmem>>, vector<1x1x32x8xf32>
    %135 = vector.shape_cast %134 : vector<1x1x32x8xf32> to vector<32x8xf32>
    %cst_90 = arith.constant dense<0.000000e+00> : vector<8x8xf32>
    %136 = tpu.matmul %125, %135, %cst_90 {dimension_numbers = #tpu.dot_dimension_numbers<[1], [0], [0], [1], [0, 0, 1, 1], [], []>} : vector<8x32xf32>, vector<32x8xf32>, vector<8x8xf32> -> vector<8x8xf32>
    %c0_91 = arith.constant 0 : index
    %c0_92 = arith.constant 0 : index
    %c0_93 = arith.constant 0 : index
    %c0_94 = arith.constant 0 : index
    %137 = vector.load %arg11[%c0_91, %c0_92, %c0_93, %c0_94] : memref<1x4x1x8xf32, #tpu.memory_space<vmem>>, vector<1x1x1x8xf32>
    %138 = vector.shape_cast %137 : vector<1x1x1x8xf32> to vector<1x8xf32>
    %139 = vector.broadcast %138 : vector<1x8xf32> to vector<8x8xf32>
    %140 = arith.addf %136, %139 : vector<8x8xf32>
    %c0_95 = arith.constant 0 : index
    %c0_96 = arith.constant 0 : index
    %c0_97 = arith.constant 0 : index
    %c0_98 = arith.constant 0 : index
    %141 = vector.load %arg12[%c0_95, %c0_96, %c0_97, %c0_98] : memref<1x4x32x8xf32, #tpu.memory_space<vmem>>, vector<1x1x32x8xf32>
    %142 = vector.shape_cast %141 : vector<1x1x32x8xf32> to vector<32x8xf32>
    %cst_99 = arith.constant dense<0.000000e+00> : vector<8x8xf32>
    %143 = tpu.matmul %125, %142, %cst_99 {dimension_numbers = #tpu.dot_dimension_numbers<[1], [0], [0], [1], [0, 0, 1, 1], [], []>} : vector<8x32xf32>, vector<32x8xf32>, vector<8x8xf32> -> vector<8x8xf32>
    %c0_100 = arith.constant 0 : index
    %c0_101 = arith.constant 0 : index
    %c0_102 = arith.constant 0 : index
    %c0_103 = arith.constant 0 : index
    %144 = vector.load %arg13[%c0_100, %c0_101, %c0_102, %c0_103] : memref<1x4x1x8xf32, #tpu.memory_space<vmem>>, vector<1x1x1x8xf32>
    %145 = vector.shape_cast %144 : vector<1x1x1x8xf32> to vector<1x8xf32>
    %146 = vector.broadcast %145 : vector<1x8xf32> to vector<8x8xf32>
    %147 = arith.addf %143, %146 : vector<8x8xf32>
    %cst_104 = arith.constant dense<0.000000e+00> : vector<8x8xf32>
    %148 = tpu.matmul %133, %140, %cst_104 {dimension_numbers = #tpu.dot_dimension_numbers<[1], [1], [0], [0], [0, 0, 1, 0], [], []>} : vector<8x8xf32>, vector<8x8xf32>, vector<8x8xf32> -> vector<8x8xf32>
    %cst_105 = arith.constant 0.353553385 : f32
    %149 = vector.broadcast %cst_105 : f32 to vector<8x8xf32>
    %150 = arith.mulf %148, %149 : vector<8x8xf32>
    %cst_106 = arith.constant dense<0xFF800000> : vector<8xf32>
    %151 = vector.multi_reduction <maximumf>, %150, %cst_106 [1] : vector<8x8xf32> to vector<8xf32>
    %152 = vector.shape_cast %151 : vector<8xf32> to vector<8x1xf32>
    %153 = vector.broadcast %152 : vector<8x1xf32> to vector<8x8xf32>
    %154 = arith.subf %150, %153 : vector<8x8xf32>
    %155 = math.exp %154 : vector<8x8xf32>
    %cst_107 = arith.constant dense<0.000000e+00> : vector<8xf32>
    %156 = vector.multi_reduction <add>, %155, %cst_107 [1] : vector<8x8xf32> to vector<8xf32>
    %157 = vector.shape_cast %156 : vector<8xf32> to vector<8x1xf32>
    %158 = tpu.reciprocal %157 : vector<8x1xf32> -> vector<8x1xf32>
    %159 = vector.broadcast %158 : vector<8x1xf32> to vector<8x8xf32>
    %160 = arith.mulf %155, %159 : vector<8x8xf32>
    %cst_108 = arith.constant dense<0.000000e+00> : vector<8x8xf32>
    %161 = tpu.matmul %160, %147, %cst_108 {dimension_numbers = #tpu.dot_dimension_numbers<[1], [0], [0], [1], [0, 0, 1, 1], [], []>} : vector<8x8xf32>, vector<8x8xf32>, vector<8x8xf32> -> vector<8x8xf32>
    %c0_109 = arith.constant 0 : index
    %c0_110 = arith.constant 0 : index
    %c0_111 = arith.constant 0 : index
    %c0_112 = arith.constant 0 : index
    %162 = vector.load %arg14[%c0_109, %c0_110, %c0_111, %c0_112] : memref<1x4x8x32xf32, #tpu.memory_space<vmem>>, vector<1x1x8x32xf32>
    %163 = vector.shape_cast %162 : vector<1x1x8x32xf32> to vector<8x32xf32>
    %cst_113 = arith.constant dense<0.000000e+00> : vector<8x32xf32>
    %164 = tpu.matmul %161, %163, %cst_113 {dimension_numbers = #tpu.dot_dimension_numbers<[1], [0], [0], [1], [0, 0, 1, 1], [], []>} : vector<8x8xf32>, vector<8x32xf32>, vector<8x32xf32> -> vector<8x32xf32>
    %165 = arith.addf %126, %164 : vector<8x32xf32>
    %c0_114 = arith.constant 0 : index
    %c1_115 = arith.constant 1 : index
    %c0_116 = arith.constant 0 : index
    %c0_117 = arith.constant 0 : index
    %166 = vector.load %arg8[%c0_114, %c1_115, %c0_116, %c0_117] : memref<1x4x32x8xf32, #tpu.memory_space<vmem>>, vector<1x1x32x8xf32>
    %167 = vector.shape_cast %166 : vector<1x1x32x8xf32> to vector<32x8xf32>
    %cst_118 = arith.constant dense<0.000000e+00> : vector<8x8xf32>
    %168 = tpu.matmul %125, %167, %cst_118 {dimension_numbers = #tpu.dot_dimension_numbers<[1], [0], [0], [1], [0, 0, 1, 1], [], []>} : vector<8x32xf32>, vector<32x8xf32>, vector<8x8xf32> -> vector<8x8xf32>
    %c0_119 = arith.constant 0 : index
    %c1_120 = arith.constant 1 : index
    %c0_121 = arith.constant 0 : index
    %c0_122 = arith.constant 0 : index
    %169 = vector.load %arg9[%c0_119, %c1_120, %c0_121, %c0_122] : memref<1x4x1x8xf32, #tpu.memory_space<vmem>>, vector<1x1x1x8xf32>
    %170 = vector.shape_cast %169 : vector<1x1x1x8xf32> to vector<1x8xf32>
    %171 = vector.broadcast %170 : vector<1x8xf32> to vector<8x8xf32>
    %172 = arith.addf %168, %171 : vector<8x8xf32>
    %c0_123 = arith.constant 0 : index
    %c1_124 = arith.constant 1 : index
    %c0_125 = arith.constant 0 : index
    %c0_126 = arith.constant 0 : index
    %173 = vector.load %arg10[%c0_123, %c1_124, %c0_125, %c0_126] : memref<1x4x32x8xf32, #tpu.memory_space<vmem>>, vector<1x1x32x8xf32>
    %174 = vector.shape_cast %173 : vector<1x1x32x8xf32> to vector<32x8xf32>
    %cst_127 = arith.constant dense<0.000000e+00> : vector<8x8xf32>
    %175 = tpu.matmul %125, %174, %cst_127 {dimension_numbers = #tpu.dot_dimension_numbers<[1], [0], [0], [1], [0, 0, 1, 1], [], []>} : vector<8x32xf32>, vector<32x8xf32>, vector<8x8xf32> -> vector<8x8xf32>
    %c0_128 = arith.constant 0 : index
    %c1_129 = arith.constant 1 : index
    %c0_130 = arith.constant 0 : index
    %c0_131 = arith.constant 0 : index
    %176 = vector.load %arg11[%c0_128, %c1_129, %c0_130, %c0_131] : memref<1x4x1x8xf32, #tpu.memory_space<vmem>>, vector<1x1x1x8xf32>
    %177 = vector.shape_cast %176 : vector<1x1x1x8xf32> to vector<1x8xf32>
    %178 = vector.broadcast %177 : vector<1x8xf32> to vector<8x8xf32>
    %179 = arith.addf %175, %178 : vector<8x8xf32>
    %c0_132 = arith.constant 0 : index
    %c1_133 = arith.constant 1 : index
    %c0_134 = arith.constant 0 : index
    %c0_135 = arith.constant 0 : index
    %180 = vector.load %arg12[%c0_132, %c1_133, %c0_134, %c0_135] : memref<1x4x32x8xf32, #tpu.memory_space<vmem>>, vector<1x1x32x8xf32>
    %181 = vector.shape_cast %180 : vector<1x1x32x8xf32> to vector<32x8xf32>
    %cst_136 = arith.constant dense<0.000000e+00> : vector<8x8xf32>
    %182 = tpu.matmul %125, %181, %cst_136 {dimension_numbers = #tpu.dot_dimension_numbers<[1], [0], [0], [1], [0, 0, 1, 1], [], []>} : vector<8x32xf32>, vector<32x8xf32>, vector<8x8xf32> -> vector<8x8xf32>
    %c0_137 = arith.constant 0 : index
    %c1_138 = arith.constant 1 : index
    %c0_139 = arith.constant 0 : index
    %c0_140 = arith.constant 0 : index
    %183 = vector.load %arg13[%c0_137, %c1_138, %c0_139, %c0_140] : memref<1x4x1x8xf32, #tpu.memory_space<vmem>>, vector<1x1x1x8xf32>
    %184 = vector.shape_cast %183 : vector<1x1x1x8xf32> to vector<1x8xf32>
    %185 = vector.broadcast %184 : vector<1x8xf32> to vector<8x8xf32>
    %186 = arith.addf %182, %185 : vector<8x8xf32>
    %cst_141 = arith.constant dense<0.000000e+00> : vector<8x8xf32>
    %187 = tpu.matmul %172, %179, %cst_141 {dimension_numbers = #tpu.dot_dimension_numbers<[1], [1], [0], [0], [0, 0, 1, 0], [], []>} : vector<8x8xf32>, vector<8x8xf32>, vector<8x8xf32> -> vector<8x8xf32>
    %cst_142 = arith.constant 0.353553385 : f32
    %188 = vector.broadcast %cst_142 : f32 to vector<8x8xf32>
    %189 = arith.mulf %187, %188 : vector<8x8xf32>
    %cst_143 = arith.constant dense<0xFF800000> : vector<8xf32>
    %190 = vector.multi_reduction <maximumf>, %189, %cst_143 [1] : vector<8x8xf32> to vector<8xf32>
    %191 = vector.shape_cast %190 : vector<8xf32> to vector<8x1xf32>
    %192 = vector.broadcast %191 : vector<8x1xf32> to vector<8x8xf32>
    %193 = arith.subf %189, %192 : vector<8x8xf32>
    %194 = math.exp %193 : vector<8x8xf32>
    %cst_144 = arith.constant dense<0.000000e+00> : vector<8xf32>
    %195 = vector.multi_reduction <add>, %194, %cst_144 [1] : vector<8x8xf32> to vector<8xf32>
    %196 = vector.shape_cast %195 : vector<8xf32> to vector<8x1xf32>
    %197 = tpu.reciprocal %196 : vector<8x1xf32> -> vector<8x1xf32>
    %198 = vector.broadcast %197 : vector<8x1xf32> to vector<8x8xf32>
    %199 = arith.mulf %194, %198 : vector<8x8xf32>
    %cst_145 = arith.constant dense<0.000000e+00> : vector<8x8xf32>
    %200 = tpu.matmul %199, %186, %cst_145 {dimension_numbers = #tpu.dot_dimension_numbers<[1], [0], [0], [1], [0, 0, 1, 1], [], []>} : vector<8x8xf32>, vector<8x8xf32>, vector<8x8xf32> -> vector<8x8xf32>
    %c0_146 = arith.constant 0 : index
    %c1_147 = arith.constant 1 : index
    %c0_148 = arith.constant 0 : index
    %c0_149 = arith.constant 0 : index
    %201 = vector.load %arg14[%c0_146, %c1_147, %c0_148, %c0_149] : memref<1x4x8x32xf32, #tpu.memory_space<vmem>>, vector<1x1x8x32xf32>
    %202 = vector.shape_cast %201 : vector<1x1x8x32xf32> to vector<8x32xf32>
    %cst_150 = arith.constant dense<0.000000e+00> : vector<8x32xf32>
    %203 = tpu.matmul %200, %202, %cst_150 {dimension_numbers = #tpu.dot_dimension_numbers<[1], [0], [0], [1], [0, 0, 1, 1], [], []>} : vector<8x8xf32>, vector<8x32xf32>, vector<8x32xf32> -> vector<8x32xf32>
    %204 = arith.addf %165, %203 : vector<8x32xf32>
    %c0_151 = arith.constant 0 : index
    %c2_152 = arith.constant 2 : index
    %c0_153 = arith.constant 0 : index
    %c0_154 = arith.constant 0 : index
    %205 = vector.load %arg8[%c0_151, %c2_152, %c0_153, %c0_154] : memref<1x4x32x8xf32, #tpu.memory_space<vmem>>, vector<1x1x32x8xf32>
    %206 = vector.shape_cast %205 : vector<1x1x32x8xf32> to vector<32x8xf32>
    %cst_155 = arith.constant dense<0.000000e+00> : vector<8x8xf32>
    %207 = tpu.matmul %125, %206, %cst_155 {dimension_numbers = #tpu.dot_dimension_numbers<[1], [0], [0], [1], [0, 0, 1, 1], [], []>} : vector<8x32xf32>, vector<32x8xf32>, vector<8x8xf32> -> vector<8x8xf32>
    %c0_156 = arith.constant 0 : index
    %c2_157 = arith.constant 2 : index
    %c0_158 = arith.constant 0 : index
    %c0_159 = arith.constant 0 : index
    %208 = vector.load %arg9[%c0_156, %c2_157, %c0_158, %c0_159] : memref<1x4x1x8xf32, #tpu.memory_space<vmem>>, vector<1x1x1x8xf32>
    %209 = vector.shape_cast %208 : vector<1x1x1x8xf32> to vector<1x8xf32>
    %210 = vector.broadcast %209 : vector<1x8xf32> to vector<8x8xf32>
    %211 = arith.addf %207, %210 : vector<8x8xf32>
    %c0_160 = arith.constant 0 : index
    %c2_161 = arith.constant 2 : index
    %c0_162 = arith.constant 0 : index
    %c0_163 = arith.constant 0 : index
    %212 = vector.load %arg10[%c0_160, %c2_161, %c0_162, %c0_163] : memref<1x4x32x8xf32, #tpu.memory_space<vmem>>, vector<1x1x32x8xf32>
    %213 = vector.shape_cast %212 : vector<1x1x32x8xf32> to vector<32x8xf32>
    %cst_164 = arith.constant dense<0.000000e+00> : vector<8x8xf32>
    %214 = tpu.matmul %125, %213, %cst_164 {dimension_numbers = #tpu.dot_dimension_numbers<[1], [0], [0], [1], [0, 0, 1, 1], [], []>} : vector<8x32xf32>, vector<32x8xf32>, vector<8x8xf32> -> vector<8x8xf32>
    %c0_165 = arith.constant 0 : index
    %c2_166 = arith.constant 2 : index
    %c0_167 = arith.constant 0 : index
    %c0_168 = arith.constant 0 : index
    %215 = vector.load %arg11[%c0_165, %c2_166, %c0_167, %c0_168] : memref<1x4x1x8xf32, #tpu.memory_space<vmem>>, vector<1x1x1x8xf32>
    %216 = vector.shape_cast %215 : vector<1x1x1x8xf32> to vector<1x8xf32>
    %217 = vector.broadcast %216 : vector<1x8xf32> to vector<8x8xf32>
    %218 = arith.addf %214, %217 : vector<8x8xf32>
    %c0_169 = arith.constant 0 : index
    %c2_170 = arith.constant 2 : index
    %c0_171 = arith.constant 0 : index
    %c0_172 = arith.constant 0 : index
    %219 = vector.load %arg12[%c0_169, %c2_170, %c0_171, %c0_172] : memref<1x4x32x8xf32, #tpu.memory_space<vmem>>, vector<1x1x32x8xf32>
    %220 = vector.shape_cast %219 : vector<1x1x32x8xf32> to vector<32x8xf32>
    %cst_173 = arith.constant dense<0.000000e+00> : vector<8x8xf32>
    %221 = tpu.matmul %125, %220, %cst_173 {dimension_numbers = #tpu.dot_dimension_numbers<[1], [0], [0], [1], [0, 0, 1, 1], [], []>} : vector<8x32xf32>, vector<32x8xf32>, vector<8x8xf32> -> vector<8x8xf32>
    %c0_174 = arith.constant 0 : index
    %c2_175 = arith.constant 2 : index
    %c0_176 = arith.constant 0 : index
    %c0_177 = arith.constant 0 : index
    %222 = vector.load %arg13[%c0_174, %c2_175, %c0_176, %c0_177] : memref<1x4x1x8xf32, #tpu.memory_space<vmem>>, vector<1x1x1x8xf32>
    %223 = vector.shape_cast %222 : vector<1x1x1x8xf32> to vector<1x8xf32>
    %224 = vector.broadcast %223 : vector<1x8xf32> to vector<8x8xf32>
    %225 = arith.addf %221, %224 : vector<8x8xf32>
    %cst_178 = arith.constant dense<0.000000e+00> : vector<8x8xf32>
    %226 = tpu.matmul %211, %218, %cst_178 {dimension_numbers = #tpu.dot_dimension_numbers<[1], [1], [0], [0], [0, 0, 1, 0], [], []>} : vector<8x8xf32>, vector<8x8xf32>, vector<8x8xf32> -> vector<8x8xf32>
    %cst_179 = arith.constant 0.353553385 : f32
    %227 = vector.broadcast %cst_179 : f32 to vector<8x8xf32>
    %228 = arith.mulf %226, %227 : vector<8x8xf32>
    %cst_180 = arith.constant dense<0xFF800000> : vector<8xf32>
    %229 = vector.multi_reduction <maximumf>, %228, %cst_180 [1] : vector<8x8xf32> to vector<8xf32>
    %230 = vector.shape_cast %229 : vector<8xf32> to vector<8x1xf32>
    %231 = vector.broadcast %230 : vector<8x1xf32> to vector<8x8xf32>
    %232 = arith.subf %228, %231 : vector<8x8xf32>
    %233 = math.exp %232 : vector<8x8xf32>
    %cst_181 = arith.constant dense<0.000000e+00> : vector<8xf32>
    %234 = vector.multi_reduction <add>, %233, %cst_181 [1] : vector<8x8xf32> to vector<8xf32>
    %235 = vector.shape_cast %234 : vector<8xf32> to vector<8x1xf32>
    %236 = tpu.reciprocal %235 : vector<8x1xf32> -> vector<8x1xf32>
    %237 = vector.broadcast %236 : vector<8x1xf32> to vector<8x8xf32>
    %238 = arith.mulf %233, %237 : vector<8x8xf32>
    %cst_182 = arith.constant dense<0.000000e+00> : vector<8x8xf32>
    %239 = tpu.matmul %238, %225, %cst_182 {dimension_numbers = #tpu.dot_dimension_numbers<[1], [0], [0], [1], [0, 0, 1, 1], [], []>} : vector<8x8xf32>, vector<8x8xf32>, vector<8x8xf32> -> vector<8x8xf32>
    %c0_183 = arith.constant 0 : index
    %c2_184 = arith.constant 2 : index
    %c0_185 = arith.constant 0 : index
    %c0_186 = arith.constant 0 : index
    %240 = vector.load %arg14[%c0_183, %c2_184, %c0_185, %c0_186] : memref<1x4x8x32xf32, #tpu.memory_space<vmem>>, vector<1x1x8x32xf32>
    %241 = vector.shape_cast %240 : vector<1x1x8x32xf32> to vector<8x32xf32>
    %cst_187 = arith.constant dense<0.000000e+00> : vector<8x32xf32>
    %242 = tpu.matmul %239, %241, %cst_187 {dimension_numbers = #tpu.dot_dimension_numbers<[1], [0], [0], [1], [0, 0, 1, 1], [], []>} : vector<8x8xf32>, vector<8x32xf32>, vector<8x32xf32> -> vector<8x32xf32>
    %243 = arith.addf %204, %242 : vector<8x32xf32>
    %c0_188 = arith.constant 0 : index
    %c3_189 = arith.constant 3 : index
    %c0_190 = arith.constant 0 : index
    %c0_191 = arith.constant 0 : index
    %244 = vector.load %arg8[%c0_188, %c3_189, %c0_190, %c0_191] : memref<1x4x32x8xf32, #tpu.memory_space<vmem>>, vector<1x1x32x8xf32>
    %245 = vector.shape_cast %244 : vector<1x1x32x8xf32> to vector<32x8xf32>
    %cst_192 = arith.constant dense<0.000000e+00> : vector<8x8xf32>
    %246 = tpu.matmul %125, %245, %cst_192 {dimension_numbers = #tpu.dot_dimension_numbers<[1], [0], [0], [1], [0, 0, 1, 1], [], []>} : vector<8x32xf32>, vector<32x8xf32>, vector<8x8xf32> -> vector<8x8xf32>
    %c0_193 = arith.constant 0 : index
    %c3_194 = arith.constant 3 : index
    %c0_195 = arith.constant 0 : index
    %c0_196 = arith.constant 0 : index
    %247 = vector.load %arg9[%c0_193, %c3_194, %c0_195, %c0_196] : memref<1x4x1x8xf32, #tpu.memory_space<vmem>>, vector<1x1x1x8xf32>
    %248 = vector.shape_cast %247 : vector<1x1x1x8xf32> to vector<1x8xf32>
    %249 = vector.broadcast %248 : vector<1x8xf32> to vector<8x8xf32>
    %250 = arith.addf %246, %249 : vector<8x8xf32>
    %c0_197 = arith.constant 0 : index
    %c3_198 = arith.constant 3 : index
    %c0_199 = arith.constant 0 : index
    %c0_200 = arith.constant 0 : index
    %251 = vector.load %arg10[%c0_197, %c3_198, %c0_199, %c0_200] : memref<1x4x32x8xf32, #tpu.memory_space<vmem>>, vector<1x1x32x8xf32>
    %252 = vector.shape_cast %251 : vector<1x1x32x8xf32> to vector<32x8xf32>
    %cst_201 = arith.constant dense<0.000000e+00> : vector<8x8xf32>
    %253 = tpu.matmul %125, %252, %cst_201 {dimension_numbers = #tpu.dot_dimension_numbers<[1], [0], [0], [1], [0, 0, 1, 1], [], []>} : vector<8x32xf32>, vector<32x8xf32>, vector<8x8xf32> -> vector<8x8xf32>
    %c0_202 = arith.constant 0 : index
    %c3_203 = arith.constant 3 : index
    %c0_204 = arith.constant 0 : index
    %c0_205 = arith.constant 0 : index
    %254 = vector.load %arg11[%c0_202, %c3_203, %c0_204, %c0_205] : memref<1x4x1x8xf32, #tpu.memory_space<vmem>>, vector<1x1x1x8xf32>
    %255 = vector.shape_cast %254 : vector<1x1x1x8xf32> to vector<1x8xf32>
    %256 = vector.broadcast %255 : vector<1x8xf32> to vector<8x8xf32>
    %257 = arith.addf %253, %256 : vector<8x8xf32>
    %c0_206 = arith.constant 0 : index
    %c3_207 = arith.constant 3 : index
    %c0_208 = arith.constant 0 : index
    %c0_209 = arith.constant 0 : index
    %258 = vector.load %arg12[%c0_206, %c3_207, %c0_208, %c0_209] : memref<1x4x32x8xf32, #tpu.memory_space<vmem>>, vector<1x1x32x8xf32>
    %259 = vector.shape_cast %258 : vector<1x1x32x8xf32> to vector<32x8xf32>
    %cst_210 = arith.constant dense<0.000000e+00> : vector<8x8xf32>
    %260 = tpu.matmul %125, %259, %cst_210 {dimension_numbers = #tpu.dot_dimension_numbers<[1], [0], [0], [1], [0, 0, 1, 1], [], []>} : vector<8x32xf32>, vector<32x8xf32>, vector<8x8xf32> -> vector<8x8xf32>
    %c0_211 = arith.constant 0 : index
    %c3_212 = arith.constant 3 : index
    %c0_213 = arith.constant 0 : index
    %c0_214 = arith.constant 0 : index
    %261 = vector.load %arg13[%c0_211, %c3_212, %c0_213, %c0_214] : memref<1x4x1x8xf32, #tpu.memory_space<vmem>>, vector<1x1x1x8xf32>
    %262 = vector.shape_cast %261 : vector<1x1x1x8xf32> to vector<1x8xf32>
    %263 = vector.broadcast %262 : vector<1x8xf32> to vector<8x8xf32>
    %264 = arith.addf %260, %263 : vector<8x8xf32>
    %cst_215 = arith.constant dense<0.000000e+00> : vector<8x8xf32>
    %265 = tpu.matmul %250, %257, %cst_215 {dimension_numbers = #tpu.dot_dimension_numbers<[1], [1], [0], [0], [0, 0, 1, 0], [], []>} : vector<8x8xf32>, vector<8x8xf32>, vector<8x8xf32> -> vector<8x8xf32>
    %cst_216 = arith.constant 0.353553385 : f32
    %266 = vector.broadcast %cst_216 : f32 to vector<8x8xf32>
    %267 = arith.mulf %265, %266 : vector<8x8xf32>
    %cst_217 = arith.constant dense<0xFF800000> : vector<8xf32>
    %268 = vector.multi_reduction <maximumf>, %267, %cst_217 [1] : vector<8x8xf32> to vector<8xf32>
    %269 = vector.shape_cast %268 : vector<8xf32> to vector<8x1xf32>
    %270 = vector.broadcast %269 : vector<8x1xf32> to vector<8x8xf32>
    %271 = arith.subf %267, %270 : vector<8x8xf32>
    %272 = math.exp %271 : vector<8x8xf32>
    %cst_218 = arith.constant dense<0.000000e+00> : vector<8xf32>
    %273 = vector.multi_reduction <add>, %272, %cst_218 [1] : vector<8x8xf32> to vector<8xf32>
    %274 = vector.shape_cast %273 : vector<8xf32> to vector<8x1xf32>
    %275 = tpu.reciprocal %274 : vector<8x1xf32> -> vector<8x1xf32>
    %276 = vector.broadcast %275 : vector<8x1xf32> to vector<8x8xf32>
    %277 = arith.mulf %272, %276 : vector<8x8xf32>
    %cst_219 = arith.constant dense<0.000000e+00> : vector<8x8xf32>
    %278 = tpu.matmul %277, %264, %cst_219 {dimension_numbers = #tpu.dot_dimension_numbers<[1], [0], [0], [1], [0, 0, 1, 1], [], []>} : vector<8x8xf32>, vector<8x8xf32>, vector<8x8xf32> -> vector<8x8xf32>
    %c0_220 = arith.constant 0 : index
    %c3_221 = arith.constant 3 : index
    %c0_222 = arith.constant 0 : index
    %c0_223 = arith.constant 0 : index
    %279 = vector.load %arg14[%c0_220, %c3_221, %c0_222, %c0_223] : memref<1x4x8x32xf32, #tpu.memory_space<vmem>>, vector<1x1x8x32xf32>
    %280 = vector.shape_cast %279 : vector<1x1x8x32xf32> to vector<8x32xf32>
    %cst_224 = arith.constant dense<0.000000e+00> : vector<8x32xf32>
    %281 = tpu.matmul %278, %280, %cst_224 {dimension_numbers = #tpu.dot_dimension_numbers<[1], [0], [0], [1], [0, 0, 1, 1], [], []>} : vector<8x8xf32>, vector<8x32xf32>, vector<8x32xf32> -> vector<8x32xf32>
    %282 = arith.addf %243, %281 : vector<8x32xf32>
    %c0_225 = arith.constant 0 : index
    %c0_226 = arith.constant 0 : index
    %c0_227 = arith.constant 0 : index
    %283 = vector.load %arg15[%c0_225, %c0_226, %c0_227] : memref<1x1x32xf32, #tpu.memory_space<vmem>>, vector<1x1x32xf32>
    %284 = vector.shape_cast %283 : vector<1x1x32xf32> to vector<1x32xf32>
    %285 = vector.broadcast %284 : vector<1x32xf32> to vector<8x32xf32>
    %286 = arith.addf %282, %285 : vector<8x32xf32>
    %287 = arith.addf %3, %286 : vector<8x32xf32>
    %c0_228 = arith.constant 0 : index
    %c0_229 = arith.constant 0 : index
    %c0_230 = arith.constant 0 : index
    %288 = vector.load %arg16[%c0_228, %c0_229, %c0_230] : memref<1x1x32xf32, #tpu.memory_space<vmem>>, vector<1x1x32xf32>
    %289 = vector.shape_cast %288 : vector<1x1x32xf32> to vector<1x32xf32>
    %c0_231 = arith.constant 0 : index
    %c0_232 = arith.constant 0 : index
    %c0_233 = arith.constant 0 : index
    %290 = vector.load %arg17[%c0_231, %c0_232, %c0_233] : memref<1x1x32xf32, #tpu.memory_space<vmem>>, vector<1x1x32xf32>
    %291 = vector.shape_cast %290 : vector<1x1x32xf32> to vector<1x32xf32>
    %cst_234 = arith.constant dense<0.000000e+00> : vector<8xf32>
    %292 = vector.multi_reduction <add>, %287, %cst_234 [1] : vector<8x32xf32> to vector<8xf32>
    %293 = vector.shape_cast %292 : vector<8xf32> to vector<8x1xf32>
    %cst_235 = arith.constant 3.200000e+01 : f32
    %294 = vector.broadcast %cst_235 : f32 to vector<8x1xf32>
    %295 = arith.divf %293, %294 : vector<8x1xf32>
    %296 = vector.broadcast %295 : vector<8x1xf32> to vector<8x32xf32>
    %297 = arith.subf %287, %296 : vector<8x32xf32>
    %298 = arith.mulf %297, %297 : vector<8x32xf32>
    %cst_236 = arith.constant dense<0.000000e+00> : vector<8xf32>
    %299 = vector.multi_reduction <add>, %298, %cst_236 [1] : vector<8x32xf32> to vector<8xf32>
    %300 = vector.shape_cast %299 : vector<8xf32> to vector<8x1xf32>
    %cst_237 = arith.constant 3.200000e+01 : f32
    %301 = vector.broadcast %cst_237 : f32 to vector<8x1xf32>
    %302 = arith.divf %300, %301 : vector<8x1xf32>
    %cst_238 = arith.constant 9.99999974E-6 : f32
    %303 = vector.broadcast %cst_238 : f32 to vector<8x1xf32>
    %304 = arith.addf %302, %303 : vector<8x1xf32>
    %305 = math.rsqrt %304 : vector<8x1xf32>
    %306 = vector.broadcast %305 : vector<8x1xf32> to vector<8x32xf32>
    %307 = arith.mulf %297, %306 : vector<8x32xf32>
    %308 = vector.broadcast %289 : vector<1x32xf32> to vector<8x32xf32>
    %309 = arith.mulf %307, %308 : vector<8x32xf32>
    %310 = vector.broadcast %291 : vector<1x32xf32> to vector<8x32xf32>
    %311 = arith.addf %309, %310 : vector<8x32xf32>
    %c0_239 = arith.constant 0 : index
    %c0_240 = arith.constant 0 : index
    %c0_241 = arith.constant 0 : index
    %312 = vector.load %arg18[%c0_239, %c0_240, %c0_241] : memref<1x32x128xf32, #tpu.memory_space<vmem>>, vector<1x32x128xf32>
    %313 = vector.shape_cast %312 : vector<1x32x128xf32> to vector<32x128xf32>
    %cst_242 = arith.constant dense<0.000000e+00> : vector<8x128xf32>
    %314 = tpu.matmul %311, %313, %cst_242 {dimension_numbers = #tpu.dot_dimension_numbers<[1], [0], [0], [1], [0, 0, 1, 1], [], []>} : vector<8x32xf32>, vector<32x128xf32>, vector<8x128xf32> -> vector<8x128xf32>
    %c0_243 = arith.constant 0 : index
    %c0_244 = arith.constant 0 : index
    %c0_245 = arith.constant 0 : index
    %315 = vector.load %arg19[%c0_243, %c0_244, %c0_245] : memref<1x1x128xf32, #tpu.memory_space<vmem>>, vector<1x1x128xf32>
    %316 = vector.shape_cast %315 : vector<1x1x128xf32> to vector<1x128xf32>
    %317 = vector.broadcast %316 : vector<1x128xf32> to vector<8x128xf32>
    %318 = arith.addf %314, %317 : vector<8x128xf32>
    %cst_246 = arith.constant 5.000000e-01 : f32
    %319 = vector.broadcast %cst_246 : f32 to vector<8x128xf32>
    %320 = arith.mulf %319, %318 : vector<8x128xf32>
    %cst_247 = arith.constant 0.707106769 : f32
    %321 = vector.broadcast %cst_247 : f32 to vector<8x128xf32>
    %322 = arith.mulf %318, %321 : vector<8x128xf32>
    %323 = math.erf %322 : vector<8x128xf32>
    %cst_248 = arith.constant 1.000000e+00 : f32
    %324 = vector.broadcast %cst_248 : f32 to vector<8x128xf32>
    %325 = arith.addf %324, %323 : vector<8x128xf32>
    %326 = arith.mulf %320, %325 : vector<8x128xf32>
    %c0_249 = arith.constant 0 : index
    %c0_250 = arith.constant 0 : index
    %c0_251 = arith.constant 0 : index
    %327 = vector.load %arg20[%c0_249, %c0_250, %c0_251] : memref<1x128x32xf32, #tpu.memory_space<vmem>>, vector<1x128x32xf32>
    %328 = vector.shape_cast %327 : vector<1x128x32xf32> to vector<128x32xf32>
    %cst_252 = arith.constant dense<0.000000e+00> : vector<8x32xf32>
    %329 = tpu.matmul %326, %328, %cst_252 {dimension_numbers = #tpu.dot_dimension_numbers<[1], [0], [0], [1], [0, 0, 1, 1], [], []>} : vector<8x128xf32>, vector<128x32xf32>, vector<8x32xf32> -> vector<8x32xf32>
    %c0_253 = arith.constant 0 : index
    %c0_254 = arith.constant 0 : index
    %c0_255 = arith.constant 0 : index
    %330 = vector.load %arg21[%c0_253, %c0_254, %c0_255] : memref<1x1x32xf32, #tpu.memory_space<vmem>>, vector<1x1x32xf32>
    %331 = vector.shape_cast %330 : vector<1x1x32xf32> to vector<1x32xf32>
    %332 = vector.broadcast %331 : vector<1x32xf32> to vector<8x32xf32>
    %333 = arith.addf %329, %332 : vector<8x32xf32>
    %334 = arith.addf %311, %333 : vector<8x32xf32>
    %c0_256 = arith.constant 0 : index
    %c0_257 = arith.constant 0 : index
    %c0_258 = arith.constant 0 : index
    %335 = vector.load %arg22[%c0_256, %c0_257, %c0_258] : memref<1x1x32xf32, #tpu.memory_space<vmem>>, vector<1x1x32xf32>
    %336 = vector.shape_cast %335 : vector<1x1x32xf32> to vector<1x32xf32>
    %c0_259 = arith.constant 0 : index
    %c0_260 = arith.constant 0 : index
    %c0_261 = arith.constant 0 : index
    %337 = vector.load %arg23[%c0_259, %c0_260, %c0_261] : memref<1x1x32xf32, #tpu.memory_space<vmem>>, vector<1x1x32xf32>
    %338 = vector.shape_cast %337 : vector<1x1x32xf32> to vector<1x32xf32>
    %cst_262 = arith.constant dense<0.000000e+00> : vector<8xf32>
    %339 = vector.multi_reduction <add>, %334, %cst_262 [1] : vector<8x32xf32> to vector<8xf32>
    %340 = vector.shape_cast %339 : vector<8xf32> to vector<8x1xf32>
    %cst_263 = arith.constant 3.200000e+01 : f32
    %341 = vector.broadcast %cst_263 : f32 to vector<8x1xf32>
    %342 = arith.divf %340, %341 : vector<8x1xf32>
    %343 = vector.broadcast %342 : vector<8x1xf32> to vector<8x32xf32>
    %344 = arith.subf %334, %343 : vector<8x32xf32>
    %345 = arith.mulf %344, %344 : vector<8x32xf32>
    %cst_264 = arith.constant dense<0.000000e+00> : vector<8xf32>
    %346 = vector.multi_reduction <add>, %345, %cst_264 [1] : vector<8x32xf32> to vector<8xf32>
    %347 = vector.shape_cast %346 : vector<8xf32> to vector<8x1xf32>
    %cst_265 = arith.constant 3.200000e+01 : f32
    %348 = vector.broadcast %cst_265 : f32 to vector<8x1xf32>
    %349 = arith.divf %347, %348 : vector<8x1xf32>
    %cst_266 = arith.constant 9.99999974E-6 : f32
    %350 = vector.broadcast %cst_266 : f32 to vector<8x1xf32>
    %351 = arith.addf %349, %350 : vector<8x1xf32>
    %352 = math.rsqrt %351 : vector<8x1xf32>
    %353 = vector.broadcast %352 : vector<8x1xf32> to vector<8x32xf32>
    %354 = arith.mulf %344, %353 : vector<8x32xf32>
    %355 = vector.broadcast %336 : vector<1x32xf32> to vector<8x32xf32>
    %356 = arith.mulf %354, %355 : vector<8x32xf32>
    %357 = vector.broadcast %338 : vector<1x32xf32> to vector<8x32xf32>
    %358 = arith.addf %356, %357 : vector<8x32xf32>
    %c0_267 = arith.constant 0 : index
    %c0_268 = arith.constant 0 : index
    %359 = vector.load %arg25[%c0_267, %c0_268] : memref<8x32xf32, #tpu.memory_space<vmem>>, vector<8x32xf32>
    tpu.vector_store %arg25[%c0_267, %c0_268], %358 {strides = array<i32>} : memref<8x32xf32, #tpu.memory_space<vmem>>, vector<8x32xf32>,
    %c0_269 = arith.constant 0 : index
    %c0_270 = arith.constant 0 : index
    %c0_271 = arith.constant 0 : index
    %360 = vector.load %arg24[%c0_269, %c0_270, %c0_271] : memref<1x8x32xf32, #tpu.memory_space<vmem>>, vector<1x8x32xf32>
    %361 = vector.shape_cast %360 : vector<1x8x32xf32> to vector<8x32xf32>
    %362 = vector.shape_cast %358 : vector<8x32xf32> to vector<1x8x32xf32>
    tpu.vector_store %arg24[%c0_269, %c0_270, %c0_271], %362 {strides = array<i32>} : memref<1x8x32xf32, #tpu.memory_space<vmem>>, vector<1x8x32xf32>,
    return
  }
  func.func @transform_0(%arg0: i32, %arg1: i32) -> (i32, i32) {
    %c0_i32 = arith.constant 0 : i32
    %c0_i32_0 = arith.constant 0 : i32
    %c0_i32_1 = arith.constant 0 : i32
    return %c0_i32, %c0_i32_0 : i32, i32
  }
  func.func @transform_1(%arg0: i32, %arg1: i32) -> (i32, i32, i32) {
    %c0_i32 = arith.constant 0 : i32
    %c0_i32_0 = arith.constant 0 : i32
    %c0_i32_1 = arith.constant 0 : i32
    return %arg0, %c0_i32, %c0_i32_0 : i32, i32, i32
  }
  func.func @transform_2(%arg0: i32, %arg1: i32) -> (i32, i32, i32, i32) {
    %c0_i32 = arith.constant 0 : i32
    %c0_i32_0 = arith.constant 0 : i32
    %c0_i32_1 = arith.constant 0 : i32
    %c0_i32_2 = arith.constant 0 : i32
    return %arg1, %c0_i32, %c0_i32_0, %c0_i32_1 : i32, i32, i32, i32
  }
  func.func @transform_3(%arg0: i32, %arg1: i32) -> (i32, i32, i32) {
    %c0_i32 = arith.constant 0 : i32
    %c0_i32_0 = arith.constant 0 : i32
    %c0_i32_1 = arith.constant 0 : i32
    return %arg1, %c0_i32, %c0_i32_0 : i32, i32, i32
  }
  func.func @transform_4(%arg0: i32, %arg1: i32) -> (i32, i32, i32) {
    %c0_i32 = arith.constant 0 : i32
    %c0_i32_0 = arith.constant 0 : i32
    %c0_i32_1 = arith.constant 0 : i32
    return %arg1, %c0_i32, %c0_i32_0 : i32, i32, i32
  }
  func.func @transform_5(%arg0: i32, %arg1: i32) -> (i32, i32, i32) {
    %c0_i32 = arith.constant 0 : i32
    %c0_i32_0 = arith.constant 0 : i32
    %c0_i32_1 = arith.constant 0 : i32
    return %arg1, %c0_i32, %c0_i32_0 : i32, i32, i32
  }
  func.func @transform_6(%arg0: i32, %arg1: i32) -> (i32, i32, i32, i32) {
    %c0_i32 = arith.constant 0 : i32
    %c0_i32_0 = arith.constant 0 : i32
    %c0_i32_1 = arith.constant 0 : i32
    %c0_i32_2 = arith.constant 0 : i32
    return %arg1, %c0_i32, %c0_i32_0, %c0_i32_1 : i32, i32, i32, i32
  }
  func.func @transform_7(%arg0: i32, %arg1: i32) -> (i32, i32, i32, i32) {
    %c0_i32 = arith.constant 0 : i32
    %c0_i32_0 = arith.constant 0 : i32
    %c0_i32_1 = arith.constant 0 : i32
    %c0_i32_2 = arith.constant 0 : i32
    return %arg1, %c0_i32, %c0_i32_0, %c0_i32_1 : i32, i32, i32, i32
  }
  func.func @transform_8(%arg0: i32, %arg1: i32) -> (i32, i32, i32, i32) {
    %c0_i32 = arith.constant 0 : i32
    %c0_i32_0 = arith.constant 0 : i32
    %c0_i32_1 = arith.constant 0 : i32
    %c0_i32_2 = arith.constant 0 : i32
    return %arg1, %c0_i32, %c0_i32_0, %c0_i32_1 : i32, i32, i32, i32
  }
  func.func @transform_9(%arg0: i32, %arg1: i32) -> (i32, i32, i32, i32) {
    %c0_i32 = arith.constant 0 : i32
    %c0_i32_0 = arith.constant 0 : i32
    %c0_i32_1 = arith.constant 0 : i32
    %c0_i32_2 = arith.constant 0 : i32
    return %arg1, %c0_i32, %c0_i32_0, %c0_i32_1 : i32, i32, i32, i32
  }
  func.func @transform_10(%arg0: i32, %arg1: i32) -> (i32, i32, i32, i32) {
    %c0_i32 = arith.constant 0 : i32
    %c0_i32_0 = arith.constant 0 : i32
    %c0_i32_1 = arith.constant 0 : i32
    %c0_i32_2 = arith.constant 0 : i32
    return %arg1, %c0_i32, %c0_i32_0, %c0_i32_1 : i32, i32, i32, i32
  }
  func.func @transform_11(%arg0: i32, %arg1: i32) -> (i32, i32, i32, i32) {
    %c0_i32 = arith.constant 0 : i32
    %c0_i32_0 = arith.constant 0 : i32
    %c0_i32_1 = arith.constant 0 : i32
    %c0_i32_2 = arith.constant 0 : i32
    return %arg1, %c0_i32, %c0_i32_0, %c0_i32_1 : i32, i32, i32, i32
  }
  func.func @transform_12(%arg0: i32, %arg1: i32) -> (i32, i32, i32, i32) {
    %c0_i32 = arith.constant 0 : i32
    %c0_i32_0 = arith.constant 0 : i32
    %c0_i32_1 = arith.constant 0 : i32
    %c0_i32_2 = arith.constant 0 : i32
    return %arg1, %c0_i32, %c0_i32_0, %c0_i32_1 : i32, i32, i32, i32
  }
  func.func @transform_13(%arg0: i32, %arg1: i32) -> (i32, i32, i32) {
    %c0_i32 = arith.constant 0 : i32
    %c0_i32_0 = arith.constant 0 : i32
    %c0_i32_1 = arith.constant 0 : i32
    return %arg1, %c0_i32, %c0_i32_0 : i32, i32, i32
  }
  func.func @transform_14(%arg0: i32, %arg1: i32) -> (i32, i32, i32) {
    %c0_i32 = arith.constant 0 : i32
    %c0_i32_0 = arith.constant 0 : i32
    %c0_i32_1 = arith.constant 0 : i32
    return %arg1, %c0_i32, %c0_i32_0 : i32, i32, i32
  }
  func.func @transform_15(%arg0: i32, %arg1: i32) -> (i32, i32, i32) {
    %c0_i32 = arith.constant 0 : i32
    %c0_i32_0 = arith.constant 0 : i32
    %c0_i32_1 = arith.constant 0 : i32
    return %arg1, %c0_i32, %c0_i32_0 : i32, i32, i32
  }
  func.func @transform_16(%arg0: i32, %arg1: i32) -> (i32, i32, i32) {
    %c0_i32 = arith.constant 0 : i32
    %c0_i32_0 = arith.constant 0 : i32
    %c0_i32_1 = arith.constant 0 : i32
    return %arg1, %c0_i32, %c0_i32_0 : i32, i32, i32
  }
  func.func @transform_17(%arg0: i32, %arg1: i32) -> (i32, i32, i32) {
    %c0_i32 = arith.constant 0 : i32
    %c0_i32_0 = arith.constant 0 : i32
    %c0_i32_1 = arith.constant 0 : i32
    return %arg1, %c0_i32, %c0_i32_0 : i32, i32, i32
  }
  func.func @transform_18(%arg0: i32, %arg1: i32) -> (i32, i32, i32) {
    %c0_i32 = arith.constant 0 : i32
    %c0_i32_0 = arith.constant 0 : i32
    %c0_i32_1 = arith.constant 0 : i32
    return %arg1, %c0_i32, %c0_i32_0 : i32, i32, i32
  }
  func.func @transform_19(%arg0: i32, %arg1: i32) -> (i32, i32, i32) {
    %c0_i32 = arith.constant 0 : i32
    %c0_i32_0 = arith.constant 0 : i32
    %c0_i32_1 = arith.constant 0 : i32
    return %arg1, %c0_i32, %c0_i32_0 : i32, i32, i32
  }
  func.func @transform_20(%arg0: i32, %arg1: i32) -> (i32, i32, i32) {
    %c0_i32 = arith.constant 0 : i32
    %c0_i32_0 = arith.constant 0 : i32
    %c0_i32_1 = arith.constant 0 : i32
    return %arg1, %c0_i32, %c0_i32_0 : i32, i32, i32
  }
  func.func @transform_21(%arg0: i32, %arg1: i32) -> (i32, i32, i32) {
    %c0_i32 = arith.constant 0 : i32
    %c0_i32_0 = arith.constant 0 : i32
    %c0_i32_1 = arith.constant 0 : i32
    return %arg1, %c0_i32, %c0_i32_0 : i32, i32, i32
  }
  func.func @transform_22(%arg0: i32, %arg1: i32) -> (i32, i32, i32) {
    %c0_i32 = arith.constant 0 : i32
    %c0_i32_0 = arith.constant 0 : i32
    %c0_i32_1 = arith.constant 0 : i32
    return %arg0, %c0_i32, %c0_i32_0 : i32, i32, i32
  }
}

</mosaic_0001>

<llo_original>
// kernel: fwd.1
$region0: #{fwd.1}
  #allocation0 [shape = 'u32[]', space=smem, size = 0x4, offset = 0x4, fixed_abs, tag = 'smem constant byte address 0x4 - core index']
  #allocation1 [shape = 'u32[144,128]{1,0:T(1,128)}', space=vmem, size = 0x12000, scoped, tag = 'internal scratch']
  #allocation2 [shape = 'f32[8,32]{1,0:T(8,128)}', space=vmem, size = 0x1000, scoped, tag = 'scratch operand']
  %s0 = inlined_call_operand.hbm [shape: f32[2,16], index: 0, kind: input, shape index: {}]
  %s1 = inlined_call_operand.hbm [shape: f32[2,8,32], index: 1, kind: input, shape index: {}]
  %s2 = inlined_call_operand.hbm [shape: f32[2,16,32,32], index: 2, kind: input, shape index: {}]
  %s3 = inlined_call_operand.hbm [shape: f32[2,32,32], index: 3, kind: input, shape index: {}]
  %s4 = inlined_call_operand.hbm [shape: f32[2,32,32], index: 4, kind: input, shape index: {}]
  %s5 = inlined_call_operand.hbm [shape: f32[2,1,32], index: 5, kind: input, shape index: {}]
  %s6 = inlined_call_operand.hbm [shape: f32[2,4,32,8], index: 6, kind: input, shape index: {}]
  %s7 = inlined_call_operand.hbm [shape: f32[2,4,1,8], index: 7, kind: input, shape index: {}]
  %s8 = inlined_call_operand.hbm [shape: f32[2,4,32,8], index: 8, kind: input, shape index: {}]
  %s9 = inlined_call_operand.vmem [shape: f32[2,4,1,8], index: 9, kind: input, shape index: {}]
  %s10 = inlined_call_operand.hbm [shape: f32[2,4,32,8], index: 10, kind: input, shape index: {}]
  %s11 = inlined_call_operand.vmem [shape: f32[2,4,1,8], index: 11, kind: input, shape index: {}]
  %s12 = inlined_call_operand.hbm [shape: f32[2,4,8,32], index: 12, kind: input, shape index: {}]
  %s13 = inlined_call_operand.hbm [shape: f32[2,1,32], index: 13, kind: input, shape index: {}]
  %s14 = inlined_call_operand.hbm [shape: f32[2,1,32], index: 14, kind: input, shape index: {}]
  %s15 = inlined_call_operand.vmem [shape: f32[2,1,32], index: 15, kind: input, shape index: {}]
  %s16 = inlined_call_operand.hbm [shape: f32[2,32,128], index: 16, kind: input, shape index: {}]
  %s17 = inlined_call_operand.vmem [shape: f32[2,1,128], index: 17, kind: input, shape index: {}]
  %s18 = inlined_call_operand.hbm [shape: f32[2,128,32], index: 18, kind: input, shape index: {}]
  %s19 = inlined_call_operand.vmem [shape: f32[2,1,32], index: 19, kind: input, shape index: {}]
  %s20 = inlined_call_operand.vmem [shape: f32[2,1,32], index: 20, kind: input, shape index: {}]
  %s21 = inlined_call_operand.vmem [shape: f32[2,1,32], index: 21, kind: input, shape index: {}]
  %s22 = inlined_call_operand.hbm [shape: f32[2,8,32], index: 22, kind: output, shape index: {}]
  %s23 = sld [smem:[#allocation0]]
  $region185: #{fwd.1} parent=0
    _
  %s25 = ssub.s32 1, %s23
  %s26 = scalar_select 0, %s25, %s23
  $region1: #{fwd.1} parent=0
    #allocation3 [shape = 'u8[1024]{0}', space=smem, size = 0x400, scoped, tag = 'input window, operand 0, single buffered']
    #allocation4 [shape = 's32[2]{0}', space=sflag, size = 0x8, scoped, tag = 'scoped memory for fwd.1']
    #allocation5 [shape = 's32[2]{0}', space=sflag, size = 0x8, scoped, tag = 'scoped memory for fwd.1']
    #allocation6 [shape = 's32[2]{0}', space=sflag, size = 0x8, scoped, tag = 'scoped memory for fwd.1']
    #allocation7 [shape = 'u8[8192]{0}', space=vmem, size = 0x2000, scoped, tag = 'input window, operand 1']
    #allocation8 [shape = 'u8[524288]{0}', space=vmem, size = 0x80000, scoped, tag = 'input window, operand 2']
    #allocation9 [shape = 's32[2]{0}', space=sflag, size = 0x8, scoped, tag = 'scoped memory for fwd.1']
    #allocation10 [shape = 'u8[32768]{0}', space=vmem, size = 0x8000, scoped, tag = 'input window, operand 3']
    #allocation11 [shape = 'u8[32768]{0}', space=vmem, size = 0x8000, scoped, tag = 'input window, operand 4']
    #allocation12 [shape = 's32[2]{0}', space=sflag, size = 0x8, scoped, tag = 'scoped memory for fwd.1']
    #allocation13 [shape = 'u8[1024]{0}', space=vmem, size = 0x400, scoped, tag = 'input window, operand 5']
    #allocation14 [shape = 'u8[131072]{0}', space=vmem, size = 0x20000, scoped, tag = 'input window, operand 6']
    #allocation15 [shape = 's32[2]{0}', space=sflag, size = 0x8, scoped, tag = 'scoped memory for fwd.1']
    #allocation16 [shape = 'u8[4096]{0}', space=vmem, size = 0x1000, scoped, tag = 'input window, operand 7']
    #allocation17 [shape = 'u8[131072]{0}', space=vmem, size = 0x20000, scoped, tag = 'input window, operand 8']
    #allocation18 [shape = 's32[2]{0}', space=sflag, size = 0x8, scoped, tag = 'scoped memory for fwd.1']
    #allocation19 [shape = 'u8[131072]{0}', space=vmem, size = 0x20000, scoped, tag = 'input window, operand 10']
    #allocation20 [shape = 'u8[32768]{0}', space=vmem, size = 0x8000, scoped, tag = 'input window, operand 12']
    #allocation21 [shape = 's32[2]{0}', space=sflag, size = 0x8, scoped, tag = 'scoped memory for fwd.1']
    #allocation22 [shape = 'u8[1024]{0}', space=vmem, size = 0x400, scoped, tag = 'input window, operand 13']
    #allocation23 [shape = 'u8[1024]{0}', space=vmem, size = 0x400, scoped, tag = 'input window, operand 14']
    #allocation24 [shape = 's32[2]{0}', space=sflag, size = 0x8, scoped, tag = 'scoped memory for fwd.1']
    #allocation25 [shape = 'u8[32768]{0}', space=vmem, size = 0x8000, scoped, tag = 'input window, operand 16']
    #allocation26 [shape = 'u8[131072]{0}', space=vmem, size = 0x20000, scoped, tag = 'input window, operand 18']
    #allocation27 [shape = 's32[2]{0}', space=sflag, size = 0x8, scoped, tag = 'scoped memory for fwd.1']
    #allocation28 [shape = 'u8[8192]{0}', space=vmem, size = 0x2000, scoped, tag = 'output window, operand 0']
    %27 = vsyncpa [#allocation6], 0
    %28 = vsyncpa [#allocation4], 0
    %s29 = scalar_lea.sflag [#allocation4], 1
    %30 = vsyncpa %s29, 0
    %31 = vsyncpa [#allocation9], 0
    %s32 = scalar_lea.sflag [#allocation9], 1
    %33 = vsyncpa %s32, 0
    %34 = vsyncpa [#allocation12], 0
    %s35 = scalar_lea.sflag [#allocation12], 1
    %36 = vsyncpa %s35, 0
    %37 = vsyncpa [#allocation15], 0
    %s38 = scalar_lea.sflag [#allocation15], 1
    %39 = vsyncpa %s38, 0
    %40 = vsyncpa [#allocation18], 0
    %s41 = scalar_lea.sflag [#allocation18], 1
    %42 = vsyncpa %s41, 0
    %43 = vsyncpa [#allocation21], 0
    %s44 = scalar_lea.sflag [#allocation21], 1
    %45 = vsyncpa %s44, 0
    %46 = vsyncpa [#allocation24], 0
    %s47 = scalar_lea.sflag [#allocation24], 1
    %48 = vsyncpa %s47, 0
    %49 = vsyncpa [#allocation27], 0
    %s50 = scalar_lea.sflag [#allocation27], 1
    %51 = vsyncpa %s50, 0
    %52 = vsyncpa [#allocation5], 0
    %s53 = scalar_lea.sflag [#allocation5], 1
    %54 = vsyncpa %s53, 0
    loop: start=0, step=1, limit=6
    $region2: #{fwd.1} parent=1 // loop_pre_header
      _
    $region3: #{fwd.1} parent=1 // loop_header
      %s56 = sphi 0, %s60
      %p57 = scmp.ge.s32.totalorder %s56, 6
      %s63 = sphi 0, %s75
      %s64 = sphi 0, %s71
      %s65 = sphi 0, %s63
      %s66 = sphi 0, %s64
      %s67 = sphi 0, %s65
      %s68 = sphi 0, %s66
      %s76 = sphi 0, %s76
      %s78 = sphi 0, %s76
      %s79 = sphi 0, %s78
      %s93 = sphi 0, %s79
      %s99 = sphi 0, %s101
      %s102 = sphi 0, %s99
      %s103 = sphi 0, %s102
      %s119 = sphi 0, %s103
      %s125 = sphi 0, %s127
      %s128 = sphi 0, %s125
      %s129 = sphi 0, %s128
      %s145 = sphi 0, %s129
      %s151 = sphi 0, %s153
      %s154 = sphi 0, %s151
      %s155 = sphi 0, %s154
      %s171 = sphi 0, %s155
      %s177 = sphi 0, %s179
      %s180 = sphi 0, %s177
      %s181 = sphi 0, %s180
      %s197 = sphi 0, %s181
      %s203 = sphi 0, %s205
      %s206 = sphi 0, %s203
      %s207 = sphi 0, %s206
      %s223 = sphi 0, %s207
      %s229 = sphi 0, %s231
      %s232 = sphi 0, %s229
      %s233 = sphi 0, %s232
      %s249 = sphi 0, %s233
      %s255 = sphi 0, %s257
      %s258 = sphi 0, %s255
      %s259 = sphi 0, %s258
      %s275 = sphi 0, %s259
      %s281 = sphi 0, %s283
      %s284 = sphi 0, %s281
      %s285 = sphi 0, %s284
      %s301 = sphi 0, %s285
      %s307 = sphi 0, %s309
      %s310 = sphi 0, %s307
      %s311 = sphi 0, %s310
      %s327 = sphi 0, %s311
      %s333 = sphi 0, %s335
      %s336 = sphi 0, %s333
      %s337 = sphi 0, %s336
      %s353 = sphi 0, %s337
      %s359 = sphi 0, %s361
      %s362 = sphi 0, %s359
      %s363 = sphi 0, %s362
      %s379 = sphi 0, %s363
      %s385 = sphi 0, %s387
      %s388 = sphi 0, %s385
      %s389 = sphi 0, %s388
      %s405 = sphi 0, %s389
      %s411 = sphi 0, %s413
      %s414 = sphi 0, %s411
      %s415 = sphi 0, %s414
      %s431 = sphi 0, %s415
      %s437 = sphi 0, %s439
      %s440 = sphi 0, %s437
      %s441 = sphi 0, %s440
      %s457 = sphi 0, %s441
      %s463 = sphi 0, %s465
      %s466 = sphi 0, %s463
      %s467 = sphi 0, %s466
      %s483 = sphi 0, %s467
      %s489 = sphi 0, %s491
      %s492 = sphi 0, %s489
      %s493 = sphi 0, %s492
      %s509 = sphi 0, %s493
      %s515 = sphi 0, %s517
      %s518 = sphi 0, %s515
      %s519 = sphi 0, %s518
      %s535 = sphi 0, %s519
      %s541 = sphi 0, %s543
      %s544 = sphi 0, %s541
      %s545 = sphi 0, %s544
      %s561 = sphi 0, %s545
      %s567 = sphi 0, %s569
      %s570 = sphi 0, %s567
      %s571 = sphi 0, %s570
      %s587 = sphi 0, %s571
      %s593 = sphi 0, %s595
      %s596 = sphi 0, %s593
      %s597 = sphi 0, %s596
      %s613 = sphi 0, %s597
      %s619 = sphi 0, %s621
      %s622 = sphi 0, %s619
      %s623 = sphi 0, %s622
      %s639 = sphi 0, %s623
      %s645 = sphi 0, %s647
      %s648 = sphi 0, %s645
      %s649 = sphi 0, %s648
      %s665 = sphi 0, %s649
    $region4: #{fwd.1} parent=1 // loop_header_branch
      %59 = sbr.rel (%p57) target = $region8
    $region5: #{fwd.1} parent=1 // loop_body
      %s61 = ssub.s32 %s56, 1
      %s62 = ssub.s32 %s56, 2
      %s69 = sadd.s32 1, %s64
      %p70 = scmp.ge.s32.totalorder %s69, 2
      %s71 = scalar_select %p70, 0, %s69
      %s72 = sadd.s32 1, %s63
      %s73 = scalar_select %p70, %s72, %s63
      %p74 = scmp.ge.s32.totalorder %s73, 2
      %s75 = scalar_select %p74, 0, %s73
      %s77 = sadd.s32 %s76, 1
      %p80 = scmp.eq.s32.totalorder %s56, 3
      %p81 = scmp.ne.s32.totalorder %s76, %s78
      %p82 = scmp.eq.s32.totalorder %s56, 0
      %p83 = por %p81, %p82
      %p84 = scmp.ne.s32.totalorder %s76, %s78
      %p85 = scmp.eq.s32.totalorder %s61, 3
      %p86 = por %p84, %p85
      %p87 = scmp.ne.s32.totalorder %s78, %s79
      %p88 = scmp.eq.s32.totalorder %s61, 0
      %p89 = por %p87, %p88
      %p90 = scmp.ne.s32.totalorder %s78, %s79
      %p91 = scmp.eq.s32.totalorder %s62, 3
      %p92 = por %p90, %p91
      %p94 = scmp.ne.s32.totalorder %s79, %s93
      %p95 = scmp.eq.s32.totalorder %s62, 0
      %p96 = por %p94, %p95
      %s97 = ssub.s32 %s63, %s75
      %p98 = scmp.eq.s32.totalorder %s97, 0
      %s100 = sadd.s32 %s99, 1
      %s101 = scalar_select %p98, %s99, %s100
      %p104 = pneg %p98
      %p105 = scmp.eq.s32.totalorder %s56, 3
      %p106 = por %p104, %p105
      %p107 = scmp.ne.s32.totalorder %s99, %s102
      %p108 = scmp.eq.s32.totalorder %s56, 0
      %p109 = por %p107, %p108
      %p110 = scmp.ne.s32.totalorder %s99, %s102
      %p111 = scmp.eq.s32.totalorder %s61, 3
      %p112 = por %p110, %p111
      %p113 = scmp.ne.s32.totalorder %s102, %s103
      %p114 = scmp.eq.s32.totalorder %s61, 0
      %p115 = por %p113, %p114
      %p116 = scmp.ne.s32.totalorder %s102, %s103
      %p117 = scmp.eq.s32.totalorder %s62, 3
      %p118 = por %p116, %p117
      %p120 = scmp.ne.s32.totalorder %s103, %s119
      %p121 = scmp.eq.s32.totalorder %s62, 0
      %p122 = por %p120, %p121
      %s123 = ssub.s32 %s64, %s71
      %p124 = scmp.eq.s32.totalorder %s123, 0
      %s126 = sadd.s32 %s125, 1
      %s127 = scalar_select %p124, %s125, %s126
      %p130 = pneg %p124
      %p131 = scmp.eq.s32.totalorder %s56, 3
      %p132 = por %p130, %p131
      %p133 = scmp.ne.s32.totalorder %s125, %s128
      %p134 = scmp.eq.s32.totalorder %s56, 0
      %p135 = por %p133, %p134
      %p136 = scmp.ne.s32.totalorder %s125, %s128
      %p137 = scmp.eq.s32.totalorder %s61, 3
      %p138 = por %p136, %p137
      %p139 = scmp.ne.s32.totalorder %s128, %s129
      %p140 = scmp.eq.s32.totalorder %s61, 0
      %p141 = por %p139, %p140
      %p142 = scmp.ne.s32.totalorder %s128, %s129
      %p143 = scmp.eq.s32.totalorder %s62, 3
      %p144 = por %p142, %p143
      %p146 = scmp.ne.s32.totalorder %s129, %s145
      %p147 = scmp.eq.s32.totalorder %s62, 0
      %p148 = por %p146, %p147
      %s149 = ssub.s32 %s64, %s71
      %p150 = scmp.eq.s32.totalorder %s149, 0
      %s152 = sadd.s32 %s151, 1
      %s153 = scalar_select %p150, %s151, %s152
      %p156 = pneg %p150
      %p157 = scmp.eq.s32.totalorder %s56, 3
      %p158 = por %p156, %p157
      %p159 = scmp.ne.s32.totalorder %s151, %s154
      %p160 = scmp.eq.s32.totalorder %s56, 0
      %p161 = por %p159, %p160
      %p162 = scmp.ne.s32.totalorder %s151, %s154
      %p163 = scmp.eq.s32.totalorder %s61, 3
      %p164 = por %p162, %p163
      %p165 = scmp.ne.s32.totalorder %s154, %s155
      %p166 = scmp.eq.s32.totalorder %s61, 0
      %p167 = por %p165, %p166
      %p168 = scmp.ne.s32.totalorder %s154, %s155
      %p169 = scmp.eq.s32.totalorder %s62, 3
      %p170 = por %p168, %p169
      %p172 = scmp.ne.s32.totalorder %s155, %s171
      %p173 = scmp.eq.s32.totalorder %s62, 0
      %p174 = por %p172, %p173
      %s175 = ssub.s32 %s64, %s71
      %p176 = scmp.eq.s32.totalorder %s175, 0
      %s178 = sadd.s32 %s177, 1
      %s179 = scalar_select %p176, %s177, %s178
      %p182 = pneg %p176
      %p183 = scmp.eq.s32.totalorder %s56, 3
      %p184 = por %p182, %p183
      %p185 = scmp.ne.s32.totalorder %s177, %s180
      %p186 = scmp.eq.s32.totalorder %s56, 0
      %p187 = por %p185, %p186
      %p188 = scmp.ne.s32.totalorder %s177, %s180
      %p189 = scmp.eq.s32.totalorder %s61, 3
      %p190 = por %p188, %p189
      %p191 = scmp.ne.s32.totalorder %s180, %s181
      %p192 = scmp.eq.s32.totalorder %s61, 0
      %p193 = por %p191, %p192
      %p194 = scmp.ne.s32.totalorder %s180, %s181
      %p195 = scmp.eq.s32.totalorder %s62, 3
      %p196 = por %p194, %p195
      %p198 = scmp.ne.s32.totalorder %s181, %s197
      %p199 = scmp.eq.s32.totalorder %s62, 0
      %p200 = por %p198, %p199
      %s201 = ssub.s32 %s64, %s71
      %p202 = scmp.eq.s32.totalorder %s201, 0
      %s204 = sadd.s32 %s203, 1
      %s205 = scalar_select %p202, %s203, %s204
      %p208 = pneg %p202
      %p209 = scmp.eq.s32.totalorder %s56, 3
      %p210 = por %p208, %p209
      %p211 = scmp.ne.s32.totalorder %s203, %s206
      %p212 = scmp.eq.s32.totalorder %s56, 0
      %p213 = por %p211, %p212
      %p214 = scmp.ne.s32.totalorder %s203, %s206
      %p215 = scmp.eq.s32.totalorder %s61, 3
      %p216 = por %p214, %p215
      %p217 = scmp.ne.s32.totalorder %s206, %s207
      %p218 = scmp.eq.s32.totalorder %s61, 0
      %p219 = por %p217, %p218
      %p220 = scmp.ne.s32.totalorder %s206, %s207
      %p221 = scmp.eq.s32.totalorder %s62, 3
      %p222 = por %p220, %p221
      %p224 = scmp.ne.s32.totalorder %s207, %s223
      %p225 = scmp.eq.s32.totalorder %s62, 0
      %p226 = por %p224, %p225
      %s227 = ssub.s32 %s64, %s71
      %p228 = scmp.eq.s32.totalorder %s227, 0
      %s230 = sadd.s32 %s229, 1
      %s231 = scalar_select %p228, %s229, %s230
      %p234 = pneg %p228
      %p235 = scmp.eq.s32.totalorder %s56, 3
      %p236 = por %p234, %p235
      %p237 = scmp.ne.s32.totalorder %s229, %s232
      %p238 = scmp.eq.s32.totalorder %s56, 0
      %p239 = por %p237, %p238
      %p240 = scmp.ne.s32.totalorder %s229, %s232
      %p241 = scmp.eq.s32.totalorder %s61, 3
      %p242 = por %p240, %p241
      %p243 = scmp.ne.s32.totalorder %s232, %s233
      %p244 = scmp.eq.s32.totalorder %s61, 0
      %p245 = por %p243, %p244
      %p246 = scmp.ne.s32.totalorder %s232, %s233
      %p247 = scmp.eq.s32.totalorder %s62, 3
      %p248 = por %p246, %p247
      %p250 = scmp.ne.s32.totalorder %s233, %s249
      %p251 = scmp.eq.s32.totalorder %s62, 0
      %p252 = por %p250, %p251
      %s253 = ssub.s32 %s64, %s71
      %p254 = scmp.eq.s32.totalorder %s253, 0
      %s256 = sadd.s32 %s255, 1
      %s257 = scalar_select %p254, %s255, %s256
      %p260 = pneg %p254
      %p261 = scmp.eq.s32.totalorder %s56, 3
      %p262 = por %p260, %p261
      %p263 = scmp.ne.s32.totalorder %s255, %s258
      %p264 = scmp.eq.s32.totalorder %s56, 0
      %p265 = por %p263, %p264
      %p266 = scmp.ne.s32.totalorder %s255, %s258
      %p267 = scmp.eq.s32.totalorder %s61, 3
      %p268 = por %p266, %p267
      %p269 = scmp.ne.s32.totalorder %s258, %s259
      %p270 = scmp.eq.s32.totalorder %s61, 0
      %p271 = por %p269, %p270
      %p272 = scmp.ne.s32.totalorder %s258, %s259
      %p273 = scmp.eq.s32.totalorder %s62, 3
      %p274 = por %p272, %p273
      %p276 = scmp.ne.s32.totalorder %s259, %s275
      %p277 = scmp.eq.s32.totalorder %s62, 0
      %p278 = por %p276, %p277
      %s279 = ssub.s32 %s64, %s71
      %p280 = scmp.eq.s32.totalorder %s279, 0
      %s282 = sadd.s32 %s281, 1
      %s283 = scalar_select %p280, %s281, %s282
      %p286 = pneg %p280
      %p287 = scmp.eq.s32.totalorder %s56, 3
      %p288 = por %p286, %p287
      %p289 = scmp.ne.s32.totalorder %s281, %s284
      %p290 = scmp.eq.s32.totalorder %s56, 0
      %p291 = por %p289, %p290
      %p292 = scmp.ne.s32.totalorder %s281, %s284
      %p293 = scmp.eq.s32.totalorder %s61, 3
      %p294 = por %p292, %p293
      %p295 = scmp.ne.s32.totalorder %s284, %s285
      %p296 = scmp.eq.s32.totalorder %s61, 0
      %p297 = por %p295, %p296
      %p298 = scmp.ne.s32.totalorder %s284, %s285
      %p299 = scmp.eq.s32.totalorder %s62, 3
      %p300 = por %p298, %p299
      %p302 = scmp.ne.s32.totalorder %s285, %s301
      %p303 = scmp.eq.s32.totalorder %s62, 0
      %p304 = por %p302, %p303
      %s305 = ssub.s32 %s64, %s71
      %p306 = scmp.eq.s32.totalorder %s305, 0
      %s308 = sadd.s32 %s307, 1
      %s309 = scalar_select %p306, %s307, %s308
      %p312 = pneg %p306
      %p313 = scmp.eq.s32.totalorder %s56, 3
      %p314 = por %p312, %p313
      %p315 = scmp.ne.s32.totalorder %s307, %s310
      %p316 = scmp.eq.s32.totalorder %s56, 0
      %p317 = por %p315, %p316
      %p318 = scmp.ne.s32.totalorder %s307, %s310
      %p319 = scmp.eq.s32.totalorder %s61, 3
      %p320 = por %p318, %p319
      %p321 = scmp.ne.s32.totalorder %s310, %s311
      %p322 = scmp.eq.s32.totalorder %s61, 0
      %p323 = por %p321, %p322
      %p324 = scmp.ne.s32.totalorder %s310, %s311
      %p325 = scmp.eq.s32.totalorder %s62, 3
      %p326 = por %p324, %p325
      %p328 = scmp.ne.s32.totalorder %s311, %s327
      %p329 = scmp.eq.s32.totalorder %s62, 0
      %p330 = por %p328, %p329
      %s331 = ssub.s32 %s64, %s71
      %p332 = scmp.eq.s32.totalorder %s331, 0
      %s334 = sadd.s32 %s333, 1
      %s335 = scalar_select %p332, %s333, %s334
      %p338 = pneg %p332
      %p339 = scmp.eq.s32.totalorder %s56, 3
      %p340 = por %p338, %p339
      %p341 = scmp.ne.s32.totalorder %s333, %s336
      %p342 = scmp.eq.s32.totalorder %s56, 0
      %p343 = por %p341, %p342
      %p344 = scmp.ne.s32.totalorder %s333, %s336
      %p345 = scmp.eq.s32.totalorder %s61, 3
      %p346 = por %p344, %p345
      %p347 = scmp.ne.s32.totalorder %s336, %s337
      %p348 = scmp.eq.s32.totalorder %s61, 0
      %p349 = por %p347, %p348
      %p350 = scmp.ne.s32.totalorder %s336, %s337
      %p351 = scmp.eq.s32.totalorder %s62, 3
      %p352 = por %p350, %p351
      %p354 = scmp.ne.s32.totalorder %s337, %s353
      %p355 = scmp.eq.s32.totalorder %s62, 0
      %p356 = por %p354, %p355
      %s357 = ssub.s32 %s64, %s71
      %p358 = scmp.eq.s32.totalorder %s357, 0
      %s360 = sadd.s32 %s359, 1
      %s361 = scalar_select %p358, %s359, %s360
      %p364 = pneg %p358
      %p365 = scmp.eq.s32.totalorder %s56, 3
      %p366 = por %p364, %p365
      %p367 = scmp.ne.s32.totalorder %s359, %s362
      %p368 = scmp.eq.s32.totalorder %s56, 0
      %p369 = por %p367, %p368
      %p370 = scmp.ne.s32.totalorder %s359, %s362
      %p371 = scmp.eq.s32.totalorder %s61, 3
      %p372 = por %p370, %p371
      %p373 = scmp.ne.s32.totalorder %s362, %s363
      %p374 = scmp.eq.s32.totalorder %s61, 0
      %p375 = por %p373, %p374
      %p376 = scmp.ne.s32.totalorder %s362, %s363
      %p377 = scmp.eq.s32.totalorder %s62, 3
      %p378 = por %p376, %p377
      %p380 = scmp.ne.s32.totalorder %s363, %s379
      %p381 = scmp.eq.s32.totalorder %s62, 0
      %p382 = por %p380, %p381
      %s383 = ssub.s32 %s64, %s71
      %p384 = scmp.eq.s32.totalorder %s383, 0
      %s386 = sadd.s32 %s385, 1
      %s387 = scalar_select %p384, %s385, %s386
      %p390 = pneg %p384
      %p391 = scmp.eq.s32.totalorder %s56, 3
      %p392 = por %p390, %p391
      %p393 = scmp.ne.s32.totalorder %s385, %s388
      %p394 = scmp.eq.s32.totalorder %s56, 0
      %p395 = por %p393, %p394
      %p396 = scmp.ne.s32.totalorder %s385, %s388
      %p397 = scmp.eq.s32.totalorder %s61, 3
      %p398 = por %p396, %p397
      %p399 = scmp.ne.s32.totalorder %s388, %s389
      %p400 = scmp.eq.s32.totalorder %s61, 0
      %p401 = por %p399, %p400
      %p402 = scmp.ne.s32.totalorder %s388, %s389
      %p403 = scmp.eq.s32.totalorder %s62, 3
      %p404 = por %p402, %p403
      %p406 = scmp.ne.s32.totalorder %s389, %s405
      %p407 = scmp.eq.s32.totalorder %s62, 0
      %p408 = por %p406, %p407
      %s409 = ssub.s32 %s64, %s71
      %p410 = scmp.eq.s32.totalorder %s409, 0
      %s412 = sadd.s32 %s411, 1
      %s413 = scalar_select %p410, %s411, %s412
      %p416 = pneg %p410
      %p417 = scmp.eq.s32.totalorder %s56, 3
      %p418 = por %p416, %p417
      %p419 = scmp.ne.s32.totalorder %s411, %s414
      %p420 = scmp.eq.s32.totalorder %s56, 0
      %p421 = por %p419, %p420
      %p422 = scmp.ne.s32.totalorder %s411, %s414
      %p423 = scmp.eq.s32.totalorder %s61, 3
      %p424 = por %p422, %p423
      %p425 = scmp.ne.s32.totalorder %s414, %s415
      %p426 = scmp.eq.s32.totalorder %s61, 0
      %p427 = por %p425, %p426
      %p428 = scmp.ne.s32.totalorder %s414, %s415
      %p429 = scmp.eq.s32.totalorder %s62, 3
      %p430 = por %p428, %p429
      %p432 = scmp.ne.s32.totalorder %s415, %s431
      %p433 = scmp.eq.s32.totalorder %s62, 0
      %p434 = por %p432, %p433
      %s435 = ssub.s32 %s64, %s71
      %p436 = scmp.eq.s32.totalorder %s435, 0
      %s438 = sadd.s32 %s437, 1
      %s439 = scalar_select %p436, %s437, %s438
      %p442 = pneg %p436
      %p443 = scmp.eq.s32.totalorder %s56, 3
      %p444 = por %p442, %p443
      %p445 = scmp.ne.s32.totalorder %s437, %s440
      %p446 = scmp.eq.s32.totalorder %s56, 0
      %p447 = por %p445, %p446
      %p448 = scmp.ne.s32.totalorder %s437, %s440
      %p449 = scmp.eq.s32.totalorder %s61, 3
      %p450 = por %p448, %p449
      %p451 = scmp.ne.s32.totalorder %s440, %s441
      %p452 = scmp.eq.s32.totalorder %s61, 0
      %p453 = por %p451, %p452
      %p454 = scmp.ne.s32.totalorder %s440, %s441
      %p455 = scmp.eq.s32.totalorder %s62, 3
      %p456 = por %p454, %p455
      %p458 = scmp.ne.s32.totalorder %s441, %s457
      %p459 = scmp.eq.s32.totalorder %s62, 0
      %p460 = por %p458, %p459
      %s461 = ssub.s32 %s64, %s71
      %p462 = scmp.eq.s32.totalorder %s461, 0
      %s464 = sadd.s32 %s463, 1
      %s465 = scalar_select %p462, %s463, %s464
      %p468 = pneg %p462
      %p469 = scmp.eq.s32.totalorder %s56, 3
      %p470 = por %p468, %p469
      %p471 = scmp.ne.s32.totalorder %s463, %s466
      %p472 = scmp.eq.s32.totalorder %s56, 0
      %p473 = por %p471, %p472
      %p474 = scmp.ne.s32.totalorder %s463, %s466
      %p475 = scmp.eq.s32.totalorder %s61, 3
      %p476 = por %p474, %p475
      %p477 = scmp.ne.s32.totalorder %s466, %s467
      %p478 = scmp.eq.s32.totalorder %s61, 0
      %p479 = por %p477, %p478
      %p480 = scmp.ne.s32.totalorder %s466, %s467
      %p481 = scmp.eq.s32.totalorder %s62, 3
      %p482 = por %p480, %p481
      %p484 = scmp.ne.s32.totalorder %s467, %s483
      %p485 = scmp.eq.s32.totalorder %s62, 0
      %p486 = por %p484, %p485
      %s487 = ssub.s32 %s64, %s71
      %p488 = scmp.eq.s32.totalorder %s487, 0
      %s490 = sadd.s32 %s489, 1
      %s491 = scalar_select %p488, %s489, %s490
      %p494 = pneg %p488
      %p495 = scmp.eq.s32.totalorder %s56, 3
      %p496 = por %p494, %p495
      %p497 = scmp.ne.s32.totalorder %s489, %s492
      %p498 = scmp.eq.s32.totalorder %s56, 0
      %p499 = por %p497, %p498
      %p500 = scmp.ne.s32.totalorder %s489, %s492
      %p501 = scmp.eq.s32.totalorder %s61, 3
      %p502 = por %p500, %p501
      %p503 = scmp.ne.s32.totalorder %s492, %s493
      %p504 = scmp.eq.s32.totalorder %s61, 0
      %p505 = por %p503, %p504
      %p506 = scmp.ne.s32.totalorder %s492, %s493
      %p507 = scmp.eq.s32.totalorder %s62, 3
      %p508 = por %p506, %p507
      %p510 = scmp.ne.s32.totalorder %s493, %s509
      %p511 = scmp.eq.s32.totalorder %s62, 0
      %p512 = por %p510, %p511
      %s513 = ssub.s32 %s64, %s71
      %p514 = scmp.eq.s32.totalorder %s513, 0
      %s516 = sadd.s32 %s515, 1
      %s517 = scalar_select %p514, %s515, %s516
      %p520 = pneg %p514
      %p521 = scmp.eq.s32.totalorder %s56, 3
      %p522 = por %p520, %p521
      %p523 = scmp.ne.s32.totalorder %s515, %s518
      %p524 = scmp.eq.s32.totalorder %s56, 0
      %p525 = por %p523, %p524
      %p526 = scmp.ne.s32.totalorder %s515, %s518
      %p527 = scmp.eq.s32.totalorder %s61, 3
      %p528 = por %p526, %p527
      %p529 = scmp.ne.s32.totalorder %s518, %s519
      %p530 = scmp.eq.s32.totalorder %s61, 0
      %p531 = por %p529, %p530
      %p532 = scmp.ne.s32.totalorder %s518, %s519
      %p533 = scmp.eq.s32.totalorder %s62, 3
      %p534 = por %p532, %p533
      %p536 = scmp.ne.s32.totalorder %s519, %s535
      %p537 = scmp.eq.s32.totalorder %s62, 0
      %p538 = por %p536, %p537
      %s539 = ssub.s32 %s64, %s71
      %p540 = scmp.eq.s32.totalorder %s539, 0
      %s542 = sadd.s32 %s541, 1
      %s543 = scalar_select %p540, %s541, %s542
      %p546 = pneg %p540
      %p547 = scmp.eq.s32.totalorder %s56, 3
      %p548 = por %p546, %p547
      %p549 = scmp.ne.s32.totalorder %s541, %s544
      %p550 = scmp.eq.s32.totalorder %s56, 0
      %p551 = por %p549, %p550
      %p552 = scmp.ne.s32.totalorder %s541, %s544
      %p553 = scmp.eq.s32.totalorder %s61, 3
      %p554 = por %p552, %p553
      %p555 = scmp.ne.s32.totalorder %s544, %s545
      %p556 = scmp.eq.s32.totalorder %s61, 0
      %p557 = por %p555, %p556
      %p558 = scmp.ne.s32.totalorder %s544, %s545
      %p559 = scmp.eq.s32.totalorder %s62, 3
      %p560 = por %p558, %p559
      %p562 = scmp.ne.s32.totalorder %s545, %s561
      %p563 = scmp.eq.s32.totalorder %s62, 0
      %p564 = por %p562, %p563
      %s565 = ssub.s32 %s64, %s71
      %p566 = scmp.eq.s32.totalorder %s565, 0
      %s568 = sadd.s32 %s567, 1
      %s569 = scalar_select %p566, %s567, %s568
      %p572 = pneg %p566
      %p573 = scmp.eq.s32.totalorder %s56, 3
      %p574 = por %p572, %p573
      %p575 = scmp.ne.s32.totalorder %s567, %s570
      %p576 = scmp.eq.s32.totalorder %s56, 0
      %p577 = por %p575, %p576
      %p578 = scmp.ne.s32.totalorder %s567, %s570
      %p579 = scmp.eq.s32.totalorder %s61, 3
      %p580 = por %p578, %p579
      %p581 = scmp.ne.s32.totalorder %s570, %s571
      %p582 = scmp.eq.s32.totalorder %s61, 0
      %p583 = por %p581, %p582
      %p584 = scmp.ne.s32.totalorder %s570, %s571
      %p585 = scmp.eq.s32.totalorder %s62, 3
      %p586 = por %p584, %p585
      %p588 = scmp.ne.s32.totalorder %s571, %s587
      %p589 = scmp.eq.s32.totalorder %s62, 0
      %p590 = por %p588, %p589
      %s591 = ssub.s32 %s64, %s71
      %p592 = scmp.eq.s32.totalorder %s591, 0
      %s594 = sadd.s32 %s593, 1
      %s595 = scalar_select %p592, %s593, %s594
      %p598 = pneg %p592
      %p599 = scmp.eq.s32.totalorder %s56, 3
      %p600 = por %p598, %p599
      %p601 = scmp.ne.s32.totalorder %s593, %s596
      %p602 = scmp.eq.s32.totalorder %s56, 0
      %p603 = por %p601, %p602
      %p604 = scmp.ne.s32.totalorder %s593, %s596
      %p605 = scmp.eq.s32.totalorder %s61, 3
      %p606 = por %p604, %p605
      %p607 = scmp.ne.s32.totalorder %s596, %s597
      %p608 = scmp.eq.s32.totalorder %s61, 0
      %p609 = por %p607, %p608
      %p610 = scmp.ne.s32.totalorder %s596, %s597
      %p611 = scmp.eq.s32.totalorder %s62, 3
      %p612 = por %p610, %p611
      %p614 = scmp.ne.s32.totalorder %s597, %s613
      %p615 = scmp.eq.s32.totalorder %s62, 0
      %p616 = por %p614, %p615
      %s617 = ssub.s32 %s64, %s71
      %p618 = scmp.eq.s32.totalorder %s617, 0
      %s620 = sadd.s32 %s619, 1
      %s621 = scalar_select %p618, %s619, %s620
      %p624 = pneg %p618
      %p625 = scmp.eq.s32.totalorder %s56, 3
      %p626 = por %p624, %p625
      %p627 = scmp.ne.s32.totalorder %s619, %s622
      %p628 = scmp.eq.s32.totalorder %s56, 0
      %p629 = por %p627, %p628
      %p630 = scmp.ne.s32.totalorder %s619, %s622
      %p631 = scmp.eq.s32.totalorder %s61, 3
      %p632 = por %p630, %p631
      %p633 = scmp.ne.s32.totalorder %s622, %s623
      %p634 = scmp.eq.s32.totalorder %s61, 0
      %p635 = por %p633, %p634
      %p636 = scmp.ne.s32.totalorder %s622, %s623
      %p637 = scmp.eq.s32.totalorder %s62, 3
      %p638 = por %p636, %p637
      %p640 = scmp.ne.s32.totalorder %s623, %s639
      %p641 = scmp.eq.s32.totalorder %s62, 0
      %p642 = por %p640, %p641
      %s643 = ssub.s32 %s63, %s75
      %p644 = scmp.eq.s32.totalorder %s643, 0
      %s646 = sadd.s32 %s645, 1
      %s647 = scalar_select %p644, %s645, %s646
      %p650 = pneg %p644
      %p651 = scmp.eq.s32.totalorder %s56, 3
      %p652 = por %p650, %p651
      %p653 = scmp.ne.s32.totalorder %s645, %s648
      %p654 = scmp.eq.s32.totalorder %s56, 0
      %p655 = por %p653, %p654
      %p656 = scmp.ne.s32.totalorder %s645, %s648
      %p657 = scmp.eq.s32.totalorder %s61, 3
      %p658 = por %p656, %p657
      %p659 = scmp.ne.s32.totalorder %s648, %s649
      %p660 = scmp.eq.s32.totalorder %s61, 0
      %p661 = por %p659, %p660
      %p662 = scmp.ne.s32.totalorder %s648, %s649
      %p663 = scmp.eq.s32.totalorder %s62, 3
      %p664 = por %p662, %p663
      %p666 = scmp.ne.s32.totalorder %s649, %s665
      %p667 = scmp.eq.s32.totalorder %s62, 0
      %p668 = por %p666, %p667
      %p669 = scmp.le.s32.totalorder 1, %s56
      %p670 = scmp.lt.s32.totalorder %s56, 5
      %p671 = pnand %p669, %p670
      %p672 = pneg %p671
      // Predicated region
      $region9: #{fwd.1} parent=5 // pred_check
        _
      $region10: #{fwd.1} parent=5 // pred_check_branch
        %674 = sbr.rel (%p671) target = $region12
      $region11: #{fwd.1} parent=5 // pred_region
        %s675 = ssub.s32 %s56, 1
        // Predicated region
        $region13: #{fwd.1} parent=11 // pred_check
          %p676 = pneg %p89
        $region14: #{fwd.1} parent=11 // pred_check_branch
          %678 = sbr.rel (%p676) target = $region16
        $region15: #{fwd.1} parent=11 // pred_region
          %s680 = ssub.s32 32, 32
          %681 = vsyncadd [#allocation6], %s680
          %684 = dma.hbm_to_smem %s0, 32, [#allocation3], [#allocation6]
        $region16: #{fwd.1} parent=11 // pred_fallthru
          _
      $region12: #{fwd.1} parent=5 // pred_fallthru
        _
      %p685 = scmp.lt.s32.totalorder %s56, 4
      // Predicated region
      $region17: #{fwd.1} parent=5 // pred_check
        %p686 = pneg %p685
      $region18: #{fwd.1} parent=5 // pred_check_branch
        %688 = sbr.rel (%p686) target = $region20
      $region19: #{fwd.1} parent=5 // pred_region
        // Predicated region
        $region21: #{fwd.1} parent=19 // pred_check
          %p689 = pneg %p109
        $region22: #{fwd.1} parent=19 // pred_check_branch
          %691 = sbr.rel (%p689) target = $region24
        $region23: #{fwd.1} parent=19 // pred_region
          %s692 = sand.u32 %s99, 1
          %s693 = scalar_lea.sflag [#allocation4], %s692
          %s694 = sand.u32 %s99, 1
          %s695 = smul.addr %s694, 8
          %s696 = scalar_lea.vmem [#allocation7], %s695
          %s698 = ssub.s32 128, 128
          %699 = vsyncadd %s693, %s698
          %s700 = smul.addr %s63, 128
          %s701 = scalar_lea.hbm %s1, %s700
          %s703 = sshll.u32 %s696, 4
          %s704 = int_to_ptr.vmem [resolvable:$true] %s703
          %706 = dma.hbm_to_vmem [thread:$0]  %s701, 128, %s704, %s693
        $region24: #{fwd.1} parent=19 // pred_fallthru
          _
        // Predicated region
        $region25: #{fwd.1} parent=19 // pred_check
          %p707 = pneg %p135
        $region26: #{fwd.1} parent=19 // pred_check_branch
          %709 = sbr.rel (%p707) target = $region28
        $region27: #{fwd.1} parent=19 // pred_region
          %s710 = sand.u32 %s56, 1
          %s711 = scalar_lea.sflag [#allocation9], %s710
          %s712 = sand.u32 %s125, 1
          %s713 = smul.addr %s712, 512
          %s714 = scalar_lea.vmem [#allocation8], %s713
          %s716 = ssub.s32 8192, 8192
          %717 = vsyncadd %s711, %s716
          %s718 = smul.addr %s64, 64
          %s719 = smul.addr %s718, 128
          %s720 = scalar_lea.hbm %s2, %s719
          %s721 = sshll.u32 %s714, 4
          %s722 = int_to_ptr.vmem [resolvable:$true] %s721
          %727 = dma.hbm_to_vmem [thread:$0]  %s720, 8192, %s722, %s711, 128, 128, 8
        $region28: #{fwd.1} parent=19 // pred_fallthru
          _
        // Predicated region
        $region29: #{fwd.1} parent=19 // pred_check
          %p728 = pneg %p161
        $region30: #{fwd.1} parent=19 // pred_check_branch
          %730 = sbr.rel (%p728) target = $region32
        $region31: #{fwd.1} parent=19 // pred_region
          %s731 = sand.u32 %s56, 1
          %s732 = scalar_lea.sflag [#allocation9], %s731
          %s733 = sand.u32 %s151, 1
          %s734 = smul.addr %s733, 32
          %s735 = scalar_lea.vmem [#allocation10], %s734
          %s737 = ssub.s32 512, 512
          %738 = vsyncadd %s732, %s737
          %s739 = smul.addr %s64, 4
          %s740 = smul.addr %s739, 128
          %s741 = scalar_lea.hbm %s3, %s740
          %s742 = sshll.u32 %s735, 4
          %s743 = int_to_ptr.vmem [resolvable:$true] %s742
          %748 = dma.hbm_to_vmem [thread:$0]  %s741, 512, %s743, %s732, 128, 128, 8
        $region32: #{fwd.1} parent=19 // pred_fallthru
          _
        // Predicated region
        $region33: #{fwd.1} parent=19 // pred_check
          %p749 = pneg %p187
        $region34: #{fwd.1} parent=19 // pred_check_branch
          %751 = sbr.rel (%p749) target = $region36
        $region35: #{fwd.1} parent=19 // pred_region
          %s752 = sand.u32 %s56, 1
          %s753 = scalar_lea.sflag [#allocation12], %s752
          %s754 = sand.u32 %s177, 1
          %s755 = smul.addr %s754, 32
          %s756 = scalar_lea.vmem [#allocation11], %s755
          %s758 = ssub.s32 512, 512
          %759 = vsyncadd %s753, %s758
          %s760 = smul.addr %s64, 4
          %s761 = smul.addr %s760, 128
          %s762 = scalar_lea.hbm %s4, %s761
          %s763 = sshll.u32 %s756, 4
          %s764 = int_to_ptr.vmem [resolvable:$true] %s763
          %769 = dma.hbm_to_vmem [thread:$0]  %s762, 512, %s764, %s753, 128, 128, 8
        $region36: #{fwd.1} parent=19 // pred_fallthru
          _
        // Predicated region
        $region37: #{fwd.1} parent=19 // pred_check
          %p770 = pneg %p213
        $region38: #{fwd.1} parent=19 // pred_check_branch
          %772 = sbr.rel (%p770) target = $region40
        $region39: #{fwd.1} parent=19 // pred_region
          %s773 = sand.u32 %s56, 1
          %s774 = scalar_lea.sflag [#allocation12], %s773
          %s775 = sand.u32 %s203, 1
          %s776 = scalar_lea.vmem [#allocation13], %s775
          %s778 = ssub.s32 16, 16
          %779 = vsyncadd %s774, %s778
          %s780 = smul.addr %s64, 16
          %s781 = scalar_lea.hbm %s5, %s780
          %s783 = sshll.u32 %s776, 4
          %s784 = int_to_ptr.vmem [resolvable:$true] %s783
          %786 = dma.hbm_to_vmem [thread:$0]  %s781, 16, %s784, %s774
        $region40: #{fwd.1} parent=19 // pred_fallthru
          _
        // Predicated region
        $region41: #{fwd.1} parent=19 // pred_check
          %p787 = pneg %p239
        $region42: #{fwd.1} parent=19 // pred_check_branch
          %789 = sbr.rel (%p787) target = $region44
        $region43: #{fwd.1} parent=19 // pred_region
          %s790 = sand.u32 %s56, 1
          %s791 = scalar_lea.sflag [#allocation15], %s790
          %s792 = sand.u32 %s229, 1
          %s793 = smul.addr %s792, 128
          %s794 = scalar_lea.vmem [#allocation14], %s793
          %s796 = ssub.s32 2048, 2048
          %797 = vsyncadd %s791, %s796
          %s798 = smul.addr %s64, 16
          %s799 = smul.addr %s798, 128
          %s800 = scalar_lea.hbm %s6, %s799
          %s801 = sshll.u32 %s794, 4
          %s802 = int_to_ptr.vmem [resolvable:$true] %s801
          %807 = dma.hbm_to_vmem [thread:$0]  %s800, 2048, %s802, %s791, 128, 128, 8
        $region44: #{fwd.1} parent=19 // pred_fallthru
          _
        // Predicated region
        $region45: #{fwd.1} parent=19 // pred_check
          %p808 = pneg %p265
        $region46: #{fwd.1} parent=19 // pred_check_branch
          %810 = sbr.rel (%p808) target = $region48
        $region47: #{fwd.1} parent=19 // pred_region
          %s811 = sand.u32 %s56, 1
          %s812 = scalar_lea.sflag [#allocation15], %s811
          %s813 = sand.u32 %s255, 1
          %s814 = smul.addr %s813, 4
          %s815 = scalar_lea.vmem [#allocation16], %s814
          %s817 = ssub.s32 64, 64
          %818 = vsyncadd %s812, %s817
          %s819 = smul.addr %s64, 4
          %s820 = smul.addr %s819, 16
          %s821 = scalar_lea.hbm %s7, %s820
          %s822 = sshll.u32 %s815, 4
          %s823 = int_to_ptr.vmem [resolvable:$true] %s822
          %828 = dma.hbm_to_vmem [thread:$0]  %s821, 64, %s823, %s812, 16, 16, 1
        $region48: #{fwd.1} parent=19 // pred_fallthru
          _
        // Predicated region
        $region49: #{fwd.1} parent=19 // pred_check
          %p829 = pneg %p291
        $region50: #{fwd.1} parent=19 // pred_check_branch
          %831 = sbr.rel (%p829) target = $region52
        $region51: #{fwd.1} parent=19 // pred_region
          %s832 = sand.u32 %s56, 1
          %s833 = scalar_lea.sflag [#allocation18], %s832
          %s834 = sand.u32 %s281, 1
          %s835 = smul.addr %s834, 128
          %s836 = scalar_lea.vmem [#allocation17], %s835
          %s838 = ssub.s32 2048, 2048
          %839 = vsyncadd %s833, %s838
          %s840 = smul.addr %s64, 16
          %s841 = smul.addr %s840, 128
          %s842 = scalar_lea.hbm %s8, %s841
          %s843 = sshll.u32 %s836, 4
          %s844 = int_to_ptr.vmem [resolvable:$true] %s843
          %849 = dma.hbm_to_vmem [thread:$0]  %s842, 2048, %s844, %s833, 128, 128, 8
        $region52: #{fwd.1} parent=19 // pred_fallthru
          _
        // Predicated region
        $region53: #{fwd.1} parent=19 // pred_check
          %p850 = pneg %p317
        $region54: #{fwd.1} parent=19 // pred_check_branch
          %852 = sbr.rel (%p850) target = $region56
        $region55: #{fwd.1} parent=19 // pred_region
          %p853 = scmp.lt.s32.totalorder %s64, 1
          %s854 = scalar_select %p853, %s64, 1
          %s855 = smul.addr %s854, 4
          %s856 = scalar_lea.vmem %s9, %s855
        $region56: #{fwd.1} parent=19 // pred_fallthru
          _
        // Predicated region
        $region57: #{fwd.1} parent=19 // pred_check
          %p857 = pneg %p343
        $region58: #{fwd.1} parent=19 // pred_check_branch
          %859 = sbr.rel (%p857) target = $region60
        $region59: #{fwd.1} parent=19 // pred_region
          %s860 = sand.u32 %s56, 1
          %s861 = scalar_lea.sflag [#allocation18], %s860
          %s862 = sand.u32 %s333, 1
          %s863 = smul.addr %s862, 128
          %s864 = scalar_lea.vmem [#allocation19], %s863
          %s866 = ssub.s32 2048, 2048
          %867 = vsyncadd %s861, %s866
          %s868 = smul.addr %s64, 16
          %s869 = smul.addr %s868, 128
          %s870 = scalar_lea.hbm %s10, %s869
          %s871 = sshll.u32 %s864, 4
          %s872 = int_to_ptr.vmem [resolvable:$true] %s871
          %877 = dma.hbm_to_vmem [thread:$0]  %s870, 2048, %s872, %s861, 128, 128, 8
        $region60: #{fwd.1} parent=19 // pred_fallthru
          _
        // Predicated region
        $region61: #{fwd.1} parent=19 // pred_check
          %p878 = pneg %p369
        $region62: #{fwd.1} parent=19 // pred_check_branch
          %880 = sbr.rel (%p878) target = $region64
        $region63: #{fwd.1} parent=19 // pred_region
          %p881 = scmp.lt.s32.totalorder %s64, 1
          %s882 = scalar_select %p881, %s64, 1
          %s883 = smul.addr %s882, 4
          %s884 = scalar_lea.vmem %s11, %s883
        $region64: #{fwd.1} parent=19 // pred_fallthru
          _
        // Predicated region
        $region65: #{fwd.1} parent=19 // pred_check
          %p885 = pneg %p395
        $region66: #{fwd.1} parent=19 // pred_check_branch
          %887 = sbr.rel (%p885) target = $region68
        $region67: #{fwd.1} parent=19 // pred_region
          %s888 = sand.u32 %s56, 1
          %s889 = scalar_lea.sflag [#allocation21], %s888
          %s890 = sand.u32 %s385, 1
          %s891 = smul.addr %s890, 32
          %s892 = scalar_lea.vmem [#allocation20], %s891
          %s894 = ssub.s32 512, 512
          %895 = vsyncadd %s889, %s894
          %s896 = smul.addr %s64, 4
          %s897 = smul.addr %s896, 128
          %s898 = scalar_lea.hbm %s12, %s897
          %s899 = sshll.u32 %s892, 4
          %s900 = int_to_ptr.vmem [resolvable:$true] %s899
          %905 = dma.hbm_to_vmem [thread:$0]  %s898, 512, %s900, %s889, 128, 128, 8
        $region68: #{fwd.1} parent=19 // pred_fallthru
          _
        // Predicated region
        $region69: #{fwd.1} parent=19 // pred_check
          %p906 = pneg %p421
        $region70: #{fwd.1} parent=19 // pred_check_branch
          %908 = sbr.rel (%p906) target = $region72
        $region71: #{fwd.1} parent=19 // pred_region
          %s909 = sand.u32 %s56, 1
          %s910 = scalar_lea.sflag [#allocation21], %s909
          %s911 = sand.u32 %s411, 1
          %s912 = scalar_lea.vmem [#allocation22], %s911
          %s914 = ssub.s32 16, 16
          %915 = vsyncadd %s910, %s914
          %s916 = smul.addr %s64, 16
          %s917 = scalar_lea.hbm %s13, %s916
          %s919 = sshll.u32 %s912, 4
          %s920 = int_to_ptr.vmem [resolvable:$true] %s919
          %922 = dma.hbm_to_vmem [thread:$0]  %s917, 16, %s920, %s910
        $region72: #{fwd.1} parent=19 // pred_fallthru
          _
        // Predicated region
        $region73: #{fwd.1} parent=19 // pred_check
          %p923 = pneg %p447
        $region74: #{fwd.1} parent=19 // pred_check_branch
          %925 = sbr.rel (%p923) target = $region76
        $region75: #{fwd.1} parent=19 // pred_region
          %s926 = sand.u32 %s56, 1
          %s927 = scalar_lea.sflag [#allocation24], %s926
          %s928 = sand.u32 %s437, 1
          %s929 = scalar_lea.vmem [#allocation23], %s928
          %s931 = ssub.s32 16, 16
          %932 = vsyncadd %s927, %s931
          %s933 = smul.addr %s64, 16
          %s934 = scalar_lea.hbm %s14, %s933
          %s936 = sshll.u32 %s929, 4
          %s937 = int_to_ptr.vmem [resolvable:$true] %s936
          %939 = dma.hbm_to_vmem [thread:$0]  %s934, 16, %s937, %s927
        $region76: #{fwd.1} parent=19 // pred_fallthru
          _
        // Predicated region
        $region77: #{fwd.1} parent=19 // pred_check
          %p940 = pneg %p473
        $region78: #{fwd.1} parent=19 // pred_check_branch
          %942 = sbr.rel (%p940) target = $region80
        $region79: #{fwd.1} parent=19 // pred_region
          %p943 = scmp.lt.s32.totalorder %s64, 1
          %s944 = scalar_select %p943, %s64, 1
          %s945 = scalar_lea.vmem %s15, %s944
        $region80: #{fwd.1} parent=19 // pred_fallthru
          _
        // Predicated region
        $region81: #{fwd.1} parent=19 // pred_check
          %p946 = pneg %p499
        $region82: #{fwd.1} parent=19 // pred_check_branch
          %948 = sbr.rel (%p946) target = $region84
        $region83: #{fwd.1} parent=19 // pred_region
          %s949 = sand.u32 %s56, 1
          %s950 = scalar_lea.sflag [#allocation24], %s949
          %s951 = sand.u32 %s489, 1
          %s952 = smul.addr %s951, 32
          %s953 = scalar_lea.vmem [#allocation25], %s952
          %s955 = ssub.s32 512, 512
          %956 = vsyncadd %s950, %s955
          %s957 = smul.addr %s64, 4
          %s958 = smul.addr %s957, 128
          %s959 = scalar_lea.hbm %s16, %s958
          %s960 = sshll.u32 %s953, 4
          %s961 = int_to_ptr.vmem [resolvable:$true] %s960
          %966 = dma.hbm_to_vmem [thread:$0]  %s959, 512, %s961, %s950, 128, 128, 8
        $region84: #{fwd.1} parent=19 // pred_fallthru
          _
        // Predicated region
        $region85: #{fwd.1} parent=19 // pred_check
          %p967 = pneg %p525
        $region86: #{fwd.1} parent=19 // pred_check_branch
          %969 = sbr.rel (%p967) target = $region88
        $region87: #{fwd.1} parent=19 // pred_region
          %p970 = scmp.lt.s32.totalorder %s64, 1
          %s971 = scalar_select %p970, %s64, 1
          %s972 = scalar_lea.vmem %s17, %s971
        $region88: #{fwd.1} parent=19 // pred_fallthru
          _
        // Predicated region
        $region89: #{fwd.1} parent=19 // pred_check
          %p973 = pneg %p551
        $region90: #{fwd.1} parent=19 // pred_check_branch
          %975 = sbr.rel (%p973) target = $region92
        $region91: #{fwd.1} parent=19 // pred_region
          %s976 = sand.u32 %s541, 1
          %s977 = scalar_lea.sflag [#allocation27], %s976
          %s978 = sand.u32 %s541, 1
          %s979 = smul.addr %s978, 128
          %s980 = scalar_lea.vmem [#allocation26], %s979
          %s982 = ssub.s32 2048, 2048
          %983 = vsyncadd %s977, %s982
          %s984 = smul.addr %s64, 16
          %s985 = smul.addr %s984, 128
          %s986 = scalar_lea.hbm %s18, %s985
          %s987 = sshll.u32 %s980, 4
          %s988 = int_to_ptr.vmem [resolvable:$true] %s987
          %993 = dma.hbm_to_vmem [thread:$0]  %s986, 2048, %s988, %s977, 128, 128, 8
        $region92: #{fwd.1} parent=19 // pred_fallthru
          _
        // Predicated region
        $region93: #{fwd.1} parent=19 // pred_check
          %p994 = pneg %p577
        $region94: #{fwd.1} parent=19 // pred_check_branch
          %996 = sbr.rel (%p994) target = $region96
        $region95: #{fwd.1} parent=19 // pred_region
          %p997 = scmp.lt.s32.totalorder %s64, 1
          %s998 = scalar_select %p997, %s64, 1
          %s999 = scalar_lea.vmem %s19, %s998
        $region96: #{fwd.1} parent=19 // pred_fallthru
          _
        // Predicated region
        $region97: #{fwd.1} parent=19 // pred_check
          %p1000 = pneg %p603
        $region98: #{fwd.1} parent=19 // pred_check_branch
          %1002 = sbr.rel (%p1000) target = $region100
        $region99: #{fwd.1} parent=19 // pred_region
          %p1003 = scmp.lt.s32.totalorder %s64, 1
          %s1004 = scalar_select %p1003, %s64, 1
          %s1005 = scalar_lea.vmem %s20, %s1004
        $region100: #{fwd.1} parent=19 // pred_fallthru
          _
        // Predicated region
        $region101: #{fwd.1} parent=19 // pred_check
          %p1006 = pneg %p629
        $region102: #{fwd.1} parent=19 // pred_check_branch
          %1008 = sbr.rel (%p1006) target = $region104
        $region103: #{fwd.1} parent=19 // pred_region
          %p1009 = scmp.lt.s32.totalorder %s64, 1
          %s1010 = scalar_select %p1009, %s64, 1
          %s1011 = scalar_lea.vmem %s21, %s1010
        $region104: #{fwd.1} parent=19 // pred_fallthru
          _
      $region20: #{fwd.1} parent=5 // pred_fallthru
        _
      %p1012 = scmp.le.s32.totalorder 1, %s56
      %p1013 = scmp.lt.s32.totalorder %s56, 5
      %p1014 = pnand %p1012, %p1013
      %p1015 = pneg %p1014
      // Predicated region
      $region105: #{fwd.1} parent=5 // pred_check
        _
      $region106: #{fwd.1} parent=5 // pred_check_branch
        %1017 = sbr.rel (%p1014) target = $region108
      $region107: #{fwd.1} parent=5 // pred_region
        %s1018 = ssub.s32 %s56, 1
        // Predicated region
        $region109: #{fwd.1} parent=107 // pred_check
          %p1019 = pneg %p89
        $region110: #{fwd.1} parent=107 // pred_check_branch
          %1021 = sbr.rel (%p1019) target = $region112
        $region111: #{fwd.1} parent=107 // pred_region
          %1022 = dma.done [#allocation6], 32
        $region112: #{fwd.1} parent=107 // pred_fallthru
          _
        %s1023 = sand.u32 %s102, 1
        %s1024 = scalar_lea.sflag [#allocation4], %s1023
        %s1025 = sand.u32 %s102, 1
        %s1026 = smul.addr %s1025, 8
        %s1027 = scalar_lea.vmem [#allocation7], %s1026
        // Predicated region
        $region113: #{fwd.1} parent=107 // pred_check
          %p1028 = pneg %p115
        $region114: #{fwd.1} parent=107 // pred_check_branch
          %1030 = sbr.rel (%p1028) target = $region116
        $region115: #{fwd.1} parent=107 // pred_region
          %1031 = dma.done %s1024, 128
        $region116: #{fwd.1} parent=107 // pred_fallthru
          _
        %s1032 = sand.u32 %s61, 1
        %s1033 = scalar_lea.sflag [#allocation9], %s1032
        %s1034 = sand.u32 %s128, 1
        %s1035 = smul.addr %s1034, 512
        %s1036 = scalar_lea.vmem [#allocation8], %s1035
        // Predicated region
        $region117: #{fwd.1} parent=107 // pred_check
          %p1037 = pneg %p141
        $region118: #{fwd.1} parent=107 // pred_check_branch
          %1039 = sbr.rel (%p1037) target = $region120
        $region119: #{fwd.1} parent=107 // pred_region
          %1040 = dma.done %s1033, 8192
        $region120: #{fwd.1} parent=107 // pred_fallthru
          _
        %s1041 = sand.u32 %s61, 1
        %s1042 = scalar_lea.sflag [#allocation9], %s1041
        %s1043 = sand.u32 %s154, 1
        %s1044 = smul.addr %s1043, 32
        %s1045 = scalar_lea.vmem [#allocation10], %s1044
        // Predicated region
        $region121: #{fwd.1} parent=107 // pred_check
          %p1046 = pneg %p167
        $region122: #{fwd.1} parent=107 // pred_check_branch
          %1048 = sbr.rel (%p1046) target = $region124
        $region123: #{fwd.1} parent=107 // pred_region
          %1049 = dma.done %s1042, 512
        $region124: #{fwd.1} parent=107 // pred_fallthru
          _
        %s1050 = sand.u32 %s61, 1
        %s1051 = scalar_lea.sflag [#allocation12], %s1050
        %s1052 = sand.u32 %s180, 1
        %s1053 = smul.addr %s1052, 32
        %s1054 = scalar_lea.vmem [#allocation11], %s1053
        // Predicated region
        $region125: #{fwd.1} parent=107 // pred_check
          %p1055 = pneg %p193
        $region126: #{fwd.1} parent=107 // pred_check_branch
          %1057 = sbr.rel (%p1055) target = $region128
        $region127: #{fwd.1} parent=107 // pred_region
          %1058 = dma.done %s1051, 512
        $region128: #{fwd.1} parent=107 // pred_fallthru
          _
        %s1059 = sand.u32 %s61, 1
        %s1060 = scalar_lea.sflag [#allocation12], %s1059
        %s1061 = sand.u32 %s206, 1
        %s1062 = scalar_lea.vmem [#allocation13], %s1061
        // Predicated region
        $region129: #{fwd.1} parent=107 // pred_check
          %p1063 = pneg %p219
        $region130: #{fwd.1} parent=107 // pred_check_branch
          %1065 = sbr.rel (%p1063) target = $region132
        $region131: #{fwd.1} parent=107 // pred_region
          %1066 = dma.done %s1060, 16
        $region132: #{fwd.1} parent=107 // pred_fallthru
          _
        %s1067 = sand.u32 %s61, 1
        %s1068 = scalar_lea.sflag [#allocation15], %s1067
        %s1069 = sand.u32 %s232, 1
        %s1070 = smul.addr %s1069, 128
        %s1071 = scalar_lea.vmem [#allocation14], %s1070
        // Predicated region
        $region133: #{fwd.1} parent=107 // pred_check
          %p1072 = pneg %p245
        $region134: #{fwd.1} parent=107 // pred_check_branch
          %1074 = sbr.rel (%p1072) target = $region136
        $region135: #{fwd.1} parent=107 // pred_region
          %1075 = dma.done %s1068, 2048
        $region136: #{fwd.1} parent=107 // pred_fallthru
          _
        %s1076 = sand.u32 %s61, 1
        %s1077 = scalar_lea.sflag [#allocation15], %s1076
        %s1078 = sand.u32 %s258, 1
        %s1079 = smul.addr %s1078, 4
        %s1080 = scalar_lea.vmem [#allocation16], %s1079
        // Predicated region
        $region137: #{fwd.1} parent=107 // pred_check
          %p1081 = pneg %p271
        $region138: #{fwd.1} parent=107 // pred_check_branch
          %1083 = sbr.rel (%p1081) target = $region140
        $region139: #{fwd.1} parent=107 // pred_region
          %1084 = dma.done %s1077, 64
        $region140: #{fwd.1} parent=107 // pred_fallthru
          _
        %s1085 = sand.u32 %s61, 1
        %s1086 = scalar_lea.sflag [#allocation18], %s1085
        %s1087 = sand.u32 %s284, 1
        %s1088 = smul.addr %s1087, 128
        %s1089 = scalar_lea.vmem [#allocation17], %s1088
        // Predicated region
        $region141: #{fwd.1} parent=107 // pred_check
          %p1090 = pneg %p297
        $region142: #{fwd.1} parent=107 // pred_check_branch
          %1092 = sbr.rel (%p1090) target = $region144
        $region143: #{fwd.1} parent=107 // pred_region
          %1093 = dma.done %s1086, 2048
        $region144: #{fwd.1} parent=107 // pred_fallthru
          _
        %s1094 = sand.u32 %s61, 1
        %s1095 = scalar_lea.sflag [#allocation18], %s1094
        %s1096 = sand.u32 %s336, 1
        %s1097 = smul.addr %s1096, 128
        %s1098 = scalar_lea.vmem [#allocation19], %s1097
        // Predicated region
        $region145: #{fwd.1} parent=107 // pred_check
          %p1099 = pneg %p349
        $region146: #{fwd.1} parent=107 // pred_check_branch
          %1101 = sbr.rel (%p1099) target = $region148
        $region147: #{fwd.1} parent=107 // pred_region
          %1102 = dma.done %s1095, 2048
        $region148: #{fwd.1} parent=107 // pred_fallthru
          _
        %s1103 = sand.u32 %s61, 1
        %s1104 = scalar_lea.sflag [#allocation21], %s1103
        %s1105 = sand.u32 %s388, 1
        %s1106 = smul.addr %s1105, 32
        %s1107 = scalar_lea.vmem [#allocation20], %s1106
        // Predicated region
        $region149: #{fwd.1} parent=107 // pred_check
          %p1108 = pneg %p401
        $region150: #{fwd.1} parent=107 // pred_check_branch
          %1110 = sbr.rel (%p1108) target = $region152
        $region151: #{fwd.1} parent=107 // pred_region
          %1111 = dma.done %s1104, 512
        $region152: #{fwd.1} parent=107 // pred_fallthru
          _
        %s1112 = sand.u32 %s61, 1
        %s1113 = scalar_lea.sflag [#allocation21], %s1112
        %s1114 = sand.u32 %s414, 1
        %s1115 = scalar_lea.vmem [#allocation22], %s1114
        // Predicated region
        $region153: #{fwd.1} parent=107 // pred_check
          %p1116 = pneg %p427
        $region154: #{fwd.1} parent=107 // pred_check_branch
          %1118 = sbr.rel (%p1116) target = $region156
        $region155: #{fwd.1} parent=107 // pred_region
          %1119 = dma.done %s1113, 16
        $region156: #{fwd.1} parent=107 // pred_fallthru
          _
        %s1120 = sand.u32 %s61, 1
        %s1121 = scalar_lea.sflag [#allocation24], %s1120
        %s1122 = sand.u32 %s440, 1
        %s1123 = scalar_lea.vmem [#allocation23], %s1122
        // Predicated region
        $region157: #{fwd.1} parent=107 // pred_check
          %p1124 = pneg %p453
        $region158: #{fwd.1} parent=107 // pred_check_branch
          %1126 = sbr.rel (%p1124) target = $region160
        $region159: #{fwd.1} parent=107 // pred_region
          %1127 = dma.done %s1121, 16
        $region160: #{fwd.1} parent=107 // pred_fallthru
          _
        %s1128 = sand.u32 %s61, 1
        %s1129 = scalar_lea.sflag [#allocation24], %s1128
        %s1130 = sand.u32 %s492, 1
        %s1131 = smul.addr %s1130, 32
        %s1132 = scalar_lea.vmem [#allocation25], %s1131
        // Predicated region
        $region161: #{fwd.1} parent=107 // pred_check
          %p1133 = pneg %p505
        $region162: #{fwd.1} parent=107 // pred_check_branch
          %1135 = sbr.rel (%p1133) target = $region164
        $region163: #{fwd.1} parent=107 // pred_region
          %1136 = dma.done %s1129, 512
        $region164: #{fwd.1} parent=107 // pred_fallthru
          _
        %s1137 = sand.u32 %s544, 1
        %s1138 = scalar_lea.sflag [#allocation27], %s1137
        %s1139 = sand.u32 %s544, 1
        %s1140 = smul.addr %s1139, 128
        %s1141 = scalar_lea.vmem [#allocation26], %s1140
        // Predicated region
        $region165: #{fwd.1} parent=107 // pred_check
          %p1142 = pneg %p557
        $region166: #{fwd.1} parent=107 // pred_check_branch
          %1144 = sbr.rel (%p1142) target = $region168
        $region167: #{fwd.1} parent=107 // pred_region
          %1145 = dma.done %s1138, 2048
        $region168: #{fwd.1} parent=107 // pred_fallthru
          _
        %1146 = sfence
        %p1147 = pneg %p89
        %p1148 = pneg %p86
        %s1149 = sand.u32 %s102, 1
        %s1150 = scalar_lea.sflag [#allocation4], %s1149
        %s1151 = sand.u32 %s102, 1
        %s1152 = smul.addr %s1151, 8
        %s1153 = scalar_lea.vmem [#allocation7], %s1152
        %p1154 = pneg %p115
        %p1155 = pneg %p112
        %s1156 = sand.u32 %s61, 1
        %s1157 = scalar_lea.sflag [#allocation9], %s1156
        %s1158 = sand.u32 %s128, 1
        %s1159 = smul.addr %s1158, 512
        %s1160 = scalar_lea.vmem [#allocation8], %s1159
        %p1161 = pneg %p141
        %p1162 = pneg %p138
        %s1163 = sand.u32 %s61, 1
        %s1164 = scalar_lea.sflag [#allocation9], %s1163
        %s1165 = sand.u32 %s154, 1
        %s1166 = smul.addr %s1165, 32
        %s1167 = scalar_lea.vmem [#allocation10], %s1166
        %p1168 = pneg %p167
        %p1169 = pneg %p164
        %s1170 = sand.u32 %s61, 1
        %s1171 = scalar_lea.sflag [#allocation12], %s1170
        %s1172 = sand.u32 %s180, 1
        %s1173 = smul.addr %s1172, 32
        %s1174 = scalar_lea.vmem [#allocation11], %s1173
        %p1175 = pneg %p193
        %p1176 = pneg %p190
        %s1177 = sand.u32 %s61, 1
        %s1178 = scalar_lea.sflag [#allocation12], %s1177
        %s1179 = sand.u32 %s206, 1
        %s1180 = scalar_lea.vmem [#allocation13], %s1179
        %p1181 = pneg %p219
        %p1182 = pneg %p216
        %s1183 = sand.u32 %s61, 1
        %s1184 = scalar_lea.sflag [#allocation15], %s1183
        %s1185 = sand.u32 %s232, 1
        %s1186 = smul.addr %s1185, 128
        %s1187 = scalar_lea.vmem [#allocation14], %s1186
        %p1188 = pneg %p245
        %p1189 = pneg %p242
        %s1190 = sand.u32 %s61, 1
        %s1191 = scalar_lea.sflag [#allocation15], %s1190
        %s1192 = sand.u32 %s258, 1
        %s1193 = smul.addr %s1192, 4
        %s1194 = scalar_lea.vmem [#allocation16], %s1193
        %p1195 = pneg %p271
        %p1196 = pneg %p268
        %s1197 = sand.u32 %s61, 1
        %s1198 = scalar_lea.sflag [#allocation18], %s1197
        %s1199 = sand.u32 %s284, 1
        %s1200 = smul.addr %s1199, 128
        %s1201 = scalar_lea.vmem [#allocation17], %s1200
        %p1202 = pneg %p297
        %p1203 = pneg %p294
        %p1204 = scmp.lt.s32.totalorder %s66, 1
        %s1205 = scalar_select %p1204, %s66, 1
        %s1206 = smul.addr %s1205, 4
        %s1207 = scalar_lea.vmem %s9, %s1206
        %p1208 = pneg %p323
        %p1209 = pneg %p320
        %s1210 = sand.u32 %s61, 1
        %s1211 = scalar_lea.sflag [#allocation18], %s1210
        %s1212 = sand.u32 %s336, 1
        %s1213 = smul.addr %s1212, 128
        %s1214 = scalar_lea.vmem [#allocation19], %s1213
        %p1215 = pneg %p349
        %p1216 = pneg %p346
        %p1217 = scmp.lt.s32.totalorder %s66, 1
        %s1218 = scalar_select %p1217, %s66, 1
        %s1219 = smul.addr %s1218, 4
        %s1220 = scalar_lea.vmem %s11, %s1219
        %p1221 = pneg %p375
        %p1222 = pneg %p372
        %s1223 = sand.u32 %s61, 1
        %s1224 = scalar_lea.sflag [#allocation21], %s1223
        %s1225 = sand.u32 %s388, 1
        %s1226 = smul.addr %s1225, 32
        %s1227 = scalar_lea.vmem [#allocation20], %s1226
        %p1228 = pneg %p401
        %p1229 = pneg %p398
        %s1230 = sand.u32 %s61, 1
        %s1231 = scalar_lea.sflag [#allocation21], %s1230
        %s1232 = sand.u32 %s414, 1
        %s1233 = scalar_lea.vmem [#allocation22], %s1232
        %p1234 = pneg %p427
        %p1235 = pneg %p424
        %s1236 = sand.u32 %s61, 1
        %s1237 = scalar_lea.sflag [#allocation24], %s1236
        %s1238 = sand.u32 %s440, 1
        %s1239 = scalar_lea.vmem [#allocation23], %s1238
        %p1240 = pneg %p453
        %p1241 = pneg %p450
        %p1242 = scmp.lt.s32.totalorder %s66, 1
        %s1243 = scalar_select %p1242, %s66, 1
        %s1244 = scalar_lea.vmem %s15, %s1243
        %p1245 = pneg %p479
        %p1246 = pneg %p476
        %s1247 = sand.u32 %s61, 1
        %s1248 = scalar_lea.sflag [#allocation24], %s1247
        %s1249 = sand.u32 %s492, 1
        %s1250 = smul.addr %s1249, 32
        %s1251 = scalar_lea.vmem [#allocation25], %s1250
        %p1252 = pneg %p505
        %p1253 = pneg %p502
        %p1254 = scmp.lt.s32.totalorder %s66, 1
        %s1255 = scalar_select %p1254, %s66, 1
        %s1256 = scalar_lea.vmem %s17, %s1255
        %p1257 = pneg %p531
        %p1258 = pneg %p528
        %s1259 = sand.u32 %s544, 1
        %s1260 = scalar_lea.sflag [#allocation27], %s1259
        %s1261 = sand.u32 %s544, 1
        %s1262 = smul.addr %s1261, 128
        %s1263 = scalar_lea.vmem [#allocation26], %s1262
        %p1264 = pneg %p557
        %p1265 = pneg %p554
        %p1266 = scmp.lt.s32.totalorder %s66, 1
        %s1267 = scalar_select %p1266, %s66, 1
        %s1268 = scalar_lea.vmem %s19, %s1267
        %p1269 = pneg %p583
        %p1270 = pneg %p580
        %p1271 = scmp.lt.s32.totalorder %s66, 1
        %s1272 = scalar_select %p1271, %s66, 1
        %s1273 = scalar_lea.vmem %s20, %s1272
        %p1274 = pneg %p609
        %p1275 = pneg %p606
        %p1276 = scmp.lt.s32.totalorder %s66, 1
        %s1277 = scalar_select %p1276, %s66, 1
        %s1278 = scalar_lea.vmem %s21, %s1277
        %p1279 = pneg %p635
        %p1280 = pneg %p632
        %p1281 = pneg %p661
        %p1282 = pneg %p658
        %s1283 = sand.u32 %s648, 1
        %s1284 = scalar_lea.sflag [#allocation5], %s1283
        %s1285 = sand.u32 %s648, 1
        %s1286 = smul.addr %s1285, 8
        %s1287 = scalar_lea.vmem [#allocation28], %s1286
        %p1288 = scmp.lt.s32.totalorder %s66, 1
        %s1289 = scalar_select %p1288, %s66, 1
        %s1290 = smul.addr %s1289, 4
        %s1291 = scalar_lea.vmem %s9, %s1290
        %p1292 = scmp.lt.s32.totalorder %s66, 1
        %s1293 = scalar_select %p1292, %s66, 1
        %s1294 = smul.addr %s1293, 4
        %s1295 = scalar_lea.vmem %s11, %s1294
        %p1296 = scmp.lt.s32.totalorder %s66, 1
        %s1297 = scalar_select %p1296, %s66, 1
        %s1298 = scalar_lea.vmem %s15, %s1297
        %p1299 = scmp.lt.s32.totalorder %s66, 1
        %s1300 = scalar_select %p1299, %s66, 1
        %s1301 = scalar_lea.vmem %s17, %s1300
        %p1302 = scmp.lt.s32.totalorder %s66, 1
        %s1303 = scalar_select %p1302, %s66, 1
        %s1304 = scalar_lea.vmem %s19, %s1303
        %p1305 = scmp.lt.s32.totalorder %s66, 1
        %s1306 = scalar_select %p1305, %s66, 1
        %s1307 = scalar_lea.vmem %s20, %s1306
        %p1308 = scmp.lt.s32.totalorder %s66, 1
        %s1309 = scalar_select %p1308, %s66, 1
        %s1310 = scalar_lea.vmem %s21, %s1309
        %p1311 = scmp.eq.s32.totalorder %s66, 0
        // Predicated region
        $region169: #{fwd.1} parent=107 // pred_check
          %p1312 = pneg %p1311
        $region170: #{fwd.1} parent=107 // pred_check_branch
          %1314 = sbr.rel (%p1312) target = $region172
        $region171: #{fwd.1} parent=107 // pred_region
          %v1315 = vld [vmem:[%s1027] sm:$0xff]
          %vm1316 = vcmask 261120
          %1317 = vst.msk [vmem:[#allocation2] sm:$0xff] %vm1316, %v1315
        $region172: #{fwd.1} parent=107 // pred_fallthru
          _
        %v1318 = vld [vmem:[#allocation2] sm:$0xff]
        %v1319 = vld [vmem:[%s1054] sm:$0xff]
        %v1320 = vld [vmem:[%s1054 + $0x8] sm:$0xff]
        %v1321 = vld [vmem:[%s1054 + $0x10] sm:$0xff]
        %v1322 = vld [vmem:[%s1054 + $0x18] sm:$0xff]
        %v1323 = vld [vmem:[%s1045] sm:$0xff]
        %v1324 = vld [vmem:[%s1045 + $0x8] sm:$0xff]
        %v1325 = vld [vmem:[%s1045 + $0x10] sm:$0xff]
        %v1326 = vld [vmem:[%s1045 + $0x18] sm:$0xff]
        %v1327 = vadd.f32 %v1319, %v1323
        %v1328 = vadd.f32 %v1320, %v1324
        %v1329 = vadd.f32 %v1321, %v1325
        %v1330 = vadd.f32 %v1322, %v1326
        %s1331 = smul.u32 %s65, 128
        %s1332 = sld [smem:[#allocation3 + %s1331]]
        %v1333 = vld [vmem:[%s1036] sm:$0xff]
        %v1334 = vld [vmem:[%s1036 + $0x8] sm:$0xff]
        %v1335 = vld [vmem:[%s1036 + $0x10] sm:$0xff]
        %v1336 = vld [vmem:[%s1036 + $0x18] sm:$0xff]
        %v1337 = vstv %s1332
        %v1338 = vmul.f32 %v1337, %v1333
        %v1339 = vmul.f32 %v1337, %v1334
        %v1340 = vmul.f32 %v1337, %v1335
        %v1341 = vmul.f32 %v1337, %v1336
        %v1342 = vadd.f32 %v1327, %v1338
        %v1343 = vadd.f32 %v1328, %v1339
        %v1344 = vadd.f32 %v1329, %v1340
        %v1345 = vadd.f32 %v1330, %v1341
        %s1346 = sadd.s32 %s1331, 1
        %s1347 = sld [smem:[#allocation3 + %s1346]]
        %s1348 = scalar_lea.vmem %s1036, 32 [#allocation8]
        %v1349 = vld [vmem:[%s1348] sm:$0xff]
        %v1350 = vld [vmem:[%s1348 + $0x8] sm:$0xff]
        %v1351 = vld [vmem:[%s1348 + $0x10] sm:$0xff]
        %v1352 = vld [vmem:[%s1348 + $0x18] sm:$0xff]
        %v1353 = vstv %s1347
        %v1354 = vmul.f32 %v1353, %v1349
        %v1355 = vmul.f32 %v1353, %v1350
        %v1356 = vmul.f32 %v1353, %v1351
        %v1357 = vmul.f32 %v1353, %v1352
        %v1358 = vadd.f32 %v1342, %v1354
        %v1359 = vadd.f32 %v1343, %v1355
        %v1360 = vadd.f32 %v1344, %v1356
        %v1361 = vadd.f32 %v1345, %v1357
        %s1362 = sadd.s32 %s1331, 2
        %s1363 = sld [smem:[#allocation3 + %s1362]]
        %s1364 = scalar_lea.vmem %s1036, 64 [#allocation8]
        %v1365 = vld [vmem:[%s1364] sm:$0xff]
        %v1366 = vld [vmem:[%s1364 + $0x8] sm:$0xff]
        %v1367 = vld [vmem:[%s1364 + $0x10] sm:$0xff]
        %v1368 = vld [vmem:[%s1364 + $0x18] sm:$0xff]
        %v1369 = vstv %s1363
        %v1370 = vmul.f32 %v1369, %v1365
        %v1371 = vmul.f32 %v1369, %v1366
        %v1372 = vmul.f32 %v1369, %v1367
        %v1373 = vmul.f32 %v1369, %v1368
        %v1374 = vadd.f32 %v1358, %v1370
        %v1375 = vadd.f32 %v1359, %v1371
        %v1376 = vadd.f32 %v1360, %v1372
        %v1377 = vadd.f32 %v1361, %v1373
        %s1378 = sadd.s32 %s1331, 3
        %s1379 = sld [smem:[#allocation3 + %s1378]]
        %s1380 = scalar_lea.vmem %s1036, 96 [#allocation8]
        %v1381 = vld [vmem:[%s1380] sm:$0xff]
        %v1382 = vld [vmem:[%s1380 + $0x8] sm:$0xff]
        %v1383 = vld [vmem:[%s1380 + $0x10] sm:$0xff]
        %v1384 = vld [vmem:[%s1380 + $0x18] sm:$0xff]
        %v1385 = vstv %s1379
        %v1386 = vmul.f32 %v1385, %v1381
        %v1387 = vmul.f32 %v1385, %v1382
        %v1388 = vmul.f32 %v1385, %v1383
        %v1389 = vmul.f32 %v1385, %v1384
        %v1390 = vadd.f32 %v1374, %v1386
        %v1391 = vadd.f32 %v1375, %v1387
        %v1392 = vadd.f32 %v1376, %v1388
        %v1393 = vadd.f32 %v1377, %v1389
        %s1394 = sadd.s32 %s1331, 4
        %s1395 = sld [smem:[#allocation3 + %s1394]]
        %s1396 = scalar_lea.vmem %s1036, 128 [#allocation8]
        %v1397 = vld [vmem:[%s1396] sm:$0xff]
        %v1398 = vld [vmem:[%s1396 + $0x8] sm:$0xff]
        %v1399 = vld [vmem:[%s1396 + $0x10] sm:$0xff]
        %v1400 = vld [vmem:[%s1396 + $0x18] sm:$0xff]
        %v1401 = vstv %s1395
        %v1402 = vmul.f32 %v1401, %v1397
        %v1403 = vmul.f32 %v1401, %v1398
        %v1404 = vmul.f32 %v1401, %v1399
        %v1405 = vmul.f32 %v1401, %v1400
        %v1406 = vadd.f32 %v1390, %v1402
        %v1407 = vadd.f32 %v1391, %v1403
        %v1408 = vadd.f32 %v1392, %v1404
        %v1409 = vadd.f32 %v1393, %v1405
        %s1410 = sadd.s32 %s1331, 5
        %s1411 = sld [smem:[#allocation3 + %s1410]]
        %s1412 = scalar_lea.vmem %s1036, 160 [#allocation8]
        %v1413 = vld [vmem:[%s1412] sm:$0xff]
        %v1414 = vld [vmem:[%s1412 + $0x8] sm:$0xff]
        %v1415 = vld [vmem:[%s1412 + $0x10] sm:$0xff]
        %v1416 = vld [vmem:[%s1412 + $0x18] sm:$0xff]
        %v1417 = vstv %s1411
        %v1418 = vmul.f32 %v1417, %v1413
        %v1419 = vmul.f32 %v1417, %v1414
        %v1420 = vmul.f32 %v1417, %v1415
        %v1421 = vmul.f32 %v1417, %v1416
        %v1422 = vadd.f32 %v1406, %v1418
        %v1423 = vadd.f32 %v1407, %v1419
        %v1424 = vadd.f32 %v1408, %v1420
        %v1425 = vadd.f32 %v1409, %v1421
        %s1426 = sadd.s32 %s1331, 6
        %s1427 = sld [smem:[#allocation3 + %s1426]]
        %s1428 = scalar_lea.vmem %s1036, 192 [#allocation8]
        %v1429 = vld [vmem:[%s1428] sm:$0xff]
        %v1430 = vld [vmem:[%s1428 + $0x8] sm:$0xff]
        %v1431 = vld [vmem:[%s1428 + $0x10] sm:$0xff]
        %v1432 = vld [vmem:[%s1428 + $0x18] sm:$0xff]
        %v1433 = vstv %s1427
        %v1434 = vmul.f32 %v1433, %v1429
        %v1435 = vmul.f32 %v1433, %v1430
        %v1436 = vmul.f32 %v1433, %v1431
        %v1437 = vmul.f32 %v1433, %v1432
        %v1438 = vadd.f32 %v1422, %v1434
        %v1439 = vadd.f32 %v1423, %v1435
        %v1440 = vadd.f32 %v1424, %v1436
        %v1441 = vadd.f32 %v1425, %v1437
        %s1442 = sadd.s32 %s1331, 7
        %s1443 = sld [smem:[#allocation3 + %s1442]]
        %s1444 = scalar_lea.vmem %s1036, 224 [#allocation8]
        %v1445 = vld [vmem:[%s1444] sm:$0xff]
        %v1446 = vld [vmem:[%s1444 + $0x8] sm:$0xff]
        %v1447 = vld [vmem:[%s1444 + $0x10] sm:$0xff]
        %v1448 = vld [vmem:[%s1444 + $0x18] sm:$0xff]
        %v1449 = vstv %s1443
        %v1450 = vmul.f32 %v1449, %v1445
        %v1451 = vmul.f32 %v1449, %v1446
        %v1452 = vmul.f32 %v1449, %v1447
        %v1453 = vmul.f32 %v1449, %v1448
        %v1454 = vadd.f32 %v1438, %v1450
        %v1455 = vadd.f32 %v1439, %v1451
        %v1456 = vadd.f32 %v1440, %v1452
        %v1457 = vadd.f32 %v1441, %v1453
        %s1458 = sadd.s32 %s1331, 8
        %s1459 = sld [smem:[#allocation3 + %s1458]]
        %s1460 = scalar_lea.vmem %s1036, 256 [#allocation8]
        %v1461 = vld [vmem:[%s1460] sm:$0xff]
        %v1462 = vld [vmem:[%s1460 + $0x8] sm:$0xff]
        %v1463 = vld [vmem:[%s1460 + $0x10] sm:$0xff]
        %v1464 = vld [vmem:[%s1460 + $0x18] sm:$0xff]
        %v1465 = vstv %s1459
        %v1466 = vmul.f32 %v1465, %v1461
        %v1467 = vmul.f32 %v1465, %v1462
        %v1468 = vmul.f32 %v1465, %v1463
        %v1469 = vmul.f32 %v1465, %v1464
        %v1470 = vadd.f32 %v1454, %v1466
        %v1471 = vadd.f32 %v1455, %v1467
        %v1472 = vadd.f32 %v1456, %v1468
        %v1473 = vadd.f32 %v1457, %v1469
        %s1474 = sadd.s32 %s1331, 9
        %s1475 = sld [smem:[#allocation3 + %s1474]]
        %s1476 = scalar_lea.vmem %s1036, 288 [#allocation8]
        %v1477 = vld [vmem:[%s1476] sm:$0xff]
        %v1478 = vld [vmem:[%s1476 + $0x8] sm:$0xff]
        %v1479 = vld [vmem:[%s1476 + $0x10] sm:$0xff]
        %v1480 = vld [vmem:[%s1476 + $0x18] sm:$0xff]
        %v1481 = vstv %s1475
        %v1482 = vmul.f32 %v1481, %v1477
        %v1483 = vmul.f32 %v1481, %v1478
        %v1484 = vmul.f32 %v1481, %v1479
        %v1485 = vmul.f32 %v1481, %v1480
        %v1486 = vadd.f32 %v1470, %v1482
        %v1487 = vadd.f32 %v1471, %v1483
        %v1488 = vadd.f32 %v1472, %v1484
        %v1489 = vadd.f32 %v1473, %v1485
        %s1490 = sadd.s32 %s1331, 10
        %s1491 = sld [smem:[#allocation3 + %s1490]]
        %s1492 = scalar_lea.vmem %s1036, 320 [#allocation8]
        %v1493 = vld [vmem:[%s1492] sm:$0xff]
        %v1494 = vld [vmem:[%s1492 + $0x8] sm:$0xff]
        %v1495 = vld [vmem:[%s1492 + $0x10] sm:$0xff]
        %v1496 = vld [vmem:[%s1492 + $0x18] sm:$0xff]
        %v1497 = vstv %s1491
        %v1498 = vmul.f32 %v1497, %v1493
        %v1499 = vmul.f32 %v1497, %v1494
        %v1500 = vmul.f32 %v1497, %v1495
        %v1501 = vmul.f32 %v1497, %v1496
        %v1502 = vadd.f32 %v1486, %v1498
        %v1503 = vadd.f32 %v1487, %v1499
        %v1504 = vadd.f32 %v1488, %v1500
        %v1505 = vadd.f32 %v1489, %v1501
        %s1506 = sadd.s32 %s1331, 11
        %s1507 = sld [smem:[#allocation3 + %s1506]]
        %s1508 = scalar_lea.vmem %s1036, 352 [#allocation8]
        %v1509 = vld [vmem:[%s1508] sm:$0xff]
        %v1510 = vld [vmem:[%s1508 + $0x8] sm:$0xff]
        %v1511 = vld [vmem:[%s1508 + $0x10] sm:$0xff]
        %v1512 = vld [vmem:[%s1508 + $0x18] sm:$0xff]
        %v1513 = vstv %s1507
        %v1514 = vmul.f32 %v1513, %v1509
        %v1515 = vmul.f32 %v1513, %v1510
        %v1516 = vmul.f32 %v1513, %v1511
        %v1517 = vmul.f32 %v1513, %v1512
        %v1518 = vadd.f32 %v1502, %v1514
        %v1519 = vadd.f32 %v1503, %v1515
        %v1520 = vadd.f32 %v1504, %v1516
        %v1521 = vadd.f32 %v1505, %v1517
        %s1522 = sadd.s32 %s1331, 12
        %s1523 = sld [smem:[#allocation3 + %s1522]]
        %s1524 = scalar_lea.vmem %s1036, 384 [#allocation8]
        %v1525 = vld [vmem:[%s1524] sm:$0xff]
        %v1526 = vld [vmem:[%s1524 + $0x8] sm:$0xff]
        %v1527 = vld [vmem:[%s1524 + $0x10] sm:$0xff]
        %v1528 = vld [vmem:[%s1524 + $0x18] sm:$0xff]
        %v1529 = vstv %s1523
        %v1530 = vmul.f32 %v1529, %v1525
        %v1531 = vmul.f32 %v1529, %v1526
        %v1532 = vmul.f32 %v1529, %v1527
        %v1533 = vmul.f32 %v1529, %v1528
        %v1534 = vadd.f32 %v1518, %v1530
        %v1535 = vadd.f32 %v1519, %v1531
        %v1536 = vadd.f32 %v1520, %v1532
        %v1537 = vadd.f32 %v1521, %v1533
        %s1538 = sadd.s32 %s1331, 13
        %s1539 = sld [smem:[#allocation3 + %s1538]]
        %s1540 = scalar_lea.vmem %s1036, 416 [#allocation8]
        %v1541 = vld [vmem:[%s1540] sm:$0xff]
        %v1542 = vld [vmem:[%s1540 + $0x8] sm:$0xff]
        %v1543 = vld [vmem:[%s1540 + $0x10] sm:$0xff]
        %v1544 = vld [vmem:[%s1540 + $0x18] sm:$0xff]
        %v1545 = vstv %s1539
        %v1546 = vmul.f32 %v1545, %v1541
        %v1547 = vmul.f32 %v1545, %v1542
        %v1548 = vmul.f32 %v1545, %v1543
        %v1549 = vmul.f32 %v1545, %v1544
        %v1550 = vadd.f32 %v1534, %v1546
        %v1551 = vadd.f32 %v1535, %v1547
        %v1552 = vadd.f32 %v1536, %v1548
        %v1553 = vadd.f32 %v1537, %v1549
        %s1554 = sadd.s32 %s1331, 14
        %s1555 = sld [smem:[#allocation3 + %s1554]]
        %s1556 = scalar_lea.vmem %s1036, 448 [#allocation8]
        %v1557 = vld [vmem:[%s1556] sm:$0xff]
        %v1558 = vld [vmem:[%s1556 + $0x8] sm:$0xff]
        %v1559 = vld [vmem:[%s1556 + $0x10] sm:$0xff]
        %v1560 = vld [vmem:[%s1556 + $0x18] sm:$0xff]
        %v1561 = vstv %s1555
        %v1562 = vmul.f32 %v1561, %v1557
        %v1563 = vmul.f32 %v1561, %v1558
        %v1564 = vmul.f32 %v1561, %v1559
        %v1565 = vmul.f32 %v1561, %v1560
        %v1566 = vadd.f32 %v1550, %v1562
        %v1567 = vadd.f32 %v1551, %v1563
        %v1568 = vadd.f32 %v1552, %v1564
        %v1569 = vadd.f32 %v1553, %v1565
        %s1570 = sadd.s32 %s1331, 15
        %s1571 = sld [smem:[#allocation3 + %s1570]]
        %s1572 = scalar_lea.vmem %s1036, 480 [#allocation8]
        %v1573 = vld [vmem:[%s1572] sm:$0xff]
        %v1574 = vld [vmem:[%s1572 + $0x8] sm:$0xff]
        %v1575 = vld [vmem:[%s1572 + $0x10] sm:$0xff]
        %v1576 = vld [vmem:[%s1572 + $0x18] sm:$0xff]
        %v1577 = vstv %s1571
        %v1578 = vmul.f32 %v1577, %v1573
        %v1579 = vmul.f32 %v1577, %v1574
        %v1580 = vmul.f32 %v1577, %v1575
        %v1581 = vmul.f32 %v1577, %v1576
        %v1582 = vadd.f32 %v1566, %v1578
        %v1583 = vadd.f32 %v1567, %v1579
        %v1584 = vadd.f32 %v1568, %v1580
        %v1585 = vadd.f32 %v1569, %v1581
        %v1586 = vld [vmem:[%s1062] sm:$0x1]
        %v1588 = vlaneseq
        %v1589 = vshrl.u32 %v1588, 7
        %v1590 = vsub.s32 0, %v1589
        %v1591 = vrot.slane %v1586, %v1590
        %vm1593 = vcmask 261120
        %v1595 = vsel %vm1593, %v1318, 0
        %1597 = vmatprep.subr.mxu0 0.0
        %1598 = vmatpush1.msra.mxu0 0.0
        %1599 = vmatprep.subr.mxu0 0.0
        %1600 = vmatpush1.msra.mxu0 0.0
        %1601 = vmatprep.subr.mxu0 0.0
        %1602 = vmatpush1.msra.mxu0 0.0
        %1603 = vmatprep.subr.mxu0 0.0
        %1604 = vmatpush1.msra.mxu0 0.0
        %1605 = vmatprep.subr.mxu0 0.0
        %1606 = vmatpush1.msra.mxu0 0.0
        %1607 = vmatprep.subr.mxu0 0.0
        %1608 = vmatpush1.msra.mxu0 0.0
        %1609 = vmatprep.subr.mxu0 0.0
        %1610 = vmatpush1.msra.mxu0 0.0
        %1611 = vmatprep.subr.mxu0 0.0
        %1612 = vmatpush1.msra.mxu0 0.0
        %1613 = vmatprep.subr.mxu0 0.0
        %1614 = vmatpush1.msra.mxu0 0.0
        %1615 = vmatprep.subr.mxu0 0.0
        %1616 = vmatpush1.msra.mxu0 0.0
        %1617 = vmatprep.subr.mxu0 0.0
        %1618 = vmatpush1.msra.mxu0 0.0
        %1619 = vmatprep.subr.mxu0 0.0
        %1620 = vmatpush1.msra.mxu0 0.0
        %1621 = vmatprep.subr.mxu0 0.0
        %1622 = vmatpush1.msra.mxu0 %v1585
        %1623 = vmatprep.subr.mxu0 0.0
        %1624 = vmatpush1.msra.mxu0 %v1584
        %1625 = vmatprep.subr.mxu0 0.0
        %1626 = vmatpush1.msra.mxu0 %v1583
        %1627 = vmatprep.subr.mxu0 0.0
        %1628 = vmatpush1.msra.mxu0 %v1582
        %1629 = vmatprep.subr.mxu0 0.0
        %1630 = vmatpush2.msra.mxu0 0.0
        %1631 = vmatprep.subr.mxu0 0.0
        %1632 = vmatpush2.msra.mxu0 0.0
        %1633 = vmatprep.subr.mxu0 0.0
        %1634 = vmatpush2.msra.mxu0 0.0
        %1635 = vmatprep.subr.mxu0 0.0
        %1636 = vmatpush2.msra.mxu0 0.0
        %1637 = vmatprep.subr.mxu0 0.0
        %1638 = vmatpush2.msra.mxu0 0.0
        %1639 = vmatprep.subr.mxu0 0.0
        %1640 = vmatpush2.msra.mxu0 0.0
        %1641 = vmatprep.subr.mxu0 0.0
        %1642 = vmatpush2.msra.mxu0 0.0
        %1643 = vmatprep.subr.mxu0 0.0
        %1644 = vmatpush2.msra.mxu0 0.0
        %1645 = vmatprep.subr.mxu0 0.0
        %1646 = vmatpush2.msra.mxu0 0.0
        %1647 = vmatprep.subr.mxu0 0.0
        %1648 = vmatpush2.msra.mxu0 0.0
        %1649 = vmatprep.subr.mxu0 0.0
        %1650 = vmatpush2.msra.mxu0 0.0
        %1651 = vmatprep.subr.mxu0 0.0
        %1652 = vmatpush2.msra.mxu0 0.0
        %1653 = vmatprep.subr.mxu0 0.0
        %1654 = vmatpush2.msra.mxu0 0.0
        %1655 = vmatprep.subr.mxu0 0.0
        %1656 = vmatpush2.msra.mxu0 0.0
        %1657 = vmatprep.subr.mxu0 0.0
        %1658 = vmatpush2.msra.mxu0 0.0
        %1659 = vmatprep.subr.mxu0 0.0
        %1660 = vmatpush2.msra.mxu0 0.0
        %1661 = vmatprep.mubr.f32.mxu0 0.0
        %1662 = vmatmul.mubr.f32.gmra.mxu0 %v1595
        %v1663 = vpop.f32.mrf.mxu0
        %v1664 = vadd.f32 %v1591, %v1663
        %v1665 = vpop.f32.mrf.mxu0
        %1666 = vdwg.mxu0
        %v1667 = vld [vmem:[%s1071] sm:$0xff]
        %v1668 = vld [vmem:[%s1071 + $0x8] sm:$0xff]
        %v1669 = vld [vmem:[%s1071 + $0x10] sm:$0xff]
        %v1670 = vld [vmem:[%s1071 + $0x18] sm:$0xff]
        %v1671 = vld [vmem:[%s1080] sm:$0x1]
        %v1673 = vlaneseq
        %v1674 = vshrl.u32 %v1673, 7
        %v1675 = vsub.s32 0, %v1674
        %v1676 = vrot.slane %v1671, %v1675
        %v1679 = vsel %vm1593, %v1664, 0
        %1681 = vmatprep.subr.mxu0 0.0
        %1682 = vmatpush1.msra.mxu0 0.0
        %1683 = vmatprep.subr.mxu0 0.0
        %1684 = vmatpush1.msra.mxu0 0.0
        %1685 = vmatprep.subr.mxu0 0.0
        %1686 = vmatpush1.msra.mxu0 0.0
        %1687 = vmatprep.subr.mxu0 0.0
        %1688 = vmatpush1.msra.mxu0 0.0
        %1689 = vmatprep.subr.mxu0 0.0
        %1690 = vmatpush1.msra.mxu0 0.0
        %1691 = vmatprep.subr.mxu0 0.0
        %1692 = vmatpush1.msra.mxu0 0.0
        %1693 = vmatprep.subr.mxu0 0.0
        %1694 = vmatpush1.msra.mxu0 0.0
        %1695 = vmatprep.subr.mxu0 0.0
        %1696 = vmatpush1.msra.mxu0 0.0
        %1697 = vmatprep.subr.mxu0 0.0
        %1698 = vmatpush1.msra.mxu0 0.0
        %1699 = vmatprep.subr.mxu0 0.0
        %1700 = vmatpush1.msra.mxu0 0.0
        %1701 = vmatprep.subr.mxu0 0.0
        %1702 = vmatpush1.msra.mxu0 0.0
        %1703 = vmatprep.subr.mxu0 0.0
        %1704 = vmatpush1.msra.mxu0 0.0
        %1705 = vmatprep.subr.mxu0 0.0
        %1706 = vmatpush1.msra.mxu0 %v1670
        %1707 = vmatprep.subr.mxu0 0.0
        %1708 = vmatpush1.msra.mxu0 %v1669
        %1709 = vmatprep.subr.mxu0 0.0
        %1710 = vmatpush1.msra.mxu0 %v1668
        %1711 = vmatprep.subr.mxu0 0.0
        %1712 = vmatpush1.msra.mxu0 %v1667
        %1713 = vmatprep.subr.mxu0 0.0
        %1714 = vmatpush2.msra.mxu0 0.0
        %1715 = vmatprep.subr.mxu0 0.0
        %1716 = vmatpush2.msra.mxu0 0.0
        %1717 = vmatprep.subr.mxu0 0.0
        %1718 = vmatpush2.msra.mxu0 0.0
        %1719 = vmatprep.subr.mxu0 0.0
        %1720 = vmatpush2.msra.mxu0 0.0
        %1721 = vmatprep.subr.mxu0 0.0
        %1722 = vmatpush2.msra.mxu0 0.0
        %1723 = vmatprep.subr.mxu0 0.0
        %1724 = vmatpush2.msra.mxu0 0.0
        %1725 = vmatprep.subr.mxu0 0.0
        %1726 = vmatpush2.msra.mxu0 0.0
        %1727 = vmatprep.subr.mxu0 0.0
        %1728 = vmatpush2.msra.mxu0 0.0
        %1729 = vmatprep.subr.mxu0 0.0
        %1730 = vmatpush2.msra.mxu0 0.0
        %1731 = vmatprep.subr.mxu0 0.0
        %1732 = vmatpush2.msra.mxu0 0.0
        %1733 = vmatprep.subr.mxu0 0.0
        %1734 = vmatpush2.msra.mxu0 0.0
        %1735 = vmatprep.subr.mxu0 0.0
        %1736 = vmatpush2.msra.mxu0 0.0
        %1737 = vmatprep.subr.mxu0 0.0
        %1738 = vmatpush2.msra.mxu0 0.0
        %1739 = vmatprep.subr.mxu0 0.0
        %1740 = vmatpush2.msra.mxu0 0.0
        %1741 = vmatprep.subr.mxu0 0.0
        %1742 = vmatpush2.msra.mxu0 0.0
        %1743 = vmatprep.subr.mxu0 0.0
        %1744 = vmatpush2.msra.mxu0 0.0
        %1745 = vmatprep.mubr.f32.mxu0 0.0
        %1746 = vmatmul.mubr.f32.gmra.mxu0 %v1679
        %v1747 = vpop.f32.mrf.mxu0
        %v1748 = vadd.f32 %v1676, %v1747
        %v1749 = vpop.f32.mrf.mxu0
        %1750 = vdwg.mxu0
        %v1751 = vld [vmem:[%s1089] sm:$0xff]
        %v1752 = vld [vmem:[%s1089 + $0x8] sm:$0xff]
        %v1753 = vld [vmem:[%s1089 + $0x10] sm:$0xff]
        %v1754 = vld [vmem:[%s1089 + $0x18] sm:$0xff]
        %v1755 = vld [vmem:[%s1291] sm:$0x1]
        %v1757 = vlaneseq
        %v1758 = vshrl.u32 %v1757, 7
        %v1759 = vsub.s32 0, %v1758
        %v1760 = vrot.slane %v1755, %v1759
        %1762 = vmatprep.subr.mxu0 0.0
        %1763 = vmatpush1.msra.mxu0 0.0
        %1764 = vmatprep.subr.mxu0 0.0
        %1765 = vmatpush1.msra.mxu0 0.0
        %1766 = vmatprep.subr.mxu0 0.0
        %1767 = vmatpush1.msra.mxu0 0.0
        %1768 = vmatprep.subr.mxu0 0.0
        %1769 = vmatpush1.msra.mxu0 0.0
        %1770 = vmatprep.subr.mxu0 0.0
        %1771 = vmatpush1.msra.mxu0 0.0
        %1772 = vmatprep.subr.mxu0 0.0
        %1773 = vmatpush1.msra.mxu0 0.0
        %1774 = vmatprep.subr.mxu0 0.0
        %1775 = vmatpush1.msra.mxu0 0.0
        %1776 = vmatprep.subr.mxu0 0.0
        %1777 = vmatpush1.msra.mxu0 0.0
        %1778 = vmatprep.subr.mxu0 0.0
        %1779 = vmatpush1.msra.mxu0 0.0
        %1780 = vmatprep.subr.mxu0 0.0
        %1781 = vmatpush1.msra.mxu0 0.0
        %1782 = vmatprep.subr.mxu0 0.0
        %1783 = vmatpush1.msra.mxu0 0.0
        %1784 = vmatprep.subr.mxu0 0.0
        %1785 = vmatpush1.msra.mxu0 0.0
        %1786 = vmatprep.subr.mxu0 0.0
        %1787 = vmatpush1.msra.mxu0 %v1754
        %1788 = vmatprep.subr.mxu0 0.0
        %1789 = vmatpush1.msra.mxu0 %v1753
        %1790 = vmatprep.subr.mxu0 0.0
        %1791 = vmatpush1.msra.mxu0 %v1752
        %1792 = vmatprep.subr.mxu0 0.0
        %1793 = vmatpush1.msra.mxu0 %v1751
        %1794 = vmatprep.subr.mxu0 0.0
        %1795 = vmatpush2.msra.mxu0 0.0
        %1796 = vmatprep.subr.mxu0 0.0
        %1797 = vmatpush2.msra.mxu0 0.0
        %1798 = vmatprep.subr.mxu0 0.0
        %1799 = vmatpush2.msra.mxu0 0.0
        %1800 = vmatprep.subr.mxu0 0.0
        %1801 = vmatpush2.msra.mxu0 0.0
        %1802 = vmatprep.subr.mxu0 0.0
        %1803 = vmatpush2.msra.mxu0 0.0
        %1804 = vmatprep.subr.mxu0 0.0
        %1805 = vmatpush2.msra.mxu0 0.0
        %1806 = vmatprep.subr.mxu0 0.0
        %1807 = vmatpush2.msra.mxu0 0.0
        %1808 = vmatprep.subr.mxu0 0.0
        %1809 = vmatpush2.msra.mxu0 0.0
        %1810 = vmatprep.subr.mxu0 0.0
        %1811 = vmatpush2.msra.mxu0 0.0
        %1812 = vmatprep.subr.mxu0 0.0
        %1813 = vmatpush2.msra.mxu0 0.0
        %1814 = vmatprep.subr.mxu0 0.0
        %1815 = vmatpush2.msra.mxu0 0.0
        %1816 = vmatprep.subr.mxu0 0.0
        %1817 = vmatpush2.msra.mxu0 0.0
        %1818 = vmatprep.subr.mxu0 0.0
        %1819 = vmatpush2.msra.mxu0 0.0
        %1820 = vmatprep.subr.mxu0 0.0
        %1821 = vmatpush2.msra.mxu0 0.0
        %1822 = vmatprep.subr.mxu0 0.0
        %1823 = vmatpush2.msra.mxu0 0.0
        %1824 = vmatprep.subr.mxu0 0.0
        %1825 = vmatpush2.msra.mxu0 0.0
        %1826 = vmatprep.mubr.f32.mxu0 0.0
        %1827 = vmatmul.mubr.f32.gmra.mxu0 %v1679
        %v1828 = vpop.f32.mrf.mxu0
        %v1829 = vadd.f32 %v1760, %v1828
        %v1830 = vpop.f32.mrf.mxu0
        %1831 = vdwg.mxu0
        %v1832 = vld [vmem:[%s1098] sm:$0xff]
        %v1833 = vld [vmem:[%s1098 + $0x8] sm:$0xff]
        %v1834 = vld [vmem:[%s1098 + $0x10] sm:$0xff]
        %v1835 = vld [vmem:[%s1098 + $0x18] sm:$0xff]
        %v1836 = vld [vmem:[%s1295] sm:$0x1]
        %v1838 = vlaneseq
        %v1839 = vshrl.u32 %v1838, 7
        %v1840 = vsub.s32 0, %v1839
        %v1841 = vrot.slane %v1836, %v1840
        %1843 = vmatprep.subr.mxu0 0.0
        %1844 = vmatpush1.msra.mxu0 0.0
        %1845 = vmatprep.subr.mxu0 0.0
        %1846 = vmatpush1.msra.mxu0 0.0
        %1847 = vmatprep.subr.mxu0 0.0
        %1848 = vmatpush1.msra.mxu0 0.0
        %1849 = vmatprep.subr.mxu0 0.0
        %1850 = vmatpush1.msra.mxu0 0.0
        %1851 = vmatprep.subr.mxu0 0.0
        %1852 = vmatpush1.msra.mxu0 0.0
        %1853 = vmatprep.subr.mxu0 0.0
        %1854 = vmatpush1.msra.mxu0 0.0
        %1855 = vmatprep.subr.mxu0 0.0
        %1856 = vmatpush1.msra.mxu0 0.0
        %1857 = vmatprep.subr.mxu0 0.0
        %1858 = vmatpush1.msra.mxu0 0.0
        %1859 = vmatprep.subr.mxu0 0.0
        %1860 = vmatpush1.msra.mxu0 0.0
        %1861 = vmatprep.subr.mxu0 0.0
        %1862 = vmatpush1.msra.mxu0 0.0
        %1863 = vmatprep.subr.mxu0 0.0
        %1864 = vmatpush1.msra.mxu0 0.0
        %1865 = vmatprep.subr.mxu0 0.0
        %1866 = vmatpush1.msra.mxu0 0.0
        %1867 = vmatprep.subr.mxu0 0.0
        %1868 = vmatpush1.msra.mxu0 %v1835
        %1869 = vmatprep.subr.mxu0 0.0
        %1870 = vmatpush1.msra.mxu0 %v1834
        %1871 = vmatprep.subr.mxu0 0.0
        %1872 = vmatpush1.msra.mxu0 %v1833
        %1873 = vmatprep.subr.mxu0 0.0
        %1874 = vmatpush1.msra.mxu0 %v1832
        %1875 = vmatprep.subr.mxu0 0.0
        %1876 = vmatpush2.msra.mxu0 0.0
        %1877 = vmatprep.subr.mxu0 0.0
        %1878 = vmatpush2.msra.mxu0 0.0
        %1879 = vmatprep.subr.mxu0 0.0
        %1880 = vmatpush2.msra.mxu0 0.0
        %1881 = vmatprep.subr.mxu0 0.0
        %1882 = vmatpush2.msra.mxu0 0.0
        %1883 = vmatprep.subr.mxu0 0.0
        %1884 = vmatpush2.msra.mxu0 0.0
        %1885 = vmatprep.subr.mxu0 0.0
        %1886 = vmatpush2.msra.mxu0 0.0
        %1887 = vmatprep.subr.mxu0 0.0
        %1888 = vmatpush2.msra.mxu0 0.0
        %1889 = vmatprep.subr.mxu0 0.0
        %1890 = vmatpush2.msra.mxu0 0.0
        %1891 = vmatprep.subr.mxu0 0.0
        %1892 = vmatpush2.msra.mxu0 0.0
        %1893 = vmatprep.subr.mxu0 0.0
        %1894 = vmatpush2.msra.mxu0 0.0
        %1895 = vmatprep.subr.mxu0 0.0
        %1896 = vmatpush2.msra.mxu0 0.0
        %1897 = vmatprep.subr.mxu0 0.0
        %1898 = vmatpush2.msra.mxu0 0.0
        %1899 = vmatprep.subr.mxu0 0.0
        %1900 = vmatpush2.msra.mxu0 0.0
        %1901 = vmatprep.subr.mxu0 0.0
        %1902 = vmatpush2.msra.mxu0 0.0
        %1903 = vmatprep.subr.mxu0 0.0
        %1904 = vmatpush2.msra.mxu0 0.0
        %1905 = vmatprep.subr.mxu0 0.0
        %1906 = vmatpush2.msra.mxu0 0.0
        %1907 = vmatprep.mubr.f32.mxu0 0.0
        %1908 = vmatmul.mubr.f32.gmra.mxu0 %v1679
        %v1909 = vpop.f32.mrf.mxu0
        %v1910 = vadd.f32 %v1841, %v1909
        %v1911 = vpop.f32.mrf.mxu0
        %1912 = vdwg.mxu0
        %vm1913 = vcmask 64512
        %v1915 = vsel %vm1913, %v1748, 0
        %v1918 = vsel %vm1913, %v1829, 0
        %1920 = vmatprep.subr.mxu0 0.0
        %1921 = vmatpush1.xpose.msra.mxu0 0.0
        %1922 = vmatprep.subr.mxu0 0.0
        %1923 = vmatpush1.xpose.msra.mxu0 0.0
        %1924 = vmatprep.subr.mxu0 0.0
        %1925 = vmatpush1.xpose.msra.mxu0 0.0
        %1926 = vmatprep.subr.mxu0 0.0
        %1927 = vmatpush1.xpose.msra.mxu0 0.0
        %1928 = vmatprep.subr.mxu0 0.0
        %1929 = vmatpush1.xpose.msra.mxu0 0.0
        %1930 = vmatprep.subr.mxu0 0.0
        %1931 = vmatpush1.xpose.msra.mxu0 0.0
        %1932 = vmatprep.subr.mxu0 0.0
        %1933 = vmatpush1.xpose.msra.mxu0 0.0
        %1934 = vmatprep.subr.mxu0 0.0
        %1935 = vmatpush1.xpose.msra.mxu0 0.0
        %1936 = vmatprep.subr.mxu0 0.0
        %1937 = vmatpush1.xpose.msra.mxu0 0.0
        %1938 = vmatprep.subr.mxu0 0.0
        %1939 = vmatpush1.xpose.msra.mxu0 0.0
        %1940 = vmatprep.subr.mxu0 0.0
        %1941 = vmatpush1.xpose.msra.mxu0 0.0
        %1942 = vmatprep.subr.mxu0 0.0
        %1943 = vmatpush1.xpose.msra.mxu0 0.0
        %1944 = vmatprep.subr.mxu0 0.0
        %1945 = vmatpush1.xpose.msra.mxu0 0.0
        %1946 = vmatprep.subr.mxu0 0.0
        %1947 = vmatpush1.xpose.msra.mxu0 0.0
        %1948 = vmatprep.subr.mxu0 0.0
        %1949 = vmatpush1.xpose.msra.mxu0 0.0
        %1950 = vmatprep.subr.mxu0 0.0
        %1951 = vmatpush1.xpose.msra.mxu0 %v1918
        %1952 = vmatprep.subr.mxu0 0.0
        %1953 = vmatpush2.xpose.msra.mxu0 0.0
        %1954 = vmatprep.subr.mxu0 0.0
        %1955 = vmatpush2.xpose.msra.mxu0 0.0
        %1956 = vmatprep.subr.mxu0 0.0
        %1957 = vmatpush2.xpose.msra.mxu0 0.0
        %1958 = vmatprep.subr.mxu0 0.0
        %1959 = vmatpush2.xpose.msra.mxu0 0.0
        %1960 = vmatprep.subr.mxu0 0.0
        %1961 = vmatpush2.xpose.msra.mxu0 0.0
        %1962 = vmatprep.subr.mxu0 0.0
        %1963 = vmatpush2.xpose.msra.mxu0 0.0
        %1964 = vmatprep.subr.mxu0 0.0
        %1965 = vmatpush2.xpose.msra.mxu0 0.0
        %1966 = vmatprep.subr.mxu0 0.0
        %1967 = vmatpush2.xpose.msra.mxu0 0.0
        %1968 = vmatprep.subr.mxu0 0.0
        %1969 = vmatpush2.xpose.msra.mxu0 0.0
        %1970 = vmatprep.subr.mxu0 0.0
        %1971 = vmatpush2.xpose.msra.mxu0 0.0
        %1972 = vmatprep.subr.mxu0 0.0
        %1973 = vmatpush2.xpose.msra.mxu0 0.0
        %1974 = vmatprep.subr.mxu0 0.0
        %1975 = vmatpush2.xpose.msra.mxu0 0.0
        %1976 = vmatprep.subr.mxu0 0.0
        %1977 = vmatpush2.xpose.msra.mxu0 0.0
        %1978 = vmatprep.subr.mxu0 0.0
        %1979 = vmatpush2.xpose.msra.mxu0 0.0
        %1980 = vmatprep.subr.mxu0 0.0
        %1981 = vmatpush2.xpose.msra.mxu0 0.0
        %1982 = vmatprep.subr.mxu0 0.0
        %1983 = vmatpush2.xpose.msra.mxu0 0.0
        %1984 = vmatprep.mubr.f32.mxu0 0.0
        %1985 = vmatmul.mubr.f32.gmra.mxu0 %v1915
        %v1986 = vpop.f32.mrf.mxu0
        %v1987 = vadd.f32 0.0, %v1986
        %v1988 = vpop.f32.mrf.mxu0
        %1989 = vdwg.mxu0
        %v1990 = vmul.f32 %v1987, 0.35355338
        %v1991 = vsel %vm1913, %v1990, -inf
        %1992 = vmax.xlane.f32.xlu0 %v1991
        %v1993 = vpop.xlane.xlu0 %1992
        %v1994 = vsub.f32 %v1990, %v1993
        %v1995 = vmul.f32 %v1994, 1.442695
        %v1996 = vpow.pop %v1995
        %v1997 = vsel %vm1913, %v1996, 0.0
        %1998 = vadd.xlane.f32.xlu0 %v1997
        %v1999 = vpop.xlane.xlu0 %1998
        %v2000 = vrcp.pop %v1999
        %v2001 = vmul.f32 %v1996, %v2000
        %v2003 = vsel %vm1913, %v2001, 0
        %2005 = vmatprep.subr.mxu0 0.0
        %2006 = vmatpush1.msra.mxu0 0.0
        %2007 = vmatprep.subr.mxu0 0.0
        %2008 = vmatpush1.msra.mxu0 0.0
        %2009 = vmatprep.subr.mxu0 0.0
        %2010 = vmatpush1.msra.mxu0 0.0
        %2011 = vmatprep.subr.mxu0 0.0
        %2012 = vmatpush1.msra.mxu0 0.0
        %2013 = vmatprep.subr.mxu0 0.0
        %2014 = vmatpush1.msra.mxu0 0.0
        %2015 = vmatprep.subr.mxu0 0.0
        %2016 = vmatpush1.msra.mxu0 0.0
        %2017 = vmatprep.subr.mxu0 0.0
        %2018 = vmatpush1.msra.mxu0 0.0
        %2019 = vmatprep.subr.mxu0 0.0
        %2020 = vmatpush1.msra.mxu0 0.0
        %2021 = vmatprep.subr.mxu0 0.0
        %2022 = vmatpush1.msra.mxu0 0.0
        %2023 = vmatprep.subr.mxu0 0.0
        %2024 = vmatpush1.msra.mxu0 0.0
        %2025 = vmatprep.subr.mxu0 0.0
        %2026 = vmatpush1.msra.mxu0 0.0
        %2027 = vmatprep.subr.mxu0 0.0
        %2028 = vmatpush1.msra.mxu0 0.0
        %2029 = vmatprep.subr.mxu0 0.0
        %2030 = vmatpush1.msra.mxu0 0.0
        %2031 = vmatprep.subr.mxu0 0.0
        %2032 = vmatpush1.msra.mxu0 0.0
        %2033 = vmatprep.subr.mxu0 0.0
        %2034 = vmatpush1.msra.mxu0 0.0
        %2035 = vmatprep.subr.mxu0 0.0
        %2036 = vmatpush1.msra.mxu0 %v1910
        %2037 = vmatprep.subr.mxu0 0.0
        %2038 = vmatpush2.msra.mxu0 0.0
        %2039 = vmatprep.subr.mxu0 0.0
        %2040 = vmatpush2.msra.mxu0 0.0
        %2041 = vmatprep.subr.mxu0 0.0
        %2042 = vmatpush2.msra.mxu0 0.0
        %2043 = vmatprep.subr.mxu0 0.0
        %2044 = vmatpush2.msra.mxu0 0.0
        %2045 = vmatprep.subr.mxu0 0.0
        %2046 = vmatpush2.msra.mxu0 0.0
        %2047 = vmatprep.subr.mxu0 0.0
        %2048 = vmatpush2.msra.mxu0 0.0
        %2049 = vmatprep.subr.mxu0 0.0
        %2050 = vmatpush2.msra.mxu0 0.0
        %2051 = vmatprep.subr.mxu0 0.0
        %2052 = vmatpush2.msra.mxu0 0.0
        %2053 = vmatprep.subr.mxu0 0.0
        %2054 = vmatpush2.msra.mxu0 0.0
        %2055 = vmatprep.subr.mxu0 0.0
        %2056 = vmatpush2.msra.mxu0 0.0
        %2057 = vmatprep.subr.mxu0 0.0
        %2058 = vmatpush2.msra.mxu0 0.0
        %2059 = vmatprep.subr.mxu0 0.0
        %2060 = vmatpush2.msra.mxu0 0.0
        %2061 = vmatprep.subr.mxu0 0.0
        %2062 = vmatpush2.msra.mxu0 0.0
        %2063 = vmatprep.subr.mxu0 0.0
        %2064 = vmatpush2.msra.mxu0 0.0
        %2065 = vmatprep.subr.mxu0 0.0
        %2066 = vmatpush2.msra.mxu0 0.0
        %2067 = vmatprep.subr.mxu0 0.0
        %2068 = vmatpush2.msra.mxu0 0.0
        %2069 = vmatprep.mubr.f32.mxu0 0.0
        %2070 = vmatmul.mubr.f32.gmra.mxu0 %v2003
        %v2071 = vpop.f32.mrf.mxu0
        %v2072 = vadd.f32 0.0, %v2071
        %v2073 = vpop.f32.mrf.mxu0
        %2074 = vdwg.mxu0
        %v2075 = vld [vmem:[%s1107] sm:$0xff]
        %s2076 = scalar_lea.vmem %s1071, 32 [#allocation14]
        %v2077 = vld [vmem:[%s2076] sm:$0xff]
        %v2078 = vld [vmem:[%s2076 + $0x8] sm:$0xff]
        %v2079 = vld [vmem:[%s2076 + $0x10] sm:$0xff]
        %v2080 = vld [vmem:[%s2076 + $0x18] sm:$0xff]
        %s2081 = scalar_lea.vmem %s1080, 1 [#allocation16]
        %v2082 = vld [vmem:[%s2081] sm:$0x1]
        %v2084 = vlaneseq
        %v2085 = vshrl.u32 %v2084, 7
        %v2086 = vsub.s32 0, %v2085
        %v2087 = vrot.slane %v2082, %v2086
        %2089 = vmatprep.subr.mxu0 0.0
        %2090 = vmatpush1.msra.mxu0 0.0
        %2091 = vmatprep.subr.mxu0 0.0
        %2092 = vmatpush1.msra.mxu0 0.0
        %2093 = vmatprep.subr.mxu0 0.0
        %2094 = vmatpush1.msra.mxu0 0.0
        %2095 = vmatprep.subr.mxu0 0.0
        %2096 = vmatpush1.msra.mxu0 0.0
        %2097 = vmatprep.subr.mxu0 0.0
        %2098 = vmatpush1.msra.mxu0 0.0
        %2099 = vmatprep.subr.mxu0 0.0
        %2100 = vmatpush1.msra.mxu0 0.0
        %2101 = vmatprep.subr.mxu0 0.0
        %2102 = vmatpush1.msra.mxu0 0.0
        %2103 = vmatprep.subr.mxu0 0.0
        %2104 = vmatpush1.msra.mxu0 0.0
        %2105 = vmatprep.subr.mxu0 0.0
        %2106 = vmatpush1.msra.mxu0 0.0
        %2107 = vmatprep.subr.mxu0 0.0
        %2108 = vmatpush1.msra.mxu0 0.0
        %2109 = vmatprep.subr.mxu0 0.0
        %2110 = vmatpush1.msra.mxu0 0.0
        %2111 = vmatprep.subr.mxu0 0.0
        %2112 = vmatpush1.msra.mxu0 0.0
        %2113 = vmatprep.subr.mxu0 0.0
        %2114 = vmatpush1.msra.mxu0 %v2080
        %2115 = vmatprep.subr.mxu0 0.0
        %2116 = vmatpush1.msra.mxu0 %v2079
        %2117 = vmatprep.subr.mxu0 0.0
        %2118 = vmatpush1.msra.mxu0 %v2078
        %2119 = vmatprep.subr.mxu0 0.0
        %2120 = vmatpush1.msra.mxu0 %v2077
        %2121 = vmatprep.subr.mxu0 0.0
        %2122 = vmatpush2.msra.mxu0 0.0
        %2123 = vmatprep.subr.mxu0 0.0
        %2124 = vmatpush2.msra.mxu0 0.0
        %2125 = vmatprep.subr.mxu0 0.0
        %2126 = vmatpush2.msra.mxu0 0.0
        %2127 = vmatprep.subr.mxu0 0.0
        %2128 = vmatpush2.msra.mxu0 0.0
        %2129 = vmatprep.subr.mxu0 0.0
        %2130 = vmatpush2.msra.mxu0 0.0
        %2131 = vmatprep.subr.mxu0 0.0
        %2132 = vmatpush2.msra.mxu0 0.0
        %2133 = vmatprep.subr.mxu0 0.0
        %2134 = vmatpush2.msra.mxu0 0.0
        %2135 = vmatprep.subr.mxu0 0.0
        %2136 = vmatpush2.msra.mxu0 0.0
        %2137 = vmatprep.subr.mxu0 0.0
        %2138 = vmatpush2.msra.mxu0 0.0
        %2139 = vmatprep.subr.mxu0 0.0
        %2140 = vmatpush2.msra.mxu0 0.0
        %2141 = vmatprep.subr.mxu0 0.0
        %2142 = vmatpush2.msra.mxu0 0.0
        %2143 = vmatprep.subr.mxu0 0.0
        %2144 = vmatpush2.msra.mxu0 0.0
        %2145 = vmatprep.subr.mxu0 0.0
        %2146 = vmatpush2.msra.mxu0 0.0
        %2147 = vmatprep.subr.mxu0 0.0
        %2148 = vmatpush2.msra.mxu0 0.0
        %2149 = vmatprep.subr.mxu0 0.0
        %2150 = vmatpush2.msra.mxu0 0.0
        %2151 = vmatprep.subr.mxu0 0.0
        %2152 = vmatpush2.msra.mxu0 0.0
        %2153 = vmatprep.mubr.f32.mxu0 0.0
        %2154 = vmatmul.mubr.f32.gmra.mxu0 %v1679
        %v2155 = vpop.f32.mrf.mxu0
        %v2156 = vadd.f32 %v2087, %v2155
        %v2157 = vpop.f32.mrf.mxu0
        %2158 = vdwg.mxu0
        %s2159 = scalar_lea.vmem %s1089, 32 [#allocation17]
        %v2160 = vld [vmem:[%s2159] sm:$0xff]
        %v2161 = vld [vmem:[%s2159 + $0x8] sm:$0xff]
        %v2162 = vld [vmem:[%s2159 + $0x10] sm:$0xff]
        %v2163 = vld [vmem:[%s2159 + $0x18] sm:$0xff]
        %s2164 = scalar_lea.vmem %s1291, 1
        %v2165 = vld [vmem:[%s2164] sm:$0x1]
        %v2167 = vlaneseq
        %v2168 = vshrl.u32 %v2167, 7
        %v2169 = vsub.s32 0, %v2168
        %v2170 = vrot.slane %v2165, %v2169
        %2172 = vmatprep.subr.mxu0 0.0
        %2173 = vmatpush1.msra.mxu0 0.0
        %2174 = vmatprep.subr.mxu0 0.0
        %2175 = vmatpush1.msra.mxu0 0.0
        %2176 = vmatprep.subr.mxu0 0.0
        %2177 = vmatpush1.msra.mxu0 0.0
        %2178 = vmatprep.subr.mxu0 0.0
        %2179 = vmatpush1.msra.mxu0 0.0
        %2180 = vmatprep.subr.mxu0 0.0
        %2181 = vmatpush1.msra.mxu0 0.0
        %2182 = vmatprep.subr.mxu0 0.0
        %2183 = vmatpush1.msra.mxu0 0.0
        %2184 = vmatprep.subr.mxu0 0.0
        %2185 = vmatpush1.msra.mxu0 0.0
        %2186 = vmatprep.subr.mxu0 0.0
        %2187 = vmatpush1.msra.mxu0 0.0
        %2188 = vmatprep.subr.mxu0 0.0
        %2189 = vmatpush1.msra.mxu0 0.0
        %2190 = vmatprep.subr.mxu0 0.0
        %2191 = vmatpush1.msra.mxu0 0.0
        %2192 = vmatprep.subr.mxu0 0.0
        %2193 = vmatpush1.msra.mxu0 0.0
        %2194 = vmatprep.subr.mxu0 0.0
        %2195 = vmatpush1.msra.mxu0 0.0
        %2196 = vmatprep.subr.mxu0 0.0
        %2197 = vmatpush1.msra.mxu0 %v2163
        %2198 = vmatprep.subr.mxu0 0.0
        %2199 = vmatpush1.msra.mxu0 %v2162
        %2200 = vmatprep.subr.mxu0 0.0
        %2201 = vmatpush1.msra.mxu0 %v2161
        %2202 = vmatprep.subr.mxu0 0.0
        %2203 = vmatpush1.msra.mxu0 %v2160
        %2204 = vmatprep.subr.mxu0 0.0
        %2205 = vmatpush2.msra.mxu0 0.0
        %2206 = vmatprep.subr.mxu0 0.0
        %2207 = vmatpush2.msra.mxu0 0.0
        %2208 = vmatprep.subr.mxu0 0.0
        %2209 = vmatpush2.msra.mxu0 0.0
        %2210 = vmatprep.subr.mxu0 0.0
        %2211 = vmatpush2.msra.mxu0 0.0
        %2212 = vmatprep.subr.mxu0 0.0
        %2213 = vmatpush2.msra.mxu0 0.0
        %2214 = vmatprep.subr.mxu0 0.0
        %2215 = vmatpush2.msra.mxu0 0.0
        %2216 = vmatprep.subr.mxu0 0.0
        %2217 = vmatpush2.msra.mxu0 0.0
        %2218 = vmatprep.subr.mxu0 0.0
        %2219 = vmatpush2.msra.mxu0 0.0
        %2220 = vmatprep.subr.mxu0 0.0
        %2221 = vmatpush2.msra.mxu0 0.0
        %2222 = vmatprep.subr.mxu0 0.0
        %2223 = vmatpush2.msra.mxu0 0.0
        %2224 = vmatprep.subr.mxu0 0.0
        %2225 = vmatpush2.msra.mxu0 0.0
        %2226 = vmatprep.subr.mxu0 0.0
        %2227 = vmatpush2.msra.mxu0 0.0
        %2228 = vmatprep.subr.mxu0 0.0
        %2229 = vmatpush2.msra.mxu0 0.0
        %2230 = vmatprep.subr.mxu0 0.0
        %2231 = vmatpush2.msra.mxu0 0.0
        %2232 = vmatprep.subr.mxu0 0.0
        %2233 = vmatpush2.msra.mxu0 0.0
        %2234 = vmatprep.subr.mxu0 0.0
        %2235 = vmatpush2.msra.mxu0 0.0
        %2236 = vmatprep.mubr.f32.mxu0 0.0
        %2237 = vmatmul.mubr.f32.gmra.mxu0 %v1679
        %v2238 = vpop.f32.mrf.mxu0
        %v2239 = vadd.f32 %v2170, %v2238
        %v2240 = vpop.f32.mrf.mxu0
        %2241 = vdwg.mxu0
        %s2242 = scalar_lea.vmem %s1098, 32 [#allocation19]
        %v2243 = vld [vmem:[%s2242] sm:$0xff]
        %v2244 = vld [vmem:[%s2242 + $0x8] sm:$0xff]
        %v2245 = vld [vmem:[%s2242 + $0x10] sm:$0xff]
        %v2246 = vld [vmem:[%s2242 + $0x18] sm:$0xff]
        %s2247 = scalar_lea.vmem %s1295, 1
        %v2248 = vld [vmem:[%s2247] sm:$0x1]
        %v2250 = vlaneseq
        %v2251 = vshrl.u32 %v2250, 7
        %v2252 = vsub.s32 0, %v2251
        %v2253 = vrot.slane %v2248, %v2252
        %2255 = vmatprep.subr.mxu0 0.0
        %2256 = vmatpush1.msra.mxu0 0.0
        %2257 = vmatprep.subr.mxu0 0.0
        %2258 = vmatpush1.msra.mxu0 0.0
        %2259 = vmatprep.subr.mxu0 0.0
        %2260 = vmatpush1.msra.mxu0 0.0
        %2261 = vmatprep.subr.mxu0 0.0
        %2262 = vmatpush1.msra.mxu0 0.0
        %2263 = vmatprep.subr.mxu0 0.0
        %2264 = vmatpush1.msra.mxu0 0.0
        %2265 = vmatprep.subr.mxu0 0.0
        %2266 = vmatpush1.msra.mxu0 0.0
        %2267 = vmatprep.subr.mxu0 0.0
        %2268 = vmatpush1.msra.mxu0 0.0
        %2269 = vmatprep.subr.mxu0 0.0
        %2270 = vmatpush1.msra.mxu0 0.0
        %2271 = vmatprep.subr.mxu0 0.0
        %2272 = vmatpush1.msra.mxu0 0.0
        %2273 = vmatprep.subr.mxu0 0.0
        %2274 = vmatpush1.msra.mxu0 0.0
        %2275 = vmatprep.subr.mxu0 0.0
        %2276 = vmatpush1.msra.mxu0 0.0
        %2277 = vmatprep.subr.mxu0 0.0
        %2278 = vmatpush1.msra.mxu0 0.0
        %2279 = vmatprep.subr.mxu0 0.0
        %2280 = vmatpush1.msra.mxu0 %v2246
        %2281 = vmatprep.subr.mxu0 0.0
        %2282 = vmatpush1.msra.mxu0 %v2245
        %2283 = vmatprep.subr.mxu0 0.0
        %2284 = vmatpush1.msra.mxu0 %v2244
        %2285 = vmatprep.subr.mxu0 0.0
        %2286 = vmatpush1.msra.mxu0 %v2243
        %2287 = vmatprep.subr.mxu0 0.0
        %2288 = vmatpush2.msra.mxu0 0.0
        %2289 = vmatprep.subr.mxu0 0.0
        %2290 = vmatpush2.msra.mxu0 0.0
        %2291 = vmatprep.subr.mxu0 0.0
        %2292 = vmatpush2.msra.mxu0 0.0
        %2293 = vmatprep.subr.mxu0 0.0
        %2294 = vmatpush2.msra.mxu0 0.0
        %2295 = vmatprep.subr.mxu0 0.0
        %2296 = vmatpush2.msra.mxu0 0.0
        %2297 = vmatprep.subr.mxu0 0.0
        %2298 = vmatpush2.msra.mxu0 0.0
        %2299 = vmatprep.subr.mxu0 0.0
        %2300 = vmatpush2.msra.mxu0 0.0
        %2301 = vmatprep.subr.mxu0 0.0
        %2302 = vmatpush2.msra.mxu0 0.0
        %2303 = vmatprep.subr.mxu0 0.0
        %2304 = vmatpush2.msra.mxu0 0.0
        %2305 = vmatprep.subr.mxu0 0.0
        %2306 = vmatpush2.msra.mxu0 0.0
        %2307 = vmatprep.subr.mxu0 0.0
        %2308 = vmatpush2.msra.mxu0 0.0
        %2309 = vmatprep.subr.mxu0 0.0
        %2310 = vmatpush2.msra.mxu0 0.0
        %2311 = vmatprep.subr.mxu0 0.0
        %2312 = vmatpush2.msra.mxu0 0.0
        %2313 = vmatprep.subr.mxu0 0.0
        %2314 = vmatpush2.msra.mxu0 0.0
        %2315 = vmatprep.subr.mxu0 0.0
        %2316 = vmatpush2.msra.mxu0 0.0
        %2317 = vmatprep.subr.mxu0 0.0
        %2318 = vmatpush2.msra.mxu0 0.0
        %2319 = vmatprep.mubr.f32.mxu0 0.0
        %2320 = vmatmul.mubr.f32.gmra.mxu0 %v1679
        %v2321 = vpop.f32.mrf.mxu0
        %v2322 = vadd.f32 %v2253, %v2321
        %v2323 = vpop.f32.mrf.mxu0
        %2324 = vdwg.mxu0
        %v2326 = vsel %vm1913, %v2156, 0
        %v2329 = vsel %vm1913, %v2239, 0
        %2331 = vmatprep.subr.mxu0 0.0
        %2332 = vmatpush1.xpose.msra.mxu0 0.0
        %2333 = vmatprep.subr.mxu0 0.0
        %2334 = vmatpush1.xpose.msra.mxu0 0.0
        %2335 = vmatprep.subr.mxu0 0.0
        %2336 = vmatpush1.xpose.msra.mxu0 0.0
        %2337 = vmatprep.subr.mxu0 0.0
        %2338 = vmatpush1.xpose.msra.mxu0 0.0
        %2339 = vmatprep.subr.mxu0 0.0
        %2340 = vmatpush1.xpose.msra.mxu0 0.0
        %2341 = vmatprep.subr.mxu0 0.0
        %2342 = vmatpush1.xpose.msra.mxu0 0.0
        %2343 = vmatprep.subr.mxu0 0.0
        %2344 = vmatpush1.xpose.msra.mxu0 0.0
        %2345 = vmatprep.subr.mxu0 0.0
        %2346 = vmatpush1.xpose.msra.mxu0 0.0
        %2347 = vmatprep.subr.mxu0 0.0
        %2348 = vmatpush1.xpose.msra.mxu0 0.0
        %2349 = vmatprep.subr.mxu0 0.0
        %2350 = vmatpush1.xpose.msra.mxu0 0.0
        %2351 = vmatprep.subr.mxu0 0.0
        %2352 = vmatpush1.xpose.msra.mxu0 0.0
        %2353 = vmatprep.subr.mxu0 0.0
        %2354 = vmatpush1.xpose.msra.mxu0 0.0
        %2355 = vmatprep.subr.mxu0 0.0
        %2356 = vmatpush1.xpose.msra.mxu0 0.0
        %2357 = vmatprep.subr.mxu0 0.0
        %2358 = vmatpush1.xpose.msra.mxu0 0.0
        %2359 = vmatprep.subr.mxu0 0.0
        %2360 = vmatpush1.xpose.msra.mxu0 0.0
        %2361 = vmatprep.subr.mxu0 0.0
        %2362 = vmatpush1.xpose.msra.mxu0 %v2329
        %2363 = vmatprep.subr.mxu0 0.0
        %2364 = vmatpush2.xpose.msra.mxu0 0.0
        %2365 = vmatprep.subr.mxu0 0.0
        %2366 = vmatpush2.xpose.msra.mxu0 0.0
        %2367 = vmatprep.subr.mxu0 0.0
        %2368 = vmatpush2.xpose.msra.mxu0 0.0
        %2369 = vmatprep.subr.mxu0 0.0
        %2370 = vmatpush2.xpose.msra.mxu0 0.0
        %2371 = vmatprep.subr.mxu0 0.0
        %2372 = vmatpush2.xpose.msra.mxu0 0.0
        %2373 = vmatprep.subr.mxu0 0.0
        %2374 = vmatpush2.xpose.msra.mxu0 0.0
        %2375 = vmatprep.subr.mxu0 0.0
        %2376 = vmatpush2.xpose.msra.mxu0 0.0
        %2377 = vmatprep.subr.mxu0 0.0
        %2378 = vmatpush2.xpose.msra.mxu0 0.0
        %2379 = vmatprep.subr.mxu0 0.0
        %2380 = vmatpush2.xpose.msra.mxu0 0.0
        %2381 = vmatprep.subr.mxu0 0.0
        %2382 = vmatpush2.xpose.msra.mxu0 0.0
        %2383 = vmatprep.subr.mxu0 0.0
        %2384 = vmatpush2.xpose.msra.mxu0 0.0
        %2385 = vmatprep.subr.mxu0 0.0
        %2386 = vmatpush2.xpose.msra.mxu0 0.0
        %2387 = vmatprep.subr.mxu0 0.0
        %2388 = vmatpush2.xpose.msra.mxu0 0.0
        %2389 = vmatprep.subr.mxu0 0.0
        %2390 = vmatpush2.xpose.msra.mxu0 0.0
        %2391 = vmatprep.subr.mxu0 0.0
        %2392 = vmatpush2.xpose.msra.mxu0 0.0
        %2393 = vmatprep.subr.mxu0 0.0
        %2394 = vmatpush2.xpose.msra.mxu0 0.0
        %2395 = vmatprep.mubr.f32.mxu0 0.0
        %2396 = vmatmul.mubr.f32.gmra.mxu0 %v2326
        %v2397 = vpop.f32.mrf.mxu0
        %v2398 = vadd.f32 0.0, %v2397
        %v2399 = vpop.f32.mrf.mxu0
        %2400 = vdwg.mxu0
        %v2401 = vmul.f32 %v2398, 0.35355338
        %v2402 = vsel %vm1913, %v2401, -inf
        %2403 = vmax.xlane.f32.xlu0 %v2402
        %v2404 = vpop.xlane.xlu0 %2403
        %v2405 = vsub.f32 %v2401, %v2404
        %v2406 = vmul.f32 %v2405, 1.442695
        %v2407 = vpow.pop %v2406
        %v2408 = vsel %vm1913, %v2407, 0.0
        %2409 = vadd.xlane.f32.xlu0 %v2408
        %v2410 = vpop.xlane.xlu0 %2409
        %v2411 = vrcp.pop %v2410
        %v2412 = vmul.f32 %v2407, %v2411
        %v2414 = vsel %vm1913, %v2412, 0
        %2416 = vmatprep.subr.mxu0 0.0
        %2417 = vmatpush1.msra.mxu0 0.0
        %2418 = vmatprep.subr.mxu0 0.0
        %2419 = vmatpush1.msra.mxu0 0.0
        %2420 = vmatprep.subr.mxu0 0.0
        %2421 = vmatpush1.msra.mxu0 0.0
        %2422 = vmatprep.subr.mxu0 0.0
        %2423 = vmatpush1.msra.mxu0 0.0
        %2424 = vmatprep.subr.mxu0 0.0
        %2425 = vmatpush1.msra.mxu0 0.0
        %2426 = vmatprep.subr.mxu0 0.0
        %2427 = vmatpush1.msra.mxu0 0.0
        %2428 = vmatprep.subr.mxu0 0.0
        %2429 = vmatpush1.msra.mxu0 0.0
        %2430 = vmatprep.subr.mxu0 0.0
        %2431 = vmatpush1.msra.mxu0 0.0
        %2432 = vmatprep.subr.mxu0 0.0
        %2433 = vmatpush1.msra.mxu0 0.0
        %2434 = vmatprep.subr.mxu0 0.0
        %2435 = vmatpush1.msra.mxu0 0.0
        %2436 = vmatprep.subr.mxu0 0.0
        %2437 = vmatpush1.msra.mxu0 0.0
        %2438 = vmatprep.subr.mxu0 0.0
        %2439 = vmatpush1.msra.mxu0 0.0
        %2440 = vmatprep.subr.mxu0 0.0
        %2441 = vmatpush1.msra.mxu0 0.0
        %2442 = vmatprep.subr.mxu0 0.0
        %2443 = vmatpush1.msra.mxu0 0.0
        %2444 = vmatprep.subr.mxu0 0.0
        %2445 = vmatpush1.msra.mxu0 0.0
        %2446 = vmatprep.subr.mxu0 0.0
        %2447 = vmatpush1.msra.mxu0 %v2322
        %2448 = vmatprep.subr.mxu0 0.0
        %2449 = vmatpush2.msra.mxu0 0.0
        %2450 = vmatprep.subr.mxu0 0.0
        %2451 = vmatpush2.msra.mxu0 0.0
        %2452 = vmatprep.subr.mxu0 0.0
        %2453 = vmatpush2.msra.mxu0 0.0
        %2454 = vmatprep.subr.mxu0 0.0
        %2455 = vmatpush2.msra.mxu0 0.0
        %2456 = vmatprep.subr.mxu0 0.0
        %2457 = vmatpush2.msra.mxu0 0.0
        %2458 = vmatprep.subr.mxu0 0.0
        %2459 = vmatpush2.msra.mxu0 0.0
        %2460 = vmatprep.subr.mxu0 0.0
        %2461 = vmatpush2.msra.mxu0 0.0
        %2462 = vmatprep.subr.mxu0 0.0
        %2463 = vmatpush2.msra.mxu0 0.0
        %2464 = vmatprep.subr.mxu0 0.0
        %2465 = vmatpush2.msra.mxu0 0.0
        %2466 = vmatprep.subr.mxu0 0.0
        %2467 = vmatpush2.msra.mxu0 0.0
        %2468 = vmatprep.subr.mxu0 0.0
        %2469 = vmatpush2.msra.mxu0 0.0
        %2470 = vmatprep.subr.mxu0 0.0
        %2471 = vmatpush2.msra.mxu0 0.0
        %2472 = vmatprep.subr.mxu0 0.0
        %2473 = vmatpush2.msra.mxu0 0.0
        %2474 = vmatprep.subr.mxu0 0.0
        %2475 = vmatpush2.msra.mxu0 0.0
        %2476 = vmatprep.subr.mxu0 0.0
        %2477 = vmatpush2.msra.mxu0 0.0
        %2478 = vmatprep.subr.mxu0 0.0
        %2479 = vmatpush2.msra.mxu0 0.0
        %2480 = vmatprep.mubr.f32.mxu0 0.0
        %2481 = vmatmul.mubr.f32.gmra.mxu0 %v2414
        %v2482 = vpop.f32.mrf.mxu0
        %v2483 = vadd.f32 0.0, %v2482
        %v2484 = vpop.f32.mrf.mxu0
        %2485 = vdwg.mxu0
        %s2486 = scalar_lea.vmem %s1107, 8 [#allocation20]
        %v2487 = vld [vmem:[%s2486] sm:$0xff]
        %v2489 = vsel %vm1913, %v2483, 0
        %2491 = vmatprep.subr.mxu0 0.0
        %2492 = vmatpush1.msra.mxu0 0.0
        %2493 = vmatprep.subr.mxu0 0.0
        %2494 = vmatpush1.msra.mxu0 0.0
        %2495 = vmatprep.subr.mxu0 0.0
        %2496 = vmatpush1.msra.mxu0 0.0
        %2497 = vmatprep.subr.mxu0 0.0
        %2498 = vmatpush1.msra.mxu0 0.0
        %2499 = vmatprep.subr.mxu0 0.0
        %2500 = vmatpush1.msra.mxu0 0.0
        %2501 = vmatprep.subr.mxu0 0.0
        %2502 = vmatpush1.msra.mxu0 0.0
        %2503 = vmatprep.subr.mxu0 0.0
        %2504 = vmatpush1.msra.mxu0 0.0
        %2505 = vmatprep.subr.mxu0 0.0
        %2506 = vmatpush1.msra.mxu0 0.0
        %2507 = vmatprep.subr.mxu0 0.0
        %2508 = vmatpush1.msra.mxu0 0.0
        %2509 = vmatprep.subr.mxu0 0.0
        %2510 = vmatpush1.msra.mxu0 0.0
        %2511 = vmatprep.subr.mxu0 0.0
        %2512 = vmatpush1.msra.mxu0 0.0
        %2513 = vmatprep.subr.mxu0 0.0
        %2514 = vmatpush1.msra.mxu0 0.0
        %2515 = vmatprep.subr.mxu0 0.0
        %2516 = vmatpush1.msra.mxu0 0.0
        %2517 = vmatprep.subr.mxu0 0.0
        %2518 = vmatpush1.msra.mxu0 0.0
        %2519 = vmatprep.subr.mxu0 0.0
        %2520 = vmatpush1.msra.mxu0 0.0
        %2521 = vmatprep.subr.mxu0 0.0
        %2522 = vmatpush1.msra.mxu0 %v2487
        %2523 = vmatprep.subr.mxu0 0.0
        %2524 = vmatpush2.msra.mxu0 0.0
        %2525 = vmatprep.subr.mxu0 0.0
        %2526 = vmatpush2.msra.mxu0 0.0
        %2527 = vmatprep.subr.mxu0 0.0
        %2528 = vmatpush2.msra.mxu0 0.0
        %2529 = vmatprep.subr.mxu0 0.0
        %2530 = vmatpush2.msra.mxu0 0.0
        %2531 = vmatprep.subr.mxu0 0.0
        %2532 = vmatpush2.msra.mxu0 0.0
        %2533 = vmatprep.subr.mxu0 0.0
        %2534 = vmatpush2.msra.mxu0 0.0
        %2535 = vmatprep.subr.mxu0 0.0
        %2536 = vmatpush2.msra.mxu0 0.0
        %2537 = vmatprep.subr.mxu0 0.0
        %2538 = vmatpush2.msra.mxu0 0.0
        %2539 = vmatprep.subr.mxu0 0.0
        %2540 = vmatpush2.msra.mxu0 0.0
        %2541 = vmatprep.subr.mxu0 0.0
        %2542 = vmatpush2.msra.mxu0 0.0
        %2543 = vmatprep.subr.mxu0 0.0
        %2544 = vmatpush2.msra.mxu0 0.0
        %2545 = vmatprep.subr.mxu0 0.0
        %2546 = vmatpush2.msra.mxu0 0.0
        %2547 = vmatprep.subr.mxu0 0.0
        %2548 = vmatpush2.msra.mxu0 0.0
        %2549 = vmatprep.subr.mxu0 0.0
        %2550 = vmatpush2.msra.mxu0 0.0
        %2551 = vmatprep.subr.mxu0 0.0
        %2552 = vmatpush2.msra.mxu0 0.0
        %2553 = vmatprep.subr.mxu0 0.0
        %2554 = vmatpush2.msra.mxu0 0.0
        %2555 = vmatprep.mubr.f32.mxu0 0.0
        %2556 = vmatmul.mubr.f32.gmra.mxu0 %v2489
        %v2557 = vpop.f32.mrf.mxu0
        %v2558 = vadd.f32 0.0, %v2557
        %v2559 = vpop.f32.mrf.mxu0
        %2560 = vdwg.mxu0
        %v2562 = vsel %vm1913, %v2072, 0
        %2564 = vmatprep.subr.mxu0 0.0
        %2565 = vmatpush1.msra.mxu0 0.0
        %2566 = vmatprep.subr.mxu0 0.0
        %2567 = vmatpush1.msra.mxu0 0.0
        %2568 = vmatprep.subr.mxu0 0.0
        %2569 = vmatpush1.msra.mxu0 0.0
        %2570 = vmatprep.subr.mxu0 0.0
        %2571 = vmatpush1.msra.mxu0 0.0
        %2572 = vmatprep.subr.mxu0 0.0
        %2573 = vmatpush1.msra.mxu0 0.0
        %2574 = vmatprep.subr.mxu0 0.0
        %2575 = vmatpush1.msra.mxu0 0.0
        %2576 = vmatprep.subr.mxu0 0.0
        %2577 = vmatpush1.msra.mxu0 0.0
        %2578 = vmatprep.subr.mxu0 0.0
        %2579 = vmatpush1.msra.mxu0 0.0
        %2580 = vmatprep.subr.mxu0 0.0
        %2581 = vmatpush1.msra.mxu0 0.0
        %2582 = vmatprep.subr.mxu0 0.0
        %2583 = vmatpush1.msra.mxu0 0.0
        %2584 = vmatprep.subr.mxu0 0.0
        %2585 = vmatpush1.msra.mxu0 0.0
        %2586 = vmatprep.subr.mxu0 0.0
        %2587 = vmatpush1.msra.mxu0 0.0
        %2588 = vmatprep.subr.mxu0 0.0
        %2589 = vmatpush1.msra.mxu0 0.0
        %2590 = vmatprep.subr.mxu0 0.0
        %2591 = vmatpush1.msra.mxu0 0.0
        %2592 = vmatprep.subr.mxu0 0.0
        %2593 = vmatpush1.msra.mxu0 0.0
        %2594 = vmatprep.subr.mxu0 0.0
        %2595 = vmatpush1.msra.mxu0 %v2075
        %2596 = vmatprep.subr.mxu0 0.0
        %2597 = vmatpush2.msra.mxu0 0.0
        %2598 = vmatprep.subr.mxu0 0.0
        %2599 = vmatpush2.msra.mxu0 0.0
        %2600 = vmatprep.subr.mxu0 0.0
        %2601 = vmatpush2.msra.mxu0 0.0
        %2602 = vmatprep.subr.mxu0 0.0
        %2603 = vmatpush2.msra.mxu0 0.0
        %2604 = vmatprep.subr.mxu0 0.0
        %2605 = vmatpush2.msra.mxu0 0.0
        %2606 = vmatprep.subr.mxu0 0.0
        %2607 = vmatpush2.msra.mxu0 0.0
        %2608 = vmatprep.subr.mxu0 0.0
        %2609 = vmatpush2.msra.mxu0 0.0
        %2610 = vmatprep.subr.mxu0 0.0
        %2611 = vmatpush2.msra.mxu0 0.0
        %2612 = vmatprep.subr.mxu0 0.0
        %2613 = vmatpush2.msra.mxu0 0.0
        %2614 = vmatprep.subr.mxu0 0.0
        %2615 = vmatpush2.msra.mxu0 0.0
        %2616 = vmatprep.subr.mxu0 0.0
        %2617 = vmatpush2.msra.mxu0 0.0
        %2618 = vmatprep.subr.mxu0 0.0
        %2619 = vmatpush2.msra.mxu0 0.0
        %2620 = vmatprep.subr.mxu0 0.0
        %2621 = vmatpush2.msra.mxu0 0.0
        %2622 = vmatprep.subr.mxu0 0.0
        %2623 = vmatpush2.msra.mxu0 0.0
        %2624 = vmatprep.subr.mxu0 0.0
        %2625 = vmatpush2.msra.mxu0 0.0
        %2626 = vmatprep.subr.mxu0 0.0
        %2627 = vmatpush2.msra.mxu0 0.0
        %2628 = vmatprep.mubr.f32.mxu0 0.0
        %2629 = vmatmul.mubr.f32.gmra.mxu0 %v2562
        %v2630 = vpop.f32.mrf.mxu0
        %v2631 = vadd.f32 %v2558, %v2630
        %v2632 = vpop.f32.mrf.mxu0
        %2633 = vdwg.mxu0
        %s2634 = scalar_lea.vmem %s1071, 64 [#allocation14]
        %v2635 = vld [vmem:[%s2634] sm:$0xff]
        %v2636 = vld [vmem:[%s2634 + $0x8] sm:$0xff]
        %v2637 = vld [vmem:[%s2634 + $0x10] sm:$0xff]
        %v2638 = vld [vmem:[%s2634 + $0x18] sm:$0xff]
        %s2639 = scalar_lea.vmem %s1080, 2 [#allocation16]
        %v2640 = vld [vmem:[%s2639] sm:$0x1]
        %v2642 = vlaneseq
        %v2643 = vshrl.u32 %v2642, 7
        %v2644 = vsub.s32 0, %v2643
        %v2645 = vrot.slane %v2640, %v2644
        %2647 = vmatprep.subr.mxu0 0.0
        %2648 = vmatpush1.msra.mxu0 0.0
        %2649 = vmatprep.subr.mxu0 0.0
        %2650 = vmatpush1.msra.mxu0 0.0
        %2651 = vmatprep.subr.mxu0 0.0
        %2652 = vmatpush1.msra.mxu0 0.0
        %2653 = vmatprep.subr.mxu0 0.0
        %2654 = vmatpush1.msra.mxu0 0.0
        %2655 = vmatprep.subr.mxu0 0.0
        %2656 = vmatpush1.msra.mxu0 0.0
        %2657 = vmatprep.subr.mxu0 0.0
        %2658 = vmatpush1.msra.mxu0 0.0
        %2659 = vmatprep.subr.mxu0 0.0
        %2660 = vmatpush1.msra.mxu0 0.0
        %2661 = vmatprep.subr.mxu0 0.0
        %2662 = vmatpush1.msra.mxu0 0.0
        %2663 = vmatprep.subr.mxu0 0.0
        %2664 = vmatpush1.msra.mxu0 0.0
        %2665 = vmatprep.subr.mxu0 0.0
        %2666 = vmatpush1.msra.mxu0 0.0
        %2667 = vmatprep.subr.mxu0 0.0
        %2668 = vmatpush1.msra.mxu0 0.0
        %2669 = vmatprep.subr.mxu0 0.0
        %2670 = vmatpush1.msra.mxu0 0.0
        %2671 = vmatprep.subr.mxu0 0.0
        %2672 = vmatpush1.msra.mxu0 %v2638
        %2673 = vmatprep.subr.mxu0 0.0
        %2674 = vmatpush1.msra.mxu0 %v2637
        %2675 = vmatprep.subr.mxu0 0.0
        %2676 = vmatpush1.msra.mxu0 %v2636
        %2677 = vmatprep.subr.mxu0 0.0
        %2678 = vmatpush1.msra.mxu0 %v2635
        %2679 = vmatprep.subr.mxu0 0.0
        %2680 = vmatpush2.msra.mxu0 0.0
        %2681 = vmatprep.subr.mxu0 0.0
        %2682 = vmatpush2.msra.mxu0 0.0
        %2683 = vmatprep.subr.mxu0 0.0
        %2684 = vmatpush2.msra.mxu0 0.0
        %2685 = vmatprep.subr.mxu0 0.0
        %2686 = vmatpush2.msra.mxu0 0.0
        %2687 = vmatprep.subr.mxu0 0.0
        %2688 = vmatpush2.msra.mxu0 0.0
        %2689 = vmatprep.subr.mxu0 0.0
        %2690 = vmatpush2.msra.mxu0 0.0
        %2691 = vmatprep.subr.mxu0 0.0
        %2692 = vmatpush2.msra.mxu0 0.0
        %2693 = vmatprep.subr.mxu0 0.0
        %2694 = vmatpush2.msra.mxu0 0.0
        %2695 = vmatprep.subr.mxu0 0.0
        %2696 = vmatpush2.msra.mxu0 0.0
        %2697 = vmatprep.subr.mxu0 0.0
        %2698 = vmatpush2.msra.mxu0 0.0
        %2699 = vmatprep.subr.mxu0 0.0
        %2700 = vmatpush2.msra.mxu0 0.0
        %2701 = vmatprep.subr.mxu0 0.0
        %2702 = vmatpush2.msra.mxu0 0.0
        %2703 = vmatprep.subr.mxu0 0.0
        %2704 = vmatpush2.msra.mxu0 0.0
        %2705 = vmatprep.subr.mxu0 0.0
        %2706 = vmatpush2.msra.mxu0 0.0
        %2707 = vmatprep.subr.mxu0 0.0
        %2708 = vmatpush2.msra.mxu0 0.0
        %2709 = vmatprep.subr.mxu0 0.0
        %2710 = vmatpush2.msra.mxu0 0.0
        %2711 = vmatprep.mubr.f32.mxu0 0.0
        %2712 = vmatmul.mubr.f32.gmra.mxu0 %v1679
        %v2713 = vpop.f32.mrf.mxu0
        %v2714 = vadd.f32 %v2645, %v2713
        %v2715 = vpop.f32.mrf.mxu0
        %2716 = vdwg.mxu0
        %s2717 = scalar_lea.vmem %s1089, 64 [#allocation17]
        %v2718 = vld [vmem:[%s2717] sm:$0xff]
        %v2719 = vld [vmem:[%s2717 + $0x8] sm:$0xff]
        %v2720 = vld [vmem:[%s2717 + $0x10] sm:$0xff]
        %v2721 = vld [vmem:[%s2717 + $0x18] sm:$0xff]
        %s2722 = scalar_lea.vmem %s1291, 2
        %v2723 = vld [vmem:[%s2722] sm:$0x1]
        %v2725 = vlaneseq
        %v2726 = vshrl.u32 %v2725, 7
        %v2727 = vsub.s32 0, %v2726
        %v2728 = vrot.slane %v2723, %v2727
        %2730 = vmatprep.subr.mxu0 0.0
        %2731 = vmatpush1.msra.mxu0 0.0
        %2732 = vmatprep.subr.mxu0 0.0
        %2733 = vmatpush1.msra.mxu0 0.0
        %2734 = vmatprep.subr.mxu0 0.0
        %2735 = vmatpush1.msra.mxu0 0.0
        %2736 = vmatprep.subr.mxu0 0.0
        %2737 = vmatpush1.msra.mxu0 0.0
        %2738 = vmatprep.subr.mxu0 0.0
        %2739 = vmatpush1.msra.mxu0 0.0
        %2740 = vmatprep.subr.mxu0 0.0
        %2741 = vmatpush1.msra.mxu0 0.0
        %2742 = vmatprep.subr.mxu0 0.0
        %2743 = vmatpush1.msra.mxu0 0.0
        %2744 = vmatprep.subr.mxu0 0.0
        %2745 = vmatpush1.msra.mxu0 0.0
        %2746 = vmatprep.subr.mxu0 0.0
        %2747 = vmatpush1.msra.mxu0 0.0
        %2748 = vmatprep.subr.mxu0 0.0
        %2749 = vmatpush1.msra.mxu0 0.0
        %2750 = vmatprep.subr.mxu0 0.0
        %2751 = vmatpush1.msra.mxu0 0.0
        %2752 = vmatprep.subr.mxu0 0.0
        %2753 = vmatpush1.msra.mxu0 0.0
        %2754 = vmatprep.subr.mxu0 0.0
        %2755 = vmatpush1.msra.mxu0 %v2721
        %2756 = vmatprep.subr.mxu0 0.0
        %2757 = vmatpush1.msra.mxu0 %v2720
        %2758 = vmatprep.subr.mxu0 0.0
        %2759 = vmatpush1.msra.mxu0 %v2719
        %2760 = vmatprep.subr.mxu0 0.0
        %2761 = vmatpush1.msra.mxu0 %v2718
        %2762 = vmatprep.subr.mxu0 0.0
        %2763 = vmatpush2.msra.mxu0 0.0
        %2764 = vmatprep.subr.mxu0 0.0
        %2765 = vmatpush2.msra.mxu0 0.0
        %2766 = vmatprep.subr.mxu0 0.0
        %2767 = vmatpush2.msra.mxu0 0.0
        %2768 = vmatprep.subr.mxu0 0.0
        %2769 = vmatpush2.msra.mxu0 0.0
        %2770 = vmatprep.subr.mxu0 0.0
        %2771 = vmatpush2.msra.mxu0 0.0
        %2772 = vmatprep.subr.mxu0 0.0
        %2773 = vmatpush2.msra.mxu0 0.0
        %2774 = vmatprep.subr.mxu0 0.0
        %2775 = vmatpush2.msra.mxu0 0.0
        %2776 = vmatprep.subr.mxu0 0.0
        %2777 = vmatpush2.msra.mxu0 0.0
        %2778 = vmatprep.subr.mxu0 0.0
        %2779 = vmatpush2.msra.mxu0 0.0
        %2780 = vmatprep.subr.mxu0 0.0
        %2781 = vmatpush2.msra.mxu0 0.0
        %2782 = vmatprep.subr.mxu0 0.0
        %2783 = vmatpush2.msra.mxu0 0.0
        %2784 = vmatprep.subr.mxu0 0.0
        %2785 = vmatpush2.msra.mxu0 0.0
        %2786 = vmatprep.subr.mxu0 0.0
        %2787 = vmatpush2.msra.mxu0 0.0
        %2788 = vmatprep.subr.mxu0 0.0
        %2789 = vmatpush2.msra.mxu0 0.0
        %2790 = vmatprep.subr.mxu0 0.0
        %2791 = vmatpush2.msra.mxu0 0.0
        %2792 = vmatprep.subr.mxu0 0.0
        %2793 = vmatpush2.msra.mxu0 0.0
        %2794 = vmatprep.mubr.f32.mxu0 0.0
        %2795 = vmatmul.mubr.f32.gmra.mxu0 %v1679
        %v2796 = vpop.f32.mrf.mxu0
        %v2797 = vadd.f32 %v2728, %v2796
        %v2798 = vpop.f32.mrf.mxu0
        %2799 = vdwg.mxu0
        %s2800 = scalar_lea.vmem %s1098, 64 [#allocation19]
        %v2801 = vld [vmem:[%s2800] sm:$0xff]
        %v2802 = vld [vmem:[%s2800 + $0x8] sm:$0xff]
        %v2803 = vld [vmem:[%s2800 + $0x10] sm:$0xff]
        %v2804 = vld [vmem:[%s2800 + $0x18] sm:$0xff]
        %s2805 = scalar_lea.vmem %s1295, 2
        %v2806 = vld [vmem:[%s2805] sm:$0x1]
        %v2808 = vlaneseq
        %v2809 = vshrl.u32 %v2808, 7
        %v2810 = vsub.s32 0, %v2809
        %v2811 = vrot.slane %v2806, %v2810
        %2813 = vmatprep.subr.mxu0 0.0
        %2814 = vmatpush1.msra.mxu0 0.0
        %2815 = vmatprep.subr.mxu0 0.0
        %2816 = vmatpush1.msra.mxu0 0.0
        %2817 = vmatprep.subr.mxu0 0.0
        %2818 = vmatpush1.msra.mxu0 0.0
        %2819 = vmatprep.subr.mxu0 0.0
        %2820 = vmatpush1.msra.mxu0 0.0
        %2821 = vmatprep.subr.mxu0 0.0
        %2822 = vmatpush1.msra.mxu0 0.0
        %2823 = vmatprep.subr.mxu0 0.0
        %2824 = vmatpush1.msra.mxu0 0.0
        %2825 = vmatprep.subr.mxu0 0.0
        %2826 = vmatpush1.msra.mxu0 0.0
        %2827 = vmatprep.subr.mxu0 0.0
        %2828 = vmatpush1.msra.mxu0 0.0
        %2829 = vmatprep.subr.mxu0 0.0
        %2830 = vmatpush1.msra.mxu0 0.0
        %2831 = vmatprep.subr.mxu0 0.0
        %2832 = vmatpush1.msra.mxu0 0.0
        %2833 = vmatprep.subr.mxu0 0.0
        %2834 = vmatpush1.msra.mxu0 0.0
        %2835 = vmatprep.subr.mxu0 0.0
        %2836 = vmatpush1.msra.mxu0 0.0
        %2837 = vmatprep.subr.mxu0 0.0
        %2838 = vmatpush1.msra.mxu0 %v2804
        %2839 = vmatprep.subr.mxu0 0.0
        %2840 = vmatpush1.msra.mxu0 %v2803
        %2841 = vmatprep.subr.mxu0 0.0
        %2842 = vmatpush1.msra.mxu0 %v2802
        %2843 = vmatprep.subr.mxu0 0.0
        %2844 = vmatpush1.msra.mxu0 %v2801
        %2845 = vmatprep.subr.mxu0 0.0
        %2846 = vmatpush2.msra.mxu0 0.0
        %2847 = vmatprep.subr.mxu0 0.0
        %2848 = vmatpush2.msra.mxu0 0.0
        %2849 = vmatprep.subr.mxu0 0.0
        %2850 = vmatpush2.msra.mxu0 0.0
        %2851 = vmatprep.subr.mxu0 0.0
        %2852 = vmatpush2.msra.mxu0 0.0
        %2853 = vmatprep.subr.mxu0 0.0
        %2854 = vmatpush2.msra.mxu0 0.0
        %2855 = vmatprep.subr.mxu0 0.0
        %2856 = vmatpush2.msra.mxu0 0.0
        %2857 = vmatprep.subr.mxu0 0.0
        %2858 = vmatpush2.msra.mxu0 0.0
        %2859 = vmatprep.subr.mxu0 0.0
        %2860 = vmatpush2.msra.mxu0 0.0
        %2861 = vmatprep.subr.mxu0 0.0
        %2862 = vmatpush2.msra.mxu0 0.0
        %2863 = vmatprep.subr.mxu0 0.0
        %2864 = vmatpush2.msra.mxu0 0.0
        %2865 = vmatprep.subr.mxu0 0.0
        %2866 = vmatpush2.msra.mxu0 0.0
        %2867 = vmatprep.subr.mxu0 0.0
        %2868 = vmatpush2.msra.mxu0 0.0
        %2869 = vmatprep.subr.mxu0 0.0
        %2870 = vmatpush2.msra.mxu0 0.0
        %2871 = vmatprep.subr.mxu0 0.0
        %2872 = vmatpush2.msra.mxu0 0.0
        %2873 = vmatprep.subr.mxu0 0.0
        %2874 = vmatpush2.msra.mxu0 0.0
        %2875 = vmatprep.subr.mxu0 0.0
        %2876 = vmatpush2.msra.mxu0 0.0
        %2877 = vmatprep.mubr.f32.mxu0 0.0
        %2878 = vmatmul.mubr.f32.gmra.mxu0 %v1679
        %v2879 = vpop.f32.mrf.mxu0
        %v2880 = vadd.f32 %v2811, %v2879
        %v2881 = vpop.f32.mrf.mxu0
        %2882 = vdwg.mxu0
        %v2884 = vsel %vm1913, %v2714, 0
        %v2887 = vsel %vm1913, %v2797, 0
        %2889 = vmatprep.subr.mxu0 0.0
        %2890 = vmatpush1.xpose.msra.mxu0 0.0
        %2891 = vmatprep.subr.mxu0 0.0
        %2892 = vmatpush1.xpose.msra.mxu0 0.0
        %2893 = vmatprep.subr.mxu0 0.0
        %2894 = vmatpush1.xpose.msra.mxu0 0.0
        %2895 = vmatprep.subr.mxu0 0.0
        %2896 = vmatpush1.xpose.msra.mxu0 0.0
        %2897 = vmatprep.subr.mxu0 0.0
        %2898 = vmatpush1.xpose.msra.mxu0 0.0
        %2899 = vmatprep.subr.mxu0 0.0
        %2900 = vmatpush1.xpose.msra.mxu0 0.0
        %2901 = vmatprep.subr.mxu0 0.0
        %2902 = vmatpush1.xpose.msra.mxu0 0.0
        %2903 = vmatprep.subr.mxu0 0.0
        %2904 = vmatpush1.xpose.msra.mxu0 0.0
        %2905 = vmatprep.subr.mxu0 0.0
        %2906 = vmatpush1.xpose.msra.mxu0 0.0
        %2907 = vmatprep.subr.mxu0 0.0
        %2908 = vmatpush1.xpose.msra.mxu0 0.0
        %2909 = vmatprep.subr.mxu0 0.0
        %2910 = vmatpush1.xpose.msra.mxu0 0.0
        %2911 = vmatprep.subr.mxu0 0.0
        %2912 = vmatpush1.xpose.msra.mxu0 0.0
        %2913 = vmatprep.subr.mxu0 0.0
        %2914 = vmatpush1.xpose.msra.mxu0 0.0
        %2915 = vmatprep.subr.mxu0 0.0
        %2916 = vmatpush1.xpose.msra.mxu0 0.0
        %2917 = vmatprep.subr.mxu0 0.0
        %2918 = vmatpush1.xpose.msra.mxu0 0.0
        %2919 = vmatprep.subr.mxu0 0.0
        %2920 = vmatpush1.xpose.msra.mxu0 %v2887
        %2921 = vmatprep.subr.mxu0 0.0
        %2922 = vmatpush2.xpose.msra.mxu0 0.0
        %2923 = vmatprep.subr.mxu0 0.0
        %2924 = vmatpush2.xpose.msra.mxu0 0.0
        %2925 = vmatprep.subr.mxu0 0.0
        %2926 = vmatpush2.xpose.msra.mxu0 0.0
        %2927 = vmatprep.subr.mxu0 0.0
        %2928 = vmatpush2.xpose.msra.mxu0 0.0
        %2929 = vmatprep.subr.mxu0 0.0
        %2930 = vmatpush2.xpose.msra.mxu0 0.0
        %2931 = vmatprep.subr.mxu0 0.0
        %2932 = vmatpush2.xpose.msra.mxu0 0.0
        %2933 = vmatprep.subr.mxu0 0.0
        %2934 = vmatpush2.xpose.msra.mxu0 0.0
        %2935 = vmatprep.subr.mxu0 0.0
        %2936 = vmatpush2.xpose.msra.mxu0 0.0
        %2937 = vmatprep.subr.mxu0 0.0
        %2938 = vmatpush2.xpose.msra.mxu0 0.0
        %2939 = vmatprep.subr.mxu0 0.0
        %2940 = vmatpush2.xpose.msra.mxu0 0.0
        %2941 = vmatprep.subr.mxu0 0.0
        %2942 = vmatpush2.xpose.msra.mxu0 0.0
        %2943 = vmatprep.subr.mxu0 0.0
        %2944 = vmatpush2.xpose.msra.mxu0 0.0
        %2945 = vmatprep.subr.mxu0 0.0
        %2946 = vmatpush2.xpose.msra.mxu0 0.0
        %2947 = vmatprep.subr.mxu0 0.0
        %2948 = vmatpush2.xpose.msra.mxu0 0.0
        %2949 = vmatprep.subr.mxu0 0.0
        %2950 = vmatpush2.xpose.msra.mxu0 0.0
        %2951 = vmatprep.subr.mxu0 0.0
        %2952 = vmatpush2.xpose.msra.mxu0 0.0
        %2953 = vmatprep.mubr.f32.mxu0 0.0
        %2954 = vmatmul.mubr.f32.gmra.mxu0 %v2884
        %v2955 = vpop.f32.mrf.mxu0
        %v2956 = vadd.f32 0.0, %v2955
        %v2957 = vpop.f32.mrf.mxu0
        %2958 = vdwg.mxu0
        %v2959 = vmul.f32 %v2956, 0.35355338
        %v2960 = vsel %vm1913, %v2959, -inf
        %2961 = vmax.xlane.f32.xlu0 %v2960
        %v2962 = vpop.xlane.xlu0 %2961
        %v2963 = vsub.f32 %v2959, %v2962
        %v2964 = vmul.f32 %v2963, 1.442695
        %v2965 = vpow.pop %v2964
        %v2966 = vsel %vm1913, %v2965, 0.0
        %2967 = vadd.xlane.f32.xlu0 %v2966
        %v2968 = vpop.xlane.xlu0 %2967
        %v2969 = vrcp.pop %v2968
        %v2970 = vmul.f32 %v2965, %v2969
        %v2972 = vsel %vm1913, %v2970, 0
        %2974 = vmatprep.subr.mxu0 0.0
        %2975 = vmatpush1.msra.mxu0 0.0
        %2976 = vmatprep.subr.mxu0 0.0
        %2977 = vmatpush1.msra.mxu0 0.0
        %2978 = vmatprep.subr.mxu0 0.0
        %2979 = vmatpush1.msra.mxu0 0.0
        %2980 = vmatprep.subr.mxu0 0.0
        %2981 = vmatpush1.msra.mxu0 0.0
        %2982 = vmatprep.subr.mxu0 0.0
        %2983 = vmatpush1.msra.mxu0 0.0
        %2984 = vmatprep.subr.mxu0 0.0
        %2985 = vmatpush1.msra.mxu0 0.0
        %2986 = vmatprep.subr.mxu0 0.0
        %2987 = vmatpush1.msra.mxu0 0.0
        %2988 = vmatprep.subr.mxu0 0.0
        %2989 = vmatpush1.msra.mxu0 0.0
        %2990 = vmatprep.subr.mxu0 0.0
        %2991 = vmatpush1.msra.mxu0 0.0
        %2992 = vmatprep.subr.mxu0 0.0
        %2993 = vmatpush1.msra.mxu0 0.0
        %2994 = vmatprep.subr.mxu0 0.0
        %2995 = vmatpush1.msra.mxu0 0.0
        %2996 = vmatprep.subr.mxu0 0.0
        %2997 = vmatpush1.msra.mxu0 0.0
        %2998 = vmatprep.subr.mxu0 0.0
        %2999 = vmatpush1.msra.mxu0 0.0
        %3000 = vmatprep.subr.mxu0 0.0
        %3001 = vmatpush1.msra.mxu0 0.0
        %3002 = vmatprep.subr.mxu0 0.0
        %3003 = vmatpush1.msra.mxu0 0.0
        %3004 = vmatprep.subr.mxu0 0.0
        %3005 = vmatpush1.msra.mxu0 %v2880
        %3006 = vmatprep.subr.mxu0 0.0
        %3007 = vmatpush2.msra.mxu0 0.0
        %3008 = vmatprep.subr.mxu0 0.0
        %3009 = vmatpush2.msra.mxu0 0.0
        %3010 = vmatprep.subr.mxu0 0.0
        %3011 = vmatpush2.msra.mxu0 0.0
        %3012 = vmatprep.subr.mxu0 0.0
        %3013 = vmatpush2.msra.mxu0 0.0
        %3014 = vmatprep.subr.mxu0 0.0
        %3015 = vmatpush2.msra.mxu0 0.0
        %3016 = vmatprep.subr.mxu0 0.0
        %3017 = vmatpush2.msra.mxu0 0.0
        %3018 = vmatprep.subr.mxu0 0.0
        %3019 = vmatpush2.msra.mxu0 0.0
        %3020 = vmatprep.subr.mxu0 0.0
        %3021 = vmatpush2.msra.mxu0 0.0
        %3022 = vmatprep.subr.mxu0 0.0
        %3023 = vmatpush2.msra.mxu0 0.0
        %3024 = vmatprep.subr.mxu0 0.0
        %3025 = vmatpush2.msra.mxu0 0.0
        %3026 = vmatprep.subr.mxu0 0.0
        %3027 = vmatpush2.msra.mxu0 0.0
        %3028 = vmatprep.subr.mxu0 0.0
        %3029 = vmatpush2.msra.mxu0 0.0
        %3030 = vmatprep.subr.mxu0 0.0
        %3031 = vmatpush2.msra.mxu0 0.0
        %3032 = vmatprep.subr.mxu0 0.0
        %3033 = vmatpush2.msra.mxu0 0.0
        %3034 = vmatprep.subr.mxu0 0.0
        %3035 = vmatpush2.msra.mxu0 0.0
        %3036 = vmatprep.subr.mxu0 0.0
        %3037 = vmatpush2.msra.mxu0 0.0
        %3038 = vmatprep.mubr.f32.mxu0 0.0
        %3039 = vmatmul.mubr.f32.gmra.mxu0 %v2972
        %v3040 = vpop.f32.mrf.mxu0
        %v3041 = vadd.f32 0.0, %v3040
        %v3042 = vpop.f32.mrf.mxu0
        %3043 = vdwg.mxu0
        %s3044 = scalar_lea.vmem %s1107, 16 [#allocation20]
        %v3045 = vld [vmem:[%s3044] sm:$0xff]
        %v3047 = vsel %vm1913, %v3041, 0
        %3049 = vmatprep.subr.mxu0 0.0
        %3050 = vmatpush1.msra.mxu0 0.0
        %3051 = vmatprep.subr.mxu0 0.0
        %3052 = vmatpush1.msra.mxu0 0.0
        %3053 = vmatprep.subr.mxu0 0.0
        %3054 = vmatpush1.msra.mxu0 0.0
        %3055 = vmatprep.subr.mxu0 0.0
        %3056 = vmatpush1.msra.mxu0 0.0
        %3057 = vmatprep.subr.mxu0 0.0
        %3058 = vmatpush1.msra.mxu0 0.0
        %3059 = vmatprep.subr.mxu0 0.0
        %3060 = vmatpush1.msra.mxu0 0.0
        %3061 = vmatprep.subr.mxu0 0.0
        %3062 = vmatpush1.msra.mxu0 0.0
        %3063 = vmatprep.subr.mxu0 0.0
        %3064 = vmatpush1.msra.mxu0 0.0
        %3065 = vmatprep.subr.mxu0 0.0
        %3066 = vmatpush1.msra.mxu0 0.0
        %3067 = vmatprep.subr.mxu0 0.0
        %3068 = vmatpush1.msra.mxu0 0.0
        %3069 = vmatprep.subr.mxu0 0.0
        %3070 = vmatpush1.msra.mxu0 0.0
        %3071 = vmatprep.subr.mxu0 0.0
        %3072 = vmatpush1.msra.mxu0 0.0
        %3073 = vmatprep.subr.mxu0 0.0
        %3074 = vmatpush1.msra.mxu0 0.0
        %3075 = vmatprep.subr.mxu0 0.0
        %3076 = vmatpush1.msra.mxu0 0.0
        %3077 = vmatprep.subr.mxu0 0.0
        %3078 = vmatpush1.msra.mxu0 0.0
        %3079 = vmatprep.subr.mxu0 0.0
        %3080 = vmatpush1.msra.mxu0 %v3045
        %3081 = vmatprep.subr.mxu0 0.0
        %3082 = vmatpush2.msra.mxu0 0.0
        %3083 = vmatprep.subr.mxu0 0.0
        %3084 = vmatpush2.msra.mxu0 0.0
        %3085 = vmatprep.subr.mxu0 0.0
        %3086 = vmatpush2.msra.mxu0 0.0
        %3087 = vmatprep.subr.mxu0 0.0
        %3088 = vmatpush2.msra.mxu0 0.0
        %3089 = vmatprep.subr.mxu0 0.0
        %3090 = vmatpush2.msra.mxu0 0.0
        %3091 = vmatprep.subr.mxu0 0.0
        %3092 = vmatpush2.msra.mxu0 0.0
        %3093 = vmatprep.subr.mxu0 0.0
        %3094 = vmatpush2.msra.mxu0 0.0
        %3095 = vmatprep.subr.mxu0 0.0
        %3096 = vmatpush2.msra.mxu0 0.0
        %3097 = vmatprep.subr.mxu0 0.0
        %3098 = vmatpush2.msra.mxu0 0.0
        %3099 = vmatprep.subr.mxu0 0.0
        %3100 = vmatpush2.msra.mxu0 0.0
        %3101 = vmatprep.subr.mxu0 0.0
        %3102 = vmatpush2.msra.mxu0 0.0
        %3103 = vmatprep.subr.mxu0 0.0
        %3104 = vmatpush2.msra.mxu0 0.0
        %3105 = vmatprep.subr.mxu0 0.0
        %3106 = vmatpush2.msra.mxu0 0.0
        %3107 = vmatprep.subr.mxu0 0.0
        %3108 = vmatpush2.msra.mxu0 0.0
        %3109 = vmatprep.subr.mxu0 0.0
        %3110 = vmatpush2.msra.mxu0 0.0
        %3111 = vmatprep.subr.mxu0 0.0
        %3112 = vmatpush2.msra.mxu0 0.0
        %3113 = vmatprep.mubr.f32.mxu0 0.0
        %3114 = vmatmul.mubr.f32.gmra.mxu0 %v3047
        %v3115 = vpop.f32.mrf.mxu0
        %v3116 = vadd.f32 0.0, %v3115
        %v3117 = vpop.f32.mrf.mxu0
        %3118 = vdwg.mxu0
        %v3119 = vadd.f32 %v2631, %v3116
        %s3120 = scalar_lea.vmem %s1071, 96 [#allocation14]
        %v3121 = vld [vmem:[%s3120] sm:$0xff]
        %v3122 = vld [vmem:[%s3120 + $0x8] sm:$0xff]
        %v3123 = vld [vmem:[%s3120 + $0x10] sm:$0xff]
        %v3124 = vld [vmem:[%s3120 + $0x18] sm:$0xff]
        %s3125 = scalar_lea.vmem %s1080, 3 [#allocation16]
        %v3126 = vld [vmem:[%s3125] sm:$0x1]
        %v3128 = vlaneseq
        %v3129 = vshrl.u32 %v3128, 7
        %v3130 = vsub.s32 0, %v3129
        %v3131 = vrot.slane %v3126, %v3130
        %3133 = vmatprep.subr.mxu0 0.0
        %3134 = vmatpush1.msra.mxu0 0.0
        %3135 = vmatprep.subr.mxu0 0.0
        %3136 = vmatpush1.msra.mxu0 0.0
        %3137 = vmatprep.subr.mxu0 0.0
        %3138 = vmatpush1.msra.mxu0 0.0
        %3139 = vmatprep.subr.mxu0 0.0
        %3140 = vmatpush1.msra.mxu0 0.0
        %3141 = vmatprep.subr.mxu0 0.0
        %3142 = vmatpush1.msra.mxu0 0.0
        %3143 = vmatprep.subr.mxu0 0.0
        %3144 = vmatpush1.msra.mxu0 0.0
        %3145 = vmatprep.subr.mxu0 0.0
        %3146 = vmatpush1.msra.mxu0 0.0
        %3147 = vmatprep.subr.mxu0 0.0
        %3148 = vmatpush1.msra.mxu0 0.0
        %3149 = vmatprep.subr.mxu0 0.0
        %3150 = vmatpush1.msra.mxu0 0.0
        %3151 = vmatprep.subr.mxu0 0.0
        %3152 = vmatpush1.msra.mxu0 0.0
        %3153 = vmatprep.subr.mxu0 0.0
        %3154 = vmatpush1.msra.mxu0 0.0
        %3155 = vmatprep.subr.mxu0 0.0
        %3156 = vmatpush1.msra.mxu0 0.0
        %3157 = vmatprep.subr.mxu0 0.0
        %3158 = vmatpush1.msra.mxu0 %v3124
        %3159 = vmatprep.subr.mxu0 0.0
        %3160 = vmatpush1.msra.mxu0 %v3123
        %3161 = vmatprep.subr.mxu0 0.0
        %3162 = vmatpush1.msra.mxu0 %v3122
        %3163 = vmatprep.subr.mxu0 0.0
        %3164 = vmatpush1.msra.mxu0 %v3121
        %3165 = vmatprep.subr.mxu0 0.0
        %3166 = vmatpush2.msra.mxu0 0.0
        %3167 = vmatprep.subr.mxu0 0.0
        %3168 = vmatpush2.msra.mxu0 0.0
        %3169 = vmatprep.subr.mxu0 0.0
        %3170 = vmatpush2.msra.mxu0 0.0
        %3171 = vmatprep.subr.mxu0 0.0
        %3172 = vmatpush2.msra.mxu0 0.0
        %3173 = vmatprep.subr.mxu0 0.0
        %3174 = vmatpush2.msra.mxu0 0.0
        %3175 = vmatprep.subr.mxu0 0.0
        %3176 = vmatpush2.msra.mxu0 0.0
        %3177 = vmatprep.subr.mxu0 0.0
        %3178 = vmatpush2.msra.mxu0 0.0
        %3179 = vmatprep.subr.mxu0 0.0
        %3180 = vmatpush2.msra.mxu0 0.0
        %3181 = vmatprep.subr.mxu0 0.0
        %3182 = vmatpush2.msra.mxu0 0.0
        %3183 = vmatprep.subr.mxu0 0.0
        %3184 = vmatpush2.msra.mxu0 0.0
        %3185 = vmatprep.subr.mxu0 0.0
        %3186 = vmatpush2.msra.mxu0 0.0
        %3187 = vmatprep.subr.mxu0 0.0
        %3188 = vmatpush2.msra.mxu0 0.0
        %3189 = vmatprep.subr.mxu0 0.0
        %3190 = vmatpush2.msra.mxu0 0.0
        %3191 = vmatprep.subr.mxu0 0.0
        %3192 = vmatpush2.msra.mxu0 0.0
        %3193 = vmatprep.subr.mxu0 0.0
        %3194 = vmatpush2.msra.mxu0 0.0
        %3195 = vmatprep.subr.mxu0 0.0
        %3196 = vmatpush2.msra.mxu0 0.0
        %3197 = vmatprep.mubr.f32.mxu0 0.0
        %3198 = vmatmul.mubr.f32.gmra.mxu0 %v1679
        %v3199 = vpop.f32.mrf.mxu0
        %v3200 = vadd.f32 %v3131, %v3199
        %v3201 = vpop.f32.mrf.mxu0
        %3202 = vdwg.mxu0
        %s3203 = scalar_lea.vmem %s1089, 96 [#allocation17]
        %v3204 = vld [vmem:[%s3203] sm:$0xff]
        %v3205 = vld [vmem:[%s3203 + $0x8] sm:$0xff]
        %v3206 = vld [vmem:[%s3203 + $0x10] sm:$0xff]
        %v3207 = vld [vmem:[%s3203 + $0x18] sm:$0xff]
        %s3208 = scalar_lea.vmem %s1291, 3
        %v3209 = vld [vmem:[%s3208] sm:$0x1]
        %v3211 = vlaneseq
        %v3212 = vshrl.u32 %v3211, 7
        %v3213 = vsub.s32 0, %v3212
        %v3214 = vrot.slane %v3209, %v3213
        %3216 = vmatprep.subr.mxu0 0.0
        %3217 = vmatpush1.msra.mxu0 0.0
        %3218 = vmatprep.subr.mxu0 0.0
        %3219 = vmatpush1.msra.mxu0 0.0
        %3220 = vmatprep.subr.mxu0 0.0
        %3221 = vmatpush1.msra.mxu0 0.0
        %3222 = vmatprep.subr.mxu0 0.0
        %3223 = vmatpush1.msra.mxu0 0.0
        %3224 = vmatprep.subr.mxu0 0.0
        %3225 = vmatpush1.msra.mxu0 0.0
        %3226 = vmatprep.subr.mxu0 0.0
        %3227 = vmatpush1.msra.mxu0 0.0
        %3228 = vmatprep.subr.mxu0 0.0
        %3229 = vmatpush1.msra.mxu0 0.0
        %3230 = vmatprep.subr.mxu0 0.0
        %3231 = vmatpush1.msra.mxu0 0.0
        %3232 = vmatprep.subr.mxu0 0.0
        %3233 = vmatpush1.msra.mxu0 0.0
        %3234 = vmatprep.subr.mxu0 0.0
        %3235 = vmatpush1.msra.mxu0 0.0
        %3236 = vmatprep.subr.mxu0 0.0
        %3237 = vmatpush1.msra.mxu0 0.0
        %3238 = vmatprep.subr.mxu0 0.0
        %3239 = vmatpush1.msra.mxu0 0.0
        %3240 = vmatprep.subr.mxu0 0.0
        %3241 = vmatpush1.msra.mxu0 %v3207
        %3242 = vmatprep.subr.mxu0 0.0
        %3243 = vmatpush1.msra.mxu0 %v3206
        %3244 = vmatprep.subr.mxu0 0.0
        %3245 = vmatpush1.msra.mxu0 %v3205
        %3246 = vmatprep.subr.mxu0 0.0
        %3247 = vmatpush1.msra.mxu0 %v3204
        %3248 = vmatprep.subr.mxu0 0.0
        %3249 = vmatpush2.msra.mxu0 0.0
        %3250 = vmatprep.subr.mxu0 0.0
        %3251 = vmatpush2.msra.mxu0 0.0
        %3252 = vmatprep.subr.mxu0 0.0
        %3253 = vmatpush2.msra.mxu0 0.0
        %3254 = vmatprep.subr.mxu0 0.0
        %3255 = vmatpush2.msra.mxu0 0.0
        %3256 = vmatprep.subr.mxu0 0.0
        %3257 = vmatpush2.msra.mxu0 0.0
        %3258 = vmatprep.subr.mxu0 0.0
        %3259 = vmatpush2.msra.mxu0 0.0
        %3260 = vmatprep.subr.mxu0 0.0
        %3261 = vmatpush2.msra.mxu0 0.0
        %3262 = vmatprep.subr.mxu0 0.0
        %3263 = vmatpush2.msra.mxu0 0.0
        %3264 = vmatprep.subr.mxu0 0.0
        %3265 = vmatpush2.msra.mxu0 0.0
        %3266 = vmatprep.subr.mxu0 0.0
        %3267 = vmatpush2.msra.mxu0 0.0
        %3268 = vmatprep.subr.mxu0 0.0
        %3269 = vmatpush2.msra.mxu0 0.0
        %3270 = vmatprep.subr.mxu0 0.0
        %3271 = vmatpush2.msra.mxu0 0.0
        %3272 = vmatprep.subr.mxu0 0.0
        %3273 = vmatpush2.msra.mxu0 0.0
        %3274 = vmatprep.subr.mxu0 0.0
        %3275 = vmatpush2.msra.mxu0 0.0
        %3276 = vmatprep.subr.mxu0 0.0
        %3277 = vmatpush2.msra.mxu0 0.0
        %3278 = vmatprep.subr.mxu0 0.0
        %3279 = vmatpush2.msra.mxu0 0.0
        %3280 = vmatprep.mubr.f32.mxu0 0.0
        %3281 = vmatmul.mubr.f32.gmra.mxu0 %v1679
        %v3282 = vpop.f32.mrf.mxu0
        %v3283 = vadd.f32 %v3214, %v3282
        %v3284 = vpop.f32.mrf.mxu0
        %3285 = vdwg.mxu0
        %s3286 = scalar_lea.vmem %s1098, 96 [#allocation19]
        %v3287 = vld [vmem:[%s3286] sm:$0xff]
        %v3288 = vld [vmem:[%s3286 + $0x8] sm:$0xff]
        %v3289 = vld [vmem:[%s3286 + $0x10] sm:$0xff]
        %v3290 = vld [vmem:[%s3286 + $0x18] sm:$0xff]
        %s3291 = scalar_lea.vmem %s1295, 3
        %v3292 = vld [vmem:[%s3291] sm:$0x1]
        %v3294 = vlaneseq
        %v3295 = vshrl.u32 %v3294, 7
        %v3296 = vsub.s32 0, %v3295
        %v3297 = vrot.slane %v3292, %v3296
        %3299 = vmatprep.subr.mxu0 0.0
        %3300 = vmatpush1.msra.mxu0 0.0
        %3301 = vmatprep.subr.mxu0 0.0
        %3302 = vmatpush1.msra.mxu0 0.0
        %3303 = vmatprep.subr.mxu0 0.0
        %3304 = vmatpush1.msra.mxu0 0.0
        %3305 = vmatprep.subr.mxu0 0.0
        %3306 = vmatpush1.msra.mxu0 0.0
        %3307 = vmatprep.subr.mxu0 0.0
        %3308 = vmatpush1.msra.mxu0 0.0
        %3309 = vmatprep.subr.mxu0 0.0
        %3310 = vmatpush1.msra.mxu0 0.0
        %3311 = vmatprep.subr.mxu0 0.0
        %3312 = vmatpush1.msra.mxu0 0.0
        %3313 = vmatprep.subr.mxu0 0.0
        %3314 = vmatpush1.msra.mxu0 0.0
        %3315 = vmatprep.subr.mxu0 0.0
        %3316 = vmatpush1.msra.mxu0 0.0
        %3317 = vmatprep.subr.mxu0 0.0
        %3318 = vmatpush1.msra.mxu0 0.0
        %3319 = vmatprep.subr.mxu0 0.0
        %3320 = vmatpush1.msra.mxu0 0.0
        %3321 = vmatprep.subr.mxu0 0.0
        %3322 = vmatpush1.msra.mxu0 0.0
        %3323 = vmatprep.subr.mxu0 0.0
        %3324 = vmatpush1.msra.mxu0 %v3290
        %3325 = vmatprep.subr.mxu0 0.0
        %3326 = vmatpush1.msra.mxu0 %v3289
        %3327 = vmatprep.subr.mxu0 0.0
        %3328 = vmatpush1.msra.mxu0 %v3288
        %3329 = vmatprep.subr.mxu0 0.0
        %3330 = vmatpush1.msra.mxu0 %v3287
        %3331 = vmatprep.subr.mxu0 0.0
        %3332 = vmatpush2.msra.mxu0 0.0
        %3333 = vmatprep.subr.mxu0 0.0
        %3334 = vmatpush2.msra.mxu0 0.0
        %3335 = vmatprep.subr.mxu0 0.0
        %3336 = vmatpush2.msra.mxu0 0.0
        %3337 = vmatprep.subr.mxu0 0.0
        %3338 = vmatpush2.msra.mxu0 0.0
        %3339 = vmatprep.subr.mxu0 0.0
        %3340 = vmatpush2.msra.mxu0 0.0
        %3341 = vmatprep.subr.mxu0 0.0
        %3342 = vmatpush2.msra.mxu0 0.0
        %3343 = vmatprep.subr.mxu0 0.0
        %3344 = vmatpush2.msra.mxu0 0.0
        %3345 = vmatprep.subr.mxu0 0.0
        %3346 = vmatpush2.msra.mxu0 0.0
        %3347 = vmatprep.subr.mxu0 0.0
        %3348 = vmatpush2.msra.mxu0 0.0
        %3349 = vmatprep.subr.mxu0 0.0
        %3350 = vmatpush2.msra.mxu0 0.0
        %3351 = vmatprep.subr.mxu0 0.0
        %3352 = vmatpush2.msra.mxu0 0.0
        %3353 = vmatprep.subr.mxu0 0.0
        %3354 = vmatpush2.msra.mxu0 0.0
        %3355 = vmatprep.subr.mxu0 0.0
        %3356 = vmatpush2.msra.mxu0 0.0
        %3357 = vmatprep.subr.mxu0 0.0
        %3358 = vmatpush2.msra.mxu0 0.0
        %3359 = vmatprep.subr.mxu0 0.0
        %3360 = vmatpush2.msra.mxu0 0.0
        %3361 = vmatprep.subr.mxu0 0.0
        %3362 = vmatpush2.msra.mxu0 0.0
        %3363 = vmatprep.mubr.f32.mxu0 0.0
        %3364 = vmatmul.mubr.f32.gmra.mxu0 %v1679
        %v3365 = vpop.f32.mrf.mxu0
        %v3366 = vadd.f32 %v3297, %v3365
        %v3367 = vpop.f32.mrf.mxu0
        %3368 = vdwg.mxu0
        %v3370 = vsel %vm1913, %v3200, 0
        %v3373 = vsel %vm1913, %v3283, 0
        %3375 = vmatprep.subr.mxu0 0.0
        %3376 = vmatpush1.xpose.msra.mxu0 0.0
        %3377 = vmatprep.subr.mxu0 0.0
        %3378 = vmatpush1.xpose.msra.mxu0 0.0
        %3379 = vmatprep.subr.mxu0 0.0
        %3380 = vmatpush1.xpose.msra.mxu0 0.0
        %3381 = vmatprep.subr.mxu0 0.0
        %3382 = vmatpush1.xpose.msra.mxu0 0.0
        %3383 = vmatprep.subr.mxu0 0.0
        %3384 = vmatpush1.xpose.msra.mxu0 0.0
        %3385 = vmatprep.subr.mxu0 0.0
        %3386 = vmatpush1.xpose.msra.mxu0 0.0
        %3387 = vmatprep.subr.mxu0 0.0
        %3388 = vmatpush1.xpose.msra.mxu0 0.0
        %3389 = vmatprep.subr.mxu0 0.0
        %3390 = vmatpush1.xpose.msra.mxu0 0.0
        %3391 = vmatprep.subr.mxu0 0.0
        %3392 = vmatpush1.xpose.msra.mxu0 0.0
        %3393 = vmatprep.subr.mxu0 0.0
        %3394 = vmatpush1.xpose.msra.mxu0 0.0
        %3395 = vmatprep.subr.mxu0 0.0
        %3396 = vmatpush1.xpose.msra.mxu0 0.0
        %3397 = vmatprep.subr.mxu0 0.0
        %3398 = vmatpush1.xpose.msra.mxu0 0.0
        %3399 = vmatprep.subr.mxu0 0.0
        %3400 = vmatpush1.xpose.msra.mxu0 0.0
        %3401 = vmatprep.subr.mxu0 0.0
        %3402 = vmatpush1.xpose.msra.mxu0 0.0
        %3403 = vmatprep.subr.mxu0 0.0
        %3404 = vmatpush1.xpose.msra.mxu0 0.0
        %3405 = vmatprep.subr.mxu0 0.0
        %3406 = vmatpush1.xpose.msra.mxu0 %v3373
        %3407 = vmatprep.subr.mxu0 0.0
        %3408 = vmatpush2.xpose.msra.mxu0 0.0
        %3409 = vmatprep.subr.mxu0 0.0
        %3410 = vmatpush2.xpose.msra.mxu0 0.0
        %3411 = vmatprep.subr.mxu0 0.0
        %3412 = vmatpush2.xpose.msra.mxu0 0.0
        %3413 = vmatprep.subr.mxu0 0.0
        %3414 = vmatpush2.xpose.msra.mxu0 0.0
        %3415 = vmatprep.subr.mxu0 0.0
        %3416 = vmatpush2.xpose.msra.mxu0 0.0
        %3417 = vmatprep.subr.mxu0 0.0
        %3418 = vmatpush2.xpose.msra.mxu0 0.0
        %3419 = vmatprep.subr.mxu0 0.0
        %3420 = vmatpush2.xpose.msra.mxu0 0.0
        %3421 = vmatprep.subr.mxu0 0.0
        %3422 = vmatpush2.xpose.msra.mxu0 0.0
        %3423 = vmatprep.subr.mxu0 0.0
        %3424 = vmatpush2.xpose.msra.mxu0 0.0
        %3425 = vmatprep.subr.mxu0 0.0
        %3426 = vmatpush2.xpose.msra.mxu0 0.0
        %3427 = vmatprep.subr.mxu0 0.0
        %3428 = vmatpush2.xpose.msra.mxu0 0.0
        %3429 = vmatprep.subr.mxu0 0.0
        %3430 = vmatpush2.xpose.msra.mxu0 0.0
        %3431 = vmatprep.subr.mxu0 0.0
        %3432 = vmatpush2.xpose.msra.mxu0 0.0
        %3433 = vmatprep.subr.mxu0 0.0
        %3434 = vmatpush2.xpose.msra.mxu0 0.0
        %3435 = vmatprep.subr.mxu0 0.0
        %3436 = vmatpush2.xpose.msra.mxu0 0.0
        %3437 = vmatprep.subr.mxu0 0.0
        %3438 = vmatpush2.xpose.msra.mxu0 0.0
        %3439 = vmatprep.mubr.f32.mxu0 0.0
        %3440 = vmatmul.mubr.f32.gmra.mxu0 %v3370
        %v3441 = vpop.f32.mrf.mxu0
        %v3442 = vadd.f32 0.0, %v3441
        %v3443 = vpop.f32.mrf.mxu0
        %3444 = vdwg.mxu0
        %v3445 = vmul.f32 %v3442, 0.35355338
        %v3446 = vsel %vm1913, %v3445, -inf
        %3447 = vmax.xlane.f32.xlu0 %v3446
        %v3448 = vpop.xlane.xlu0 %3447
        %v3449 = vsub.f32 %v3445, %v3448
        %v3450 = vmul.f32 %v3449, 1.442695
        %v3451 = vpow.pop %v3450
        %v3452 = vsel %vm1913, %v3451, 0.0
        %3453 = vadd.xlane.f32.xlu0 %v3452
        %v3454 = vpop.xlane.xlu0 %3453
        %v3455 = vrcp.pop %v3454
        %v3456 = vmul.f32 %v3451, %v3455
        %v3458 = vsel %vm1913, %v3456, 0
        %3460 = vmatprep.subr.mxu0 0.0
        %3461 = vmatpush1.msra.mxu0 0.0
        %3462 = vmatprep.subr.mxu0 0.0
        %3463 = vmatpush1.msra.mxu0 0.0
        %3464 = vmatprep.subr.mxu0 0.0
        %3465 = vmatpush1.msra.mxu0 0.0
        %3466 = vmatprep.subr.mxu0 0.0
        %3467 = vmatpush1.msra.mxu0 0.0
        %3468 = vmatprep.subr.mxu0 0.0
        %3469 = vmatpush1.msra.mxu0 0.0
        %3470 = vmatprep.subr.mxu0 0.0
        %3471 = vmatpush1.msra.mxu0 0.0
        %3472 = vmatprep.subr.mxu0 0.0
        %3473 = vmatpush1.msra.mxu0 0.0
        %3474 = vmatprep.subr.mxu0 0.0
        %3475 = vmatpush1.msra.mxu0 0.0
        %3476 = vmatprep.subr.mxu0 0.0
        %3477 = vmatpush1.msra.mxu0 0.0
        %3478 = vmatprep.subr.mxu0 0.0
        %3479 = vmatpush1.msra.mxu0 0.0
        %3480 = vmatprep.subr.mxu0 0.0
        %3481 = vmatpush1.msra.mxu0 0.0
        %3482 = vmatprep.subr.mxu0 0.0
        %3483 = vmatpush1.msra.mxu0 0.0
        %3484 = vmatprep.subr.mxu0 0.0
        %3485 = vmatpush1.msra.mxu0 0.0
        %3486 = vmatprep.subr.mxu0 0.0
        %3487 = vmatpush1.msra.mxu0 0.0
        %3488 = vmatprep.subr.mxu0 0.0
        %3489 = vmatpush1.msra.mxu0 0.0
        %3490 = vmatprep.subr.mxu0 0.0
        %3491 = vmatpush1.msra.mxu0 %v3366
        %3492 = vmatprep.subr.mxu0 0.0
        %3493 = vmatpush2.msra.mxu0 0.0
        %3494 = vmatprep.subr.mxu0 0.0
        %3495 = vmatpush2.msra.mxu0 0.0
        %3496 = vmatprep.subr.mxu0 0.0
        %3497 = vmatpush2.msra.mxu0 0.0
        %3498 = vmatprep.subr.mxu0 0.0
        %3499 = vmatpush2.msra.mxu0 0.0
        %3500 = vmatprep.subr.mxu0 0.0
        %3501 = vmatpush2.msra.mxu0 0.0
        %3502 = vmatprep.subr.mxu0 0.0
        %3503 = vmatpush2.msra.mxu0 0.0
        %3504 = vmatprep.subr.mxu0 0.0
        %3505 = vmatpush2.msra.mxu0 0.0
        %3506 = vmatprep.subr.mxu0 0.0
        %3507 = vmatpush2.msra.mxu0 0.0
        %3508 = vmatprep.subr.mxu0 0.0
        %3509 = vmatpush2.msra.mxu0 0.0
        %3510 = vmatprep.subr.mxu0 0.0
        %3511 = vmatpush2.msra.mxu0 0.0
        %3512 = vmatprep.subr.mxu0 0.0
        %3513 = vmatpush2.msra.mxu0 0.0
        %3514 = vmatprep.subr.mxu0 0.0
        %3515 = vmatpush2.msra.mxu0 0.0
        %3516 = vmatprep.subr.mxu0 0.0
        %3517 = vmatpush2.msra.mxu0 0.0
        %3518 = vmatprep.subr.mxu0 0.0
        %3519 = vmatpush2.msra.mxu0 0.0
        %3520 = vmatprep.subr.mxu0 0.0
        %3521 = vmatpush2.msra.mxu0 0.0
        %3522 = vmatprep.subr.mxu0 0.0
        %3523 = vmatpush2.msra.mxu0 0.0
        %3524 = vmatprep.mubr.f32.mxu0 0.0
        %3525 = vmatmul.mubr.f32.gmra.mxu0 %v3458
        %v3526 = vpop.f32.mrf.mxu0
        %v3527 = vadd.f32 0.0, %v3526
        %v3528 = vpop.f32.mrf.mxu0
        %3529 = vdwg.mxu0
        %s3530 = scalar_lea.vmem %s1107, 24 [#allocation20]
        %v3531 = vld [vmem:[%s3530] sm:$0xff]
        %v3533 = vsel %vm1913, %v3527, 0
        %3535 = vmatprep.subr.mxu0 0.0
        %3536 = vmatpush1.msra.mxu0 0.0
        %3537 = vmatprep.subr.mxu0 0.0
        %3538 = vmatpush1.msra.mxu0 0.0
        %3539 = vmatprep.subr.mxu0 0.0
        %3540 = vmatpush1.msra.mxu0 0.0
        %3541 = vmatprep.subr.mxu0 0.0
        %3542 = vmatpush1.msra.mxu0 0.0
        %3543 = vmatprep.subr.mxu0 0.0
        %3544 = vmatpush1.msra.mxu0 0.0
        %3545 = vmatprep.subr.mxu0 0.0
        %3546 = vmatpush1.msra.mxu0 0.0
        %3547 = vmatprep.subr.mxu0 0.0
        %3548 = vmatpush1.msra.mxu0 0.0
        %3549 = vmatprep.subr.mxu0 0.0
        %3550 = vmatpush1.msra.mxu0 0.0
        %3551 = vmatprep.subr.mxu0 0.0
        %3552 = vmatpush1.msra.mxu0 0.0
        %3553 = vmatprep.subr.mxu0 0.0
        %3554 = vmatpush1.msra.mxu0 0.0
        %3555 = vmatprep.subr.mxu0 0.0
        %3556 = vmatpush1.msra.mxu0 0.0
        %3557 = vmatprep.subr.mxu0 0.0
        %3558 = vmatpush1.msra.mxu0 0.0
        %3559 = vmatprep.subr.mxu0 0.0
        %3560 = vmatpush1.msra.mxu0 0.0
        %3561 = vmatprep.subr.mxu0 0.0
        %3562 = vmatpush1.msra.mxu0 0.0
        %3563 = vmatprep.subr.mxu0 0.0
        %3564 = vmatpush1.msra.mxu0 0.0
        %3565 = vmatprep.subr.mxu0 0.0
        %3566 = vmatpush1.msra.mxu0 %v3531
        %3567 = vmatprep.subr.mxu0 0.0
        %3568 = vmatpush2.msra.mxu0 0.0
        %3569 = vmatprep.subr.mxu0 0.0
        %3570 = vmatpush2.msra.mxu0 0.0
        %3571 = vmatprep.subr.mxu0 0.0
        %3572 = vmatpush2.msra.mxu0 0.0
        %3573 = vmatprep.subr.mxu0 0.0
        %3574 = vmatpush2.msra.mxu0 0.0
        %3575 = vmatprep.subr.mxu0 0.0
        %3576 = vmatpush2.msra.mxu0 0.0
        %3577 = vmatprep.subr.mxu0 0.0
        %3578 = vmatpush2.msra.mxu0 0.0
        %3579 = vmatprep.subr.mxu0 0.0
        %3580 = vmatpush2.msra.mxu0 0.0
        %3581 = vmatprep.subr.mxu0 0.0
        %3582 = vmatpush2.msra.mxu0 0.0
        %3583 = vmatprep.subr.mxu0 0.0
        %3584 = vmatpush2.msra.mxu0 0.0
        %3585 = vmatprep.subr.mxu0 0.0
        %3586 = vmatpush2.msra.mxu0 0.0
        %3587 = vmatprep.subr.mxu0 0.0
        %3588 = vmatpush2.msra.mxu0 0.0
        %3589 = vmatprep.subr.mxu0 0.0
        %3590 = vmatpush2.msra.mxu0 0.0
        %3591 = vmatprep.subr.mxu0 0.0
        %3592 = vmatpush2.msra.mxu0 0.0
        %3593 = vmatprep.subr.mxu0 0.0
        %3594 = vmatpush2.msra.mxu0 0.0
        %3595 = vmatprep.subr.mxu0 0.0
        %3596 = vmatpush2.msra.mxu0 0.0
        %3597 = vmatprep.subr.mxu0 0.0
        %3598 = vmatpush2.msra.mxu0 0.0
        %3599 = vmatprep.mubr.f32.mxu0 0.0
        %3600 = vmatmul.mubr.f32.gmra.mxu0 %v3533
        %v3601 = vpop.f32.mrf.mxu0
        %v3602 = vadd.f32 0.0, %v3601
        %v3603 = vpop.f32.mrf.mxu0
        %3604 = vdwg.mxu0
        %v3605 = vadd.f32 %v3119, %v3602
        %v3606 = vld [vmem:[%s1115] sm:$0x1]
        %v3608 = vlaneseq
        %v3609 = vshrl.u32 %v3608, 7
        %v3610 = vsub.s32 0, %v3609
        %v3611 = vrot.slane %v3606, %v3610
        %v3613 = vadd.f32 %v3605, %v3611
        %v3614 = vadd.f32 %v1318, %v3613
        %v3615 = vld [vmem:[%s1123] sm:$0x1]
        %v3616 = vld [vmem:[%s1298] sm:$0x1]
        %v3617 = vsel %vm1593, %v3614, 0.0
        %3618 = vadd.xlane.f32.xlu0 %v3617
        %v3619 = vpop.xlane.xlu0 %3618
        %v3620 = vrcp.pop 32.0
        %v3621 = vmul.f32 %v3619, %v3620
        %v3622 = vsub.f32 %v3614, %v3621
        %v3623 = vmul.f32 %v3622, %v3622
        %v3624 = vsel %vm1593, %v3623, 0.0
        %3625 = vadd.xlane.f32.xlu0 %v3624
        %v3626 = vpop.xlane.xlu0 %3625
        %v3627 = vmul.f32 %v3626, %v3620
        %v3628 = vadd.f32 %v3627, 1e-05
        %v3629 = vrsqrt.pop %v3628
        %v3630 = vmul.f32 %v3622, %v3629
        %v3632 = vlaneseq
        %v3633 = vshrl.u32 %v3632, 7
        %v3634 = vsub.s32 0, %v3633
        %v3635 = vrot.slane %v3615, %v3634
        %v3637 = vmul.f32 %v3630, %v3635
        %v3639 = vlaneseq
        %v3640 = vshrl.u32 %v3639, 7
        %v3641 = vsub.s32 0, %v3640
        %v3642 = vrot.slane %v3616, %v3641
        %v3644 = vadd.f32 %v3637, %v3642
        %v3645 = vld [vmem:[%s1132] sm:$0xff]
        %v3646 = vld [vmem:[%s1132 + $0x8] sm:$0xff]
        %v3647 = vld [vmem:[%s1132 + $0x10] sm:$0xff]
        %v3648 = vld [vmem:[%s1132 + $0x18] sm:$0xff]
        %v3649 = vld [vmem:[%s1301] sm:$0x1]
        %v3651 = vlaneseq
        %v3652 = vshrl.u32 %v3651, 7
        %v3653 = vsub.s32 0, %v3652
        %v3654 = vrot.slane %v3649, %v3653
        %v3657 = vsel %vm1593, %v3644, 0
        %3659 = vmatprep.subr.mxu0 0.0
        %3660 = vmatpush1.msra.mxu0 0.0
        %3661 = vmatprep.subr.mxu0 0.0
        %3662 = vmatpush1.msra.mxu0 0.0
        %3663 = vmatprep.subr.mxu0 0.0
        %3664 = vmatpush1.msra.mxu0 0.0
        %3665 = vmatprep.subr.mxu0 0.0
        %3666 = vmatpush1.msra.mxu0 0.0
        %3667 = vmatprep.subr.mxu0 0.0
        %3668 = vmatpush1.msra.mxu0 0.0
        %3669 = vmatprep.subr.mxu0 0.0
        %3670 = vmatpush1.msra.mxu0 0.0
        %3671 = vmatprep.subr.mxu0 0.0
        %3672 = vmatpush1.msra.mxu0 0.0
        %3673 = vmatprep.subr.mxu0 0.0
        %3674 = vmatpush1.msra.mxu0 0.0
        %3675 = vmatprep.subr.mxu0 0.0
        %3676 = vmatpush1.msra.mxu0 0.0
        %3677 = vmatprep.subr.mxu0 0.0
        %3678 = vmatpush1.msra.mxu0 0.0
        %3679 = vmatprep.subr.mxu0 0.0
        %3680 = vmatpush1.msra.mxu0 0.0
        %3681 = vmatprep.subr.mxu0 0.0
        %3682 = vmatpush1.msra.mxu0 0.0
        %3683 = vmatprep.subr.mxu0 0.0
        %3684 = vmatpush1.msra.mxu0 %v3648
        %3685 = vmatprep.subr.mxu0 0.0
        %3686 = vmatpush1.msra.mxu0 %v3647
        %3687 = vmatprep.subr.mxu0 0.0
        %3688 = vmatpush1.msra.mxu0 %v3646
        %3689 = vmatprep.subr.mxu0 0.0
        %3690 = vmatpush1.msra.mxu0 %v3645
        %3691 = vmatprep.subr.mxu0 0.0
        %3692 = vmatpush2.msra.mxu0 0.0
        %3693 = vmatprep.subr.mxu0 0.0
        %3694 = vmatpush2.msra.mxu0 0.0
        %3695 = vmatprep.subr.mxu0 0.0
        %3696 = vmatpush2.msra.mxu0 0.0
        %3697 = vmatprep.subr.mxu0 0.0
        %3698 = vmatpush2.msra.mxu0 0.0
        %3699 = vmatprep.subr.mxu0 0.0
        %3700 = vmatpush2.msra.mxu0 0.0
        %3701 = vmatprep.subr.mxu0 0.0
        %3702 = vmatpush2.msra.mxu0 0.0
        %3703 = vmatprep.subr.mxu0 0.0
        %3704 = vmatpush2.msra.mxu0 0.0
        %3705 = vmatprep.subr.mxu0 0.0
        %3706 = vmatpush2.msra.mxu0 0.0
        %3707 = vmatprep.subr.mxu0 0.0
        %3708 = vmatpush2.msra.mxu0 0.0
        %3709 = vmatprep.subr.mxu0 0.0
        %3710 = vmatpush2.msra.mxu0 0.0
        %3711 = vmatprep.subr.mxu0 0.0
        %3712 = vmatpush2.msra.mxu0 0.0
        %3713 = vmatprep.subr.mxu0 0.0
        %3714 = vmatpush2.msra.mxu0 0.0
        %3715 = vmatprep.subr.mxu0 0.0
        %3716 = vmatpush2.msra.mxu0 0.0
        %3717 = vmatprep.subr.mxu0 0.0
        %3718 = vmatpush2.msra.mxu0 0.0
        %3719 = vmatprep.subr.mxu0 0.0
        %3720 = vmatpush2.msra.mxu0 0.0
        %3721 = vmatprep.subr.mxu0 0.0
        %3722 = vmatpush2.msra.mxu0 0.0
        %3723 = vmatprep.mubr.f32.mxu0 0.0
        %3724 = vmatmul.mubr.f32.gmra.mxu0 %v3657
        %v3725 = vpop.f32.mrf.mxu0
        %v3726 = vadd.f32 %v3654, %v3725
        %v3727 = vpop.f32.mrf.mxu0
        %3728 = vdwg.mxu0
        %v3729 = vmul.f32 %v3726, 0.5
        %v3730 = vmul.f32 %v3726, 0.70710677
        %v3731 = verf.f32.pop %v3730
        %v3732 = vadd.f32 %v3731, 1.0
        %v3733 = vmul.f32 %v3729, %v3732
        %v3734 = vld [vmem:[%s1141] sm:$0xff]
        %v3735 = vld [vmem:[%s1141 + $0x8] sm:$0xff]
        %v3736 = vld [vmem:[%s1141 + $0x10] sm:$0xff]
        %v3737 = vld [vmem:[%s1141 + $0x18] sm:$0xff]
        %v3738 = vld [vmem:[%s1141 + $0x20] sm:$0xff]
        %v3739 = vld [vmem:[%s1141 + $0x28] sm:$0xff]
        %v3740 = vld [vmem:[%s1141 + $0x30] sm:$0xff]
        %v3741 = vld [vmem:[%s1141 + $0x38] sm:$0xff]
        %v3742 = vld [vmem:[%s1141 + $0x40] sm:$0xff]
        %v3743 = vld [vmem:[%s1141 + $0x48] sm:$0xff]
        %v3744 = vld [vmem:[%s1141 + $0x50] sm:$0xff]
        %v3745 = vld [vmem:[%s1141 + $0x58] sm:$0xff]
        %v3746 = vld [vmem:[%s1141 + $0x60] sm:$0xff]
        %v3747 = vld [vmem:[%s1141 + $0x68] sm:$0xff]
        %v3748 = vld [vmem:[%s1141 + $0x70] sm:$0xff]
        %v3749 = vld [vmem:[%s1141 + $0x78] sm:$0xff]
        %v3750 = vld [vmem:[%s1304] sm:$0x1]
        %v3752 = vlaneseq
        %v3753 = vshrl.u32 %v3752, 7
        %v3754 = vsub.s32 0, %v3753
        %v3755 = vrot.slane %v3750, %v3754
        %3757 = vmatprep.subr.mxu0 0.0
        %3758 = vmatpush1.msra.mxu0 %v3749
        %3759 = vmatprep.subr.mxu0 0.0
        %3760 = vmatpush1.msra.mxu0 %v3748
        %3761 = vmatprep.subr.mxu0 0.0
        %3762 = vmatpush1.msra.mxu0 %v3747
        %3763 = vmatprep.subr.mxu0 0.0
        %3764 = vmatpush1.msra.mxu0 %v3746
        %3765 = vmatprep.subr.mxu0 0.0
        %3766 = vmatpush1.msra.mxu0 %v3745
        %3767 = vmatprep.subr.mxu0 0.0
        %3768 = vmatpush1.msra.mxu0 %v3744
        %3769 = vmatprep.subr.mxu0 0.0
        %3770 = vmatpush1.msra.mxu0 %v3743
        %3771 = vmatprep.subr.mxu0 0.0
        %3772 = vmatpush1.msra.mxu0 %v3742
        %3773 = vmatprep.subr.mxu0 0.0
        %3774 = vmatpush1.msra.mxu0 %v3741
        %3775 = vmatprep.subr.mxu0 0.0
        %3776 = vmatpush1.msra.mxu0 %v3740
        %3777 = vmatprep.subr.mxu0 0.0
        %3778 = vmatpush1.msra.mxu0 %v3739
        %3779 = vmatprep.subr.mxu0 0.0
        %3780 = vmatpush1.msra.mxu0 %v3738
        %3781 = vmatprep.subr.mxu0 0.0
        %3782 = vmatpush1.msra.mxu0 %v3737
        %3783 = vmatprep.subr.mxu0 0.0
        %3784 = vmatpush1.msra.mxu0 %v3736
        %3785 = vmatprep.subr.mxu0 0.0
        %3786 = vmatpush1.msra.mxu0 %v3735
        %3787 = vmatprep.subr.mxu0 0.0
        %3788 = vmatpush1.msra.mxu0 %v3734
        %3789 = vmatprep.subr.mxu0 0.0
        %3790 = vmatpush2.msra.mxu0 0.0
        %3791 = vmatprep.subr.mxu0 0.0
        %3792 = vmatpush2.msra.mxu0 0.0
        %3793 = vmatprep.subr.mxu0 0.0
        %3794 = vmatpush2.msra.mxu0 0.0
        %3795 = vmatprep.subr.mxu0 0.0
        %3796 = vmatpush2.msra.mxu0 0.0
        %3797 = vmatprep.subr.mxu0 0.0
        %3798 = vmatpush2.msra.mxu0 0.0
        %3799 = vmatprep.subr.mxu0 0.0
        %3800 = vmatpush2.msra.mxu0 0.0
        %3801 = vmatprep.subr.mxu0 0.0
        %3802 = vmatpush2.msra.mxu0 0.0
        %3803 = vmatprep.subr.mxu0 0.0
        %3804 = vmatpush2.msra.mxu0 0.0
        %3805 = vmatprep.subr.mxu0 0.0
        %3806 = vmatpush2.msra.mxu0 0.0
        %3807 = vmatprep.subr.mxu0 0.0
        %3808 = vmatpush2.msra.mxu0 0.0
        %3809 = vmatprep.subr.mxu0 0.0
        %3810 = vmatpush2.msra.mxu0 0.0
        %3811 = vmatprep.subr.mxu0 0.0
        %3812 = vmatpush2.msra.mxu0 0.0
        %3813 = vmatprep.subr.mxu0 0.0
        %3814 = vmatpush2.msra.mxu0 0.0
        %3815 = vmatprep.subr.mxu0 0.0
        %3816 = vmatpush2.msra.mxu0 0.0
        %3817 = vmatprep.subr.mxu0 0.0
        %3818 = vmatpush2.msra.mxu0 0.0
        %3819 = vmatprep.subr.mxu0 0.0
        %3820 = vmatpush2.msra.mxu0 0.0
        %3821 = vmatprep.mubr.f32.mxu0 0.0
        %3822 = vmatmul.mubr.f32.gmra.mxu0 %v3733
        %v3823 = vpop.f32.mrf.mxu0
        %v3824 = vadd.f32 %v3755, %v3823
        %v3825 = vpop.f32.mrf.mxu0
        %3826 = vdwg.mxu0
        %v3827 = vadd.f32 %v3644, %v3824
        %v3828 = vld [vmem:[%s1307] sm:$0x1]
        %v3829 = vld [vmem:[%s1310] sm:$0x1]
        %v3830 = vsel %vm1593, %v3827, 0.0
        %3831 = vadd.xlane.f32.xlu0 %v3830
        %v3832 = vpop.xlane.xlu0 %3831
        %v3833 = vmul.f32 %v3832, %v3620
        %v3834 = vsub.f32 %v3827, %v3833
        %v3835 = vmul.f32 %v3834, %v3834
        %v3836 = vsel %vm1593, %v3835, 0.0
        %3837 = vadd.xlane.f32.xlu0 %v3836
        %v3838 = vpop.xlane.xlu0 %3837
        %v3839 = vmul.f32 %v3838, %v3620
        %v3840 = vadd.f32 %v3839, 1e-05
        %v3841 = vrsqrt.pop %v3840
        %v3842 = vmul.f32 %v3834, %v3841
        %v3844 = vlaneseq
        %v3845 = vshrl.u32 %v3844, 7
        %v3846 = vsub.s32 0, %v3845
        %v3847 = vrot.slane %v3828, %v3846
        %v3849 = vmul.f32 %v3842, %v3847
        %v3851 = vlaneseq
        %v3852 = vshrl.u32 %v3851, 7
        %v3853 = vsub.s32 0, %v3852
        %v3854 = vrot.slane %v3829, %v3853
        %v3856 = vadd.f32 %v3849, %v3854
        %3857 = vst.msk [vmem:[#allocation2] sm:$0xff] %vm1593, %v3856
        %3858 = vst.msk [vmem:[%s1287] sm:$0xff] %vm1593, %v3856
        %s3859 = sand.u32 %s648, 1
        %s3860 = scalar_lea.sflag [#allocation5], %s3859
        %s3861 = sand.u32 %s648, 1
        %s3862 = smul.addr %s3861, 8
        %s3863 = scalar_lea.vmem [#allocation28], %s3862
        // Predicated region
        $region173: #{fwd.1} parent=107 // pred_check
          %p3864 = pneg %p658
        $region174: #{fwd.1} parent=107 // pred_check_branch
          %3866 = sbr.rel (%p3864) target = $region176
        $region175: #{fwd.1} parent=107 // pred_region
          %s3868 = ssub.s32 128, 128
          %3869 = vsyncadd %s3860, %s3868
          %s3870 = smul.addr %s65, 128
          %s3871 = scalar_lea.hbm %s22, %s3870
          %s3873 = sshll.u32 %s3863, 4
          %s3874 = int_to_ptr.vmem [resolvable:$true] %s3873
          %3876 = dma.vmem_to_hbm [thread:$0]  %s3874, 128, %s3871, %s3860
        $region176: #{fwd.1} parent=107 // pred_fallthru
          _
      $region108: #{fwd.1} parent=5 // pred_fallthru
        _
      %p3877 = scmp.le.s32.totalorder 2, %s56
      // Predicated region
      $region177: #{fwd.1} parent=5 // pred_check
        %p3878 = pneg %p3877
      $region178: #{fwd.1} parent=5 // pred_check_branch
        %3880 = sbr.rel (%p3878) target = $region180
      $region179: #{fwd.1} parent=5 // pred_region
        %s3881 = ssub.s32 %s56, 2
        // Predicated region
        $region181: #{fwd.1} parent=179 // pred_check
          %p3882 = pneg %p664
        $region182: #{fwd.1} parent=179 // pred_check_branch
          %3884 = sbr.rel (%p3882) target = $region184
        $region183: #{fwd.1} parent=179 // pred_region
          %s3885 = sand.u32 %s649, 1
          %s3886 = scalar_lea.sflag [#allocation5], %s3885
          %s3887 = sand.u32 %s649, 1
          %s3888 = smul.addr %s3887, 8
          %s3889 = scalar_lea.vmem [#allocation28], %s3888
          %3890 = dma.done %s3886, 128
        $region184: #{fwd.1} parent=179 // pred_fallthru
          _
      $region180: #{fwd.1} parent=5 // pred_fallthru
        _
    $region6: #{fwd.1} parent=1 // loop_footer
      %s60 = sadd.s32 1, %s56
    $region7: #{fwd.1} parent=1 // loop_footer_branch
      %55 = sbr.rel target = $region3
    $region8: #{fwd.1} parent=1 // loop_exit
      _
    %3891 = vsyncpa [#allocation4], 1
    %s3892 = scalar_lea.sflag [#allocation4], 1
    %3893 = vsyncpa %s3892, 1
    %3894 = vsyncpa [#allocation9], 1
    %s3895 = scalar_lea.sflag [#allocation9], 1
    %3896 = vsyncpa %s3895, 1
    %3897 = vsyncpa [#allocation12], 1
    %s3898 = scalar_lea.sflag [#allocation12], 1
    %3899 = vsyncpa %s3898, 1
    %3900 = vsyncpa [#allocation15], 1
    %s3901 = scalar_lea.sflag [#allocation15], 1
    %3902 = vsyncpa %s3901, 1
    %3903 = vsyncpa [#allocation18], 1
    %s3904 = scalar_lea.sflag [#allocation18], 1
    %3905 = vsyncpa %s3904, 1
    %3906 = vsyncpa [#allocation21], 1
    %s3907 = scalar_lea.sflag [#allocation21], 1
    %3908 = vsyncpa %s3907, 1
    %3909 = vsyncpa [#allocation24], 1
    %s3910 = scalar_lea.sflag [#allocation24], 1
    %3911 = vsyncpa %s3910, 1
    %3912 = vsyncpa [#allocation27], 1
    %s3913 = scalar_lea.sflag [#allocation27], 1
    %3914 = vsyncpa %s3913, 1
    %3915 = vsyncpa [#allocation5], 1
    %s3916 = scalar_lea.sflag [#allocation5], 1
    %3917 = vsyncpa %s3916, 1
    %3918 = vsyncpa [#allocation6], 1
    %s3919 = scalar_lea.sflag [#allocation6], 1
    %3920 = vsyncpa %s3919, 1

</llo_original>
